<compile_context>
chip_gen: v7x
topology: tpu7x:2x2x1
jax: 0.10.0
libtpu: 0.0.40
codegen_flags: <defaults>
</compile_context>

<pallas_src>
import jax
import jax.numpy as jnp
from jax.experimental import pallas as pl

# ---------------- model config (small, consistent with the module) -----------
N = 2            # batch
S = 8            # seq len (value_len == key_len == query_len)
E = 32           # embed_size
H = 4            # heads
D = E // H       # head_dims
FE = 4           # forward_expansion
HID = FE * E     # 128
LN_EPS = 1e-5
HS = H * S       # heads * seq = lane width of the per-head energy layout (32)
NS = N * S       # flattened position dim (16)
S_SHIFT = S.bit_length() - 1
assert S == (1 << S_SHIFT), "S must be a power of two for the shift-based block ids"


# ---------------------------- Pallas kernel ----------------------------------
def transformer_block_kernel(v_ref, kblk_ref, vblk_ref, q_ref,
                             wfc_ref, w1_ref, w2_ref, pvec_ref, out_ref):
    # v_ref    : (N, S, E)    value (used as q = k = v, reference quirk)
    # kblk_ref : (N, E, H*S)  block-diag per-head key:  [n, h*D+d, h*S+k] = v[n,k,h*D+d]
    # vblk_ref : (N, H*S, E)  head-masked value:        [n, h*S+k, h*D+d] = v[n,k,h*D+d]
    # q_ref    : (N*S, E)     residual input (query), flattened positions
    # wfc_ref  : (E, E)       fc_out weight (pre-transposed: x @ W)
    # w1_ref   : (E, HID)     FFN weight 1 (pre-transposed)
    # w2_ref   : (HID, E)     FFN weight 2 (pre-transposed)
    # pvec_ref : (8, HID)     packed params: rows 0..5 lanes 0..E-1 =
    #                         [bfc, g1, be1, b2, g2, be2]; row 6 = b1; row 7 = 0
    # out_ref  : (N*S, E)
    f32 = jnp.float32

    v = v_ref[...]                               # (N, S, E)
    q_res = q_ref[...]                           # (NS, E)

    bfc = pvec_ref[0:1, 0:E]
    g1 = pvec_ref[1:2, 0:E]
    be1 = pvec_ref[2:3, 0:E]
    b2 = pvec_ref[3:4, 0:E]
    g2 = pvec_ref[4:5, 0:E]
    be2 = pvec_ref[5:6, 0:E]
    b1 = pvec_ref[6:7, :]                        # (1, HID)

    scale = 1.0 / (float(E) ** 0.5)

    # ---- energy, lane-dense: energy[n, q, h*S+k] = <v[n,q,head h], v[n,k,head h]> ----
    energy = jnp.einsum("nqe,nem->nqm", v, kblk_ref[...],
                        preferred_element_type=f32) * scale          # (N, S, HS)
    e2 = energy.reshape(NS, HS)                                      # leading-dim merge

    # ---- segmented softmax over each head's 8-lane block (exact, no approx) ----
    # Row-wise (global) max is a valid stabilizer: softmax is shift-invariant per block.
    m = jnp.max(e2, axis=-1, keepdims=True)
    p = jnp.exp(e2 - m)
    row = jax.lax.broadcasted_iota(jnp.int32, (HS, HS), 0)
    col = jax.lax.broadcasted_iota(jnp.int32, (HS, HS), 1)
    bmat = ((row >> S_SHIFT) == (col >> S_SHIFT)).astype(f32)        # block indicator
    denom = jnp.dot(p, bmat, preferred_element_type=f32)             # per-block sums
    attn = (p / denom).reshape(N, S, HS)

    # ---- attention output directly in head-major (N*S, E) layout ----
    ho = jnp.einsum("nqm,nme->nqe", attn, vblk_ref[...],
                    preferred_element_type=f32).reshape(NS, E)       # (NS, E)

    # ---- fc_out: single (NS,E) @ (E,E) matmul ----
    fc = jnp.dot(ho, wfc_ref[...], preferred_element_type=f32) + bfc

    # ---- residual + LayerNorm 1 (dropout = identity in eval) ----
    x = fc + q_res
    mu = jnp.mean(x, axis=-1, keepdims=True)
    var = jnp.mean((x - mu) ** 2, axis=-1, keepdims=True)
    x = (x - mu) * jax.lax.rsqrt(var + LN_EPS) * g1 + be1

    # ---- feed forward: Linear -> ReLU -> Linear ----
    hdn = jnp.dot(x, w1_ref[...], preferred_element_type=f32) + b1
    hdn = jnp.maximum(hdn, 0.0)
    ff = jnp.dot(hdn, w2_ref[...], preferred_element_type=f32) + b2

    # ---- residual + LayerNorm 2 (dropout = identity in eval) ----
    y = ff + x
    mu2 = jnp.mean(y, axis=-1, keepdims=True)
    var2 = jnp.mean((y - mu2) ** 2, axis=-1, keepdims=True)
    out_ref[...] = (y - mu2) * jax.lax.rsqrt(var2 + LN_EPS) * g2 + be2


# ------------------------------ wrapper ---------------------------------------
@jax.jit
def transformer_block(value, query, params):
    # Cheap XLA-side layout plumbing (outside the kernel):
    #  * block-diagonal per-head key operand and head-masked value operand so the
    #    attention contractions are lane-dense (contraction dim 32) MXU matmuls
    #  * flattened (N*S, E) residual/query
    #  * six (1,E) vectors + b1 packed into one lane-dense (8, HID) operand
    vh4 = value.reshape(N, S, H, D)                                  # (n, k, h, d)
    eye_h = jnp.eye(H, dtype=jnp.float32)
    # kblk[n, h*D+d, g*S+k] = vh4[n,k,h,d] * delta(h,g)
    kblk = jnp.einsum("nkhd,hg->nhdgk", vh4, eye_h).reshape(N, E, HS)
    # vblk[n, h*S+k, g*D+d] = vh4[n,k,g,d] * delta(h,g)
    vblk = jnp.einsum("nkgd,hg->nhkgd", vh4, eye_h).reshape(N, HS, E)
    q_flat = query.reshape(NS, E)

    small = jnp.concatenate([params["bfc"], params["g1"], params["be1"],
                             params["b2"], params["g2"], params["be2"]], axis=0)  # (6, E)
    small = jnp.pad(small, ((0, 0), (0, HID - E)))                                # (6, HID)
    pvec = jnp.concatenate([small, params["b1"],
                            jnp.zeros((1, HID), jnp.float32)], axis=0)            # (8, HID)

    out_flat = pl.pallas_call(
        transformer_block_kernel,
        out_shape=jax.ShapeDtypeStruct((NS, E), jnp.float32),
        # No grid: single invocation, every operand is a whole-array VMEM block.
    )(value, kblk, vblk, q_flat, params["wfc"], params["w1"], params["w2"], pvec)

    return out_flat.reshape(N, S, E)


# --------------------------- pure-JAX reference --------------------------------
def reference(value, query, params):
    hp = jax.lax.Precision.HIGHEST     # match the kernel's f32 MXU math exactly
    vh = value.reshape(N, S, H, D)                         # q = k = v = value
    energy = jnp.einsum("nqhd,nkhd->nhqk", vh, vh, precision=hp) / (E ** 0.5)
    attn = jax.nn.softmax(energy, axis=-1)
    out = jnp.einsum("nhql,nlhd->nqhd", attn, vh, precision=hp).reshape(N, S, E)
    out = jnp.dot(out, params["wfc"], precision=hp) + params["bfc"]

    def ln(x, g, b):
        mu = x.mean(-1, keepdims=True)
        var = ((x - mu) ** 2).mean(-1, keepdims=True)
        return (x - mu) * jax.lax.rsqrt(var + LN_EPS) * g + b

    x = ln(out + query, params["g1"], params["be1"])
    hdn = jnp.maximum(jnp.dot(x, params["w1"], precision=hp) + params["b1"], 0.0)
    ff = jnp.dot(hdn, params["w2"], precision=hp) + params["b2"]
    return ln(ff + x, params["g2"], params["be2"])


# ---------------------------------- main ---------------------------------------
if __name__ == "__main__":
    # Keep the pure-JAX reference from silently running its f32 matmuls at TPU
    # default (bf16-pass) precision -- that was the source of the prior mismatch.
    jax.config.update("jax_default_matmul_precision", "highest")

    key = jax.random.PRNGKey(0)
    ks = jax.random.split(key, 16)

    # deterministic parameter init (shapes per nn.Module __init__)
    params = {
        # fc_out: nn.Linear(E, E, bias=True) -> stored pre-transposed (in, out)
        "wfc": jax.random.normal(ks[0], (E, E), jnp.float32) * 0.05,
        "bfc": jax.random.normal(ks[1], (1, E), jnp.float32) * 0.05,
        # LayerNorm 1
        "g1": jnp.ones((1, E), jnp.float32),
        "be1": jnp.zeros((1, E), jnp.float32),
        # feed_forward Linear(E, FE*E), Linear(FE*E, E) -> pre-transposed
        "w1": jax.random.normal(ks[2], (E, HID), jnp.float32) * 0.05,
        "b1": jax.random.normal(ks[3], (1, HID), jnp.float32) * 0.05,
        "w2": jax.random.normal(ks[4], (HID, E), jnp.float32) * 0.05,
        "b2": jax.random.normal(ks[5], (1, E), jnp.float32) * 0.05,
        # LayerNorm 2
        "g2": jnp.ones((1, E), jnp.float32),
        "be2": jnp.zeros((1, E), jnp.float32),
    }
    # per-head values/keys/queries Linear(D, D, bias=False): initialized but
    # unused, exactly as in the reference forward().
    _unused_wv = jax.random.normal(ks[6], (D, D), jnp.float32) * 0.05
    _unused_wk = jax.random.normal(ks[7], (D, D), jnp.float32) * 0.05
    _unused_wq = jax.random.normal(ks[8], (D, D), jnp.float32) * 0.05

    value = jax.random.normal(ks[9], (N, S, E), jnp.float32)
    keyt = jax.random.normal(ks[10], (N, S, E), jnp.float32)   # ignored by ref forward
    query = jax.random.normal(ks[11], (N, S, E), jnp.float32)

    out = transformer_block(value, query, params)
    out = jax.block_until_ready(out)

    ref = reference(value, query, params)
    assert jnp.allclose(out, ref, atol=2e-4, rtol=2e-4), "mismatch vs reference"

    print("KERNEL_OK")
</pallas_src>

<mosaic_0001>
module attributes {stable_mosaic.version = 11 : i64} {
  func.func @transformer_block_kernel(%arg0: memref<2x8x32xf32, #tpu.memory_space<vmem>>, %arg1: memref<2x32x32xf32, #tpu.memory_space<vmem>>, %arg2: memref<2x32x32xf32, #tpu.memory_space<vmem>>, %arg3: memref<16x32xf32, #tpu.memory_space<vmem>>, %arg4: memref<32x32xf32, #tpu.memory_space<vmem>>, %arg5: memref<32x128xf32, #tpu.memory_space<vmem>>, %arg6: memref<128x32xf32, #tpu.memory_space<vmem>>, %arg7: memref<8x128xf32, #tpu.memory_space<vmem>>, %arg8: memref<16x32xf32, #tpu.memory_space<vmem>>) attributes {dimension_semantics = [], scalar_prefetch = 0 : i64, scratch_operands = 0 : i64, tpu.core_type = #tpu.core_type<tc>} {
    %c0 = arith.constant 0 : index
    %c0_0 = arith.constant 0 : index
    %c0_1 = arith.constant 0 : index
    %0 = vector.load %arg0[%c0, %c0_0, %c0_1] : memref<2x8x32xf32, #tpu.memory_space<vmem>>, vector<2x8x32xf32>
    %c0_2 = arith.constant 0 : index
    %c0_3 = arith.constant 0 : index
    %1 = vector.load %arg3[%c0_2, %c0_3] : memref<16x32xf32, #tpu.memory_space<vmem>>, vector<16x32xf32>
    %c0_4 = arith.constant 0 : index
    %c0_5 = arith.constant 0 : index
    %2 = vector.load %arg7[%c0_4, %c0_5] : memref<8x128xf32, #tpu.memory_space<vmem>>, vector<1x32xf32>
    %c1 = arith.constant 1 : index
    %c0_6 = arith.constant 0 : index
    %3 = vector.load %arg7[%c1, %c0_6] : memref<8x128xf32, #tpu.memory_space<vmem>>, vector<1x32xf32>
    %c2 = arith.constant 2 : index
    %c0_7 = arith.constant 0 : index
    %4 = vector.load %arg7[%c2, %c0_7] : memref<8x128xf32, #tpu.memory_space<vmem>>, vector<1x32xf32>
    %c3 = arith.constant 3 : index
    %c0_8 = arith.constant 0 : index
    %5 = vector.load %arg7[%c3, %c0_8] : memref<8x128xf32, #tpu.memory_space<vmem>>, vector<1x32xf32>
    %c4 = arith.constant 4 : index
    %c0_9 = arith.constant 0 : index
    %6 = vector.load %arg7[%c4, %c0_9] : memref<8x128xf32, #tpu.memory_space<vmem>>, vector<1x32xf32>
    %c5 = arith.constant 5 : index
    %c0_10 = arith.constant 0 : index
    %7 = vector.load %arg7[%c5, %c0_10] : memref<8x128xf32, #tpu.memory_space<vmem>>, vector<1x32xf32>
    %c6 = arith.constant 6 : index
    %c0_11 = arith.constant 0 : index
    %8 = vector.load %arg7[%c6, %c0_11] : memref<8x128xf32, #tpu.memory_space<vmem>>, vector<1x128xf32>
    %c0_12 = arith.constant 0 : index
    %c0_13 = arith.constant 0 : index
    %c0_14 = arith.constant 0 : index
    %9 = vector.load %arg1[%c0_12, %c0_13, %c0_14] : memref<2x32x32xf32, #tpu.memory_space<vmem>>, vector<2x32x32xf32>
    "tpu.trace_start"() <{level = 10 : i32, message = "nqe,nem->nqm"}> : () -> ()
    %cst = arith.constant dense<0.000000e+00> : vector<2x8x32xf32>
    %10 = tpu.matmul %0, %9, %cst {dimension_numbers = #tpu.dot_dimension_numbers<[2], [1], [1], [2], [0, 0, 0, 1, 1, 2], [0], [0]>, precision = #tpu.contract_precision<fp32>} : vector<2x8x32xf32>, vector<2x32x32xf32>, vector<2x8x32xf32> -> vector<2x8x32xf32>
    "tpu.trace_stop"() : () -> ()
    %cst_15 = arith.constant 0.176776692 : f32
    %11 = vector.broadcast %cst_15 : f32 to vector<2x8x32xf32>
    %12 = arith.mulf %10, %11 : vector<2x8x32xf32>
    %13 = vector.shape_cast %12 : vector<2x8x32xf32> to vector<16x32xf32>
    %cst_16 = arith.constant dense<0xFF800000> : vector<16xf32>
    %14 = vector.multi_reduction <maximumf>, %13, %cst_16 [1] : vector<16x32xf32> to vector<16xf32>
    %15 = vector.shape_cast %14 : vector<16xf32> to vector<16x1xf32>
    %16 = vector.broadcast %15 : vector<16x1xf32> to vector<16x32xf32>
    %17 = arith.subf %13, %16 : vector<16x32xf32>
    %18 = math.exp %17 : vector<16x32xf32>
    %19 = tpu.iota {dimensions = array<i32: 0>} : vector<32x32xi32>
    %20 = tpu.iota {dimensions = array<i32: 1>} : vector<32x32xi32>
    %c3_i32 = arith.constant 3 : i32
    %21 = vector.broadcast %c3_i32 : i32 to vector<32x32xi32>
    %22 = arith.shrsi %19, %21 : vector<32x32xi32>
    %c3_i32_17 = arith.constant 3 : i32
    %23 = vector.broadcast %c3_i32_17 : i32 to vector<32x32xi32>
    %24 = arith.shrsi %20, %23 : vector<32x32xi32>
    %25 = arith.cmpi eq, %22, %24 : vector<32x32xi32>
    %26 = arith.extui %25 : vector<32x32xi1> to vector<32x32xi32>
    %27 = arith.sitofp %26 : vector<32x32xi32> to vector<32x32xf32>
    %cst_18 = arith.constant dense<0.000000e+00> : vector<16x32xf32>
    %28 = tpu.matmul %18, %27, %cst_18 {dimension_numbers = #tpu.dot_dimension_numbers<[1], [0], [0], [1], [0, 0, 1, 1], [], []>, precision = #tpu.contract_precision<fp32>} : vector<16x32xf32>, vector<32x32xf32>, vector<16x32xf32> -> vector<16x32xf32>
    %29 = arith.divf %18, %28 : vector<16x32xf32>
    %30 = vector.shape_cast %29 : vector<16x32xf32> to vector<2x8x32xf32>
    %c0_19 = arith.constant 0 : index
    %c0_20 = arith.constant 0 : index
    %c0_21 = arith.constant 0 : index
    %31 = vector.load %arg2[%c0_19, %c0_20, %c0_21] : memref<2x32x32xf32, #tpu.memory_space<vmem>>, vector<2x32x32xf32>
    "tpu.trace_start"() <{level = 10 : i32, message = "nqm,nme->nqe"}> : () -> ()
    %cst_22 = arith.constant dense<0.000000e+00> : vector<2x8x32xf32>
    %32 = tpu.matmul %30, %31, %cst_22 {dimension_numbers = #tpu.dot_dimension_numbers<[2], [1], [1], [2], [0, 0, 0, 1, 1, 2], [0], [0]>, precision = #tpu.contract_precision<fp32>} : vector<2x8x32xf32>, vector<2x32x32xf32>, vector<2x8x32xf32> -> vector<2x8x32xf32>
    "tpu.trace_stop"() : () -> ()
    %33 = vector.shape_cast %32 : vector<2x8x32xf32> to vector<16x32xf32>
    %c0_23 = arith.constant 0 : index
    %c0_24 = arith.constant 0 : index
    %34 = vector.load %arg4[%c0_23, %c0_24] : memref<32x32xf32, #tpu.memory_space<vmem>>, vector<32x32xf32>
    %cst_25 = arith.constant dense<0.000000e+00> : vector<16x32xf32>
    %35 = tpu.matmul %33, %34, %cst_25 {dimension_numbers = #tpu.dot_dimension_numbers<[1], [0], [0], [1], [0, 0, 1, 1], [], []>, precision = #tpu.contract_precision<fp32>} : vector<16x32xf32>, vector<32x32xf32>, vector<16x32xf32> -> vector<16x32xf32>
    %36 = vector.broadcast %2 : vector<1x32xf32> to vector<16x32xf32>
    %37 = arith.addf %35, %36 : vector<16x32xf32>
    %38 = arith.addf %37, %1 : vector<16x32xf32>
    %cst_26 = arith.constant dense<0.000000e+00> : vector<16xf32>
    %39 = vector.multi_reduction <add>, %38, %cst_26 [1] : vector<16x32xf32> to vector<16xf32>
    %40 = vector.shape_cast %39 : vector<16xf32> to vector<16x1xf32>
    %cst_27 = arith.constant 3.200000e+01 : f32
    %41 = vector.broadcast %cst_27 : f32 to vector<16x1xf32>
    %42 = arith.divf %40, %41 : vector<16x1xf32>
    %43 = vector.broadcast %42 : vector<16x1xf32> to vector<16x32xf32>
    %44 = arith.subf %38, %43 : vector<16x32xf32>
    %45 = arith.mulf %44, %44 : vector<16x32xf32>
    %cst_28 = arith.constant dense<0.000000e+00> : vector<16xf32>
    %46 = vector.multi_reduction <add>, %45, %cst_28 [1] : vector<16x32xf32> to vector<16xf32>
    %47 = vector.shape_cast %46 : vector<16xf32> to vector<16x1xf32>
    %cst_29 = arith.constant 3.200000e+01 : f32
    %48 = vector.broadcast %cst_29 : f32 to vector<16x1xf32>
    %49 = arith.divf %47, %48 : vector<16x1xf32>
    %50 = vector.broadcast %42 : vector<16x1xf32> to vector<16x32xf32>
    %51 = arith.subf %38, %50 : vector<16x32xf32>
    %cst_30 = arith.constant 9.99999974E-6 : f32
    %52 = vector.broadcast %cst_30 : f32 to vector<16x1xf32>
    %53 = arith.addf %49, %52 : vector<16x1xf32>
    %54 = math.rsqrt %53 : vector<16x1xf32>
    %55 = vector.broadcast %54 : vector<16x1xf32> to vector<16x32xf32>
    %56 = arith.mulf %51, %55 : vector<16x32xf32>
    %57 = vector.broadcast %3 : vector<1x32xf32> to vector<16x32xf32>
    %58 = arith.mulf %56, %57 : vector<16x32xf32>
    %59 = vector.broadcast %4 : vector<1x32xf32> to vector<16x32xf32>
    %60 = arith.addf %58, %59 : vector<16x32xf32>
    %c0_31 = arith.constant 0 : index
    %c0_32 = arith.constant 0 : index
    %61 = vector.load %arg5[%c0_31, %c0_32] : memref<32x128xf32, #tpu.memory_space<vmem>>, vector<32x128xf32>
    %cst_33 = arith.constant dense<0.000000e+00> : vector<16x128xf32>
    %62 = tpu.matmul %60, %61, %cst_33 {dimension_numbers = #tpu.dot_dimension_numbers<[1], [0], [0], [1], [0, 0, 1, 1], [], []>, precision = #tpu.contract_precision<fp32>} : vector<16x32xf32>, vector<32x128xf32>, vector<16x128xf32> -> vector<16x128xf32>
    %63 = vector.broadcast %8 : vector<1x128xf32> to vector<16x128xf32>
    %64 = arith.addf %62, %63 : vector<16x128xf32>
    %cst_34 = arith.constant 0.000000e+00 : f32
    %65 = vector.broadcast %cst_34 : f32 to vector<16x128xf32>
    %66 = arith.maximumf %64, %65 : vector<16x128xf32>
    %c0_35 = arith.constant 0 : index
    %c0_36 = arith.constant 0 : index
    %67 = vector.load %arg6[%c0_35, %c0_36] : memref<128x32xf32, #tpu.memory_space<vmem>>, vector<128x32xf32>
    %cst_37 = arith.constant dense<0.000000e+00> : vector<16x32xf32>
    %68 = tpu.matmul %66, %67, %cst_37 {dimension_numbers = #tpu.dot_dimension_numbers<[1], [0], [0], [1], [0, 0, 1, 1], [], []>, precision = #tpu.contract_precision<fp32>} : vector<16x128xf32>, vector<128x32xf32>, vector<16x32xf32> -> vector<16x32xf32>
    %69 = vector.broadcast %5 : vector<1x32xf32> to vector<16x32xf32>
    %70 = arith.addf %68, %69 : vector<16x32xf32>
    %71 = arith.addf %70, %60 : vector<16x32xf32>
    %cst_38 = arith.constant dense<0.000000e+00> : vector<16xf32>
    %72 = vector.multi_reduction <add>, %71, %cst_38 [1] : vector<16x32xf32> to vector<16xf32>
    %73 = vector.shape_cast %72 : vector<16xf32> to vector<16x1xf32>
    %cst_39 = arith.constant 3.200000e+01 : f32
    %74 = vector.broadcast %cst_39 : f32 to vector<16x1xf32>
    %75 = arith.divf %73, %74 : vector<16x1xf32>
    %76 = vector.broadcast %75 : vector<16x1xf32> to vector<16x32xf32>
    %77 = arith.subf %71, %76 : vector<16x32xf32>
    %78 = arith.mulf %77, %77 : vector<16x32xf32>
    %cst_40 = arith.constant dense<0.000000e+00> : vector<16xf32>
    %79 = vector.multi_reduction <add>, %78, %cst_40 [1] : vector<16x32xf32> to vector<16xf32>
    %80 = vector.shape_cast %79 : vector<16xf32> to vector<16x1xf32>
    %cst_41 = arith.constant 3.200000e+01 : f32
    %81 = vector.broadcast %cst_41 : f32 to vector<16x1xf32>
    %82 = arith.divf %80, %81 : vector<16x1xf32>
    %83 = vector.broadcast %75 : vector<16x1xf32> to vector<16x32xf32>
    %84 = arith.subf %71, %83 : vector<16x32xf32>
    %cst_42 = arith.constant 9.99999974E-6 : f32
    %85 = vector.broadcast %cst_42 : f32 to vector<16x1xf32>
    %86 = arith.addf %82, %85 : vector<16x1xf32>
    %87 = math.rsqrt %86 : vector<16x1xf32>
    %88 = vector.broadcast %87 : vector<16x1xf32> to vector<16x32xf32>
    %89 = arith.mulf %84, %88 : vector<16x32xf32>
    %90 = vector.broadcast %6 : vector<1x32xf32> to vector<16x32xf32>
    %91 = arith.mulf %89, %90 : vector<16x32xf32>
    %92 = vector.broadcast %7 : vector<1x32xf32> to vector<16x32xf32>
    %93 = arith.addf %91, %92 : vector<16x32xf32>
    %c0_43 = arith.constant 0 : index
    %c0_44 = arith.constant 0 : index
    %94 = vector.load %arg8[%c0_43, %c0_44] : memref<16x32xf32, #tpu.memory_space<vmem>>, vector<16x32xf32>
    tpu.vector_store %arg8[%c0_43, %c0_44], %93 {strides = array<i32>} : memref<16x32xf32, #tpu.memory_space<vmem>>, vector<16x32xf32>,
    return
  }
}

</mosaic_0001>

<llo_original>
// kernel: transformer_block.1
$region0: #{transformer_block.1}
  #allocation0 [shape = 'u32[]', space=smem, size = 0x4, offset = 0x4, fixed_abs, tag = 'smem constant byte address 0x4 - core index']
  #allocation1 [shape = 'u32[144,128]{1,0:T(1,128)}', space=vmem, size = 0x12000, scoped, tag = 'internal scratch']
  %s0 = inlined_call_operand.vmem [shape: f32[2,8,32], index: 0, kind: input, shape index: {}]
  %s1 = inlined_call_operand.vmem [shape: f32[2,32,32], index: 1, kind: input, shape index: {}]
  %s2 = inlined_call_operand.vmem [shape: f32[2,32,32], index: 2, kind: input, shape index: {}]
  %s3 = inlined_call_operand.vmem [shape: f32[16,32], index: 3, kind: input, shape index: {}]
  %s4 = inlined_call_operand.vmem [shape: f32[32,32], index: 4, kind: input, shape index: {}]
  %s5 = inlined_call_operand.vmem [shape: f32[32,128], index: 5, kind: input, shape index: {}]
  %s6 = inlined_call_operand.vmem [shape: f32[128,32], index: 6, kind: input, shape index: {}]
  %s7 = inlined_call_operand.vmem [shape: f32[8,128], index: 7, kind: input, shape index: {}]
  %s8 = inlined_call_operand.hbm [shape: f32[16,32], index: 8, kind: output, shape index: {}]
  %s9 = sld [smem:[#allocation0]]
  $region42: #{transformer_block.1} parent=0
    _
  %s11 = ssub.s32 1, %s9
  %s12 = scalar_select 0, %s11, %s9
  $region1: #{transformer_block.1} parent=0
    #allocation2 [shape = 'u8[8192]{0}', space=vmem, size = 0x2000, scoped, tag = 'output window, operand 0, single buffered']
    #allocation3 [shape = 's32[1]{0}', space=sflag, size = 0x4, scoped, tag = 'scoped memory for transformer_block.1']
    %13 = vsyncpa [#allocation3], 0
    // Predicated region
    $region2: #{transformer_block.1} parent=1 // pred_check
      _
    $region3: #{transformer_block.1} parent=1 // pred_check_branch
      %15 = sbr.rel (0) target = $region5
    $region4: #{transformer_block.1} parent=1 // pred_region
      _
    $region5: #{transformer_block.1} parent=1 // pred_fallthru
      _
    // Predicated region
    $region6: #{transformer_block.1} parent=1 // pred_check
      _
    $region7: #{transformer_block.1} parent=1 // pred_check_branch
      %17 = sbr.rel (0) target = $region9
    $region8: #{transformer_block.1} parent=1 // pred_region
      _
    $region9: #{transformer_block.1} parent=1 // pred_fallthru
      _
    // Predicated region
    $region10: #{transformer_block.1} parent=1 // pred_check
      _
    $region11: #{transformer_block.1} parent=1 // pred_check_branch
      %19 = sbr.rel (0) target = $region13
    $region12: #{transformer_block.1} parent=1 // pred_region
      _
    $region13: #{transformer_block.1} parent=1 // pred_fallthru
      _
    // Predicated region
    $region14: #{transformer_block.1} parent=1 // pred_check
      _
    $region15: #{transformer_block.1} parent=1 // pred_check_branch
      %21 = sbr.rel (0) target = $region17
    $region16: #{transformer_block.1} parent=1 // pred_region
      _
    $region17: #{transformer_block.1} parent=1 // pred_fallthru
      _
    // Predicated region
    $region18: #{transformer_block.1} parent=1 // pred_check
      _
    $region19: #{transformer_block.1} parent=1 // pred_check_branch
      %23 = sbr.rel (0) target = $region21
    $region20: #{transformer_block.1} parent=1 // pred_region
      _
    $region21: #{transformer_block.1} parent=1 // pred_fallthru
      _
    // Predicated region
    $region22: #{transformer_block.1} parent=1 // pred_check
      _
    $region23: #{transformer_block.1} parent=1 // pred_check_branch
      %25 = sbr.rel (0) target = $region25
    $region24: #{transformer_block.1} parent=1 // pred_region
      _
    $region25: #{transformer_block.1} parent=1 // pred_fallthru
      _
    // Predicated region
    $region26: #{transformer_block.1} parent=1 // pred_check
      _
    $region27: #{transformer_block.1} parent=1 // pred_check_branch
      %27 = sbr.rel (0) target = $region29
    $region28: #{transformer_block.1} parent=1 // pred_region
      _
    $region29: #{transformer_block.1} parent=1 // pred_fallthru
      _
    // Predicated region
    $region30: #{transformer_block.1} parent=1 // pred_check
      _
    $region31: #{transformer_block.1} parent=1 // pred_check_branch
      %29 = sbr.rel (0) target = $region33
    $region32: #{transformer_block.1} parent=1 // pred_region
      _
    $region33: #{transformer_block.1} parent=1 // pred_fallthru
      _
    %v30 = vld [vmem:[%s0] sm:$0xff]
    %v31 = vld [vmem:[%s0 + $0x8] sm:$0xff]
    %v32 = vld [vmem:[%s3] sm:$0xff]
    %v33 = vld [vmem:[%s3 + $0x8] sm:$0xff]
    %v34 = vld [vmem:[%s7] sm:$0x1]
    %v35 = vld [vmem:[%s7 + $0x1] sm:$0x1]
    %v36 = vld [vmem:[%s7 + $0x2] sm:$0x1]
    %v37 = vld [vmem:[%s7 + $0x3] sm:$0x1]
    %v38 = vld [vmem:[%s7 + $0x4] sm:$0x1]
    %v39 = vld [vmem:[%s7 + $0x5] sm:$0x1]
    %v40 = vld [vmem:[%s7 + $0x6] sm:$0x1]
    %v41 = vld [vmem:[%s1] sm:$0xff]
    %v42 = vld [vmem:[%s1 + $0x8] sm:$0xff]
    %v43 = vld [vmem:[%s1 + $0x10] sm:$0xff]
    %v44 = vld [vmem:[%s1 + $0x18] sm:$0xff]
    %v45 = vld [vmem:[%s1 + $0x20] sm:$0xff]
    %v46 = vld [vmem:[%s1 + $0x28] sm:$0xff]
    %v47 = vld [vmem:[%s1 + $0x30] sm:$0xff]
    %v48 = vld [vmem:[%s1 + $0x38] sm:$0xff]
    %vm49 = vcmask 261120
    %v51 = vsel %vm49, %v30, 0
    %53 = vmatprep.subr.mxu0 0.0
    %v54 = vand.u32 %v41, 4294901760
    %55 = vmatpush1.msra.mxu0 %v54
    %56 = vmatprep.subr.mxu0 0.0
    %v57 = vand.u32 %v42, 4294901760
    %58 = vmatpush1.msra.mxu0 %v57
    %59 = vmatprep.subr.mxu0 0.0
    %v60 = vand.u32 %v43, 4294901760
    %61 = vmatpush1.msra.mxu0 %v60
    %62 = vmatprep.subr.mxu0 0.0
    %v63 = vand.u32 %v44, 4294901760
    %64 = vmatpush1.msra.mxu0 %v63
    %65 = vmatprep.subr.mxu0 0.0
    %66 = vmatpush1.msra.mxu0 0.0
    %67 = vmatprep.subr.mxu0 0.0
    %68 = vmatpush1.msra.mxu0 0.0
    %69 = vmatprep.subr.mxu0 0.0
    %70 = vmatpush1.msra.mxu0 0.0
    %71 = vmatprep.subr.mxu0 0.0
    %72 = vmatpush1.msra.mxu0 0.0
    %73 = vmatprep.subr.mxu0 0.0
    %74 = vmatpush1.msra.mxu0 0.0
    %75 = vmatprep.subr.mxu0 0.0
    %76 = vmatpush1.msra.mxu0 0.0
    %77 = vmatprep.subr.mxu0 0.0
    %78 = vmatpush1.msra.mxu0 0.0
    %79 = vmatprep.subr.mxu0 0.0
    %80 = vmatpush1.msra.mxu0 0.0
    %81 = vmatprep.subr.mxu0 0.0
    %82 = vmatpush1.msra.mxu0 0.0
    %83 = vmatprep.subr.mxu0 0.0
    %84 = vmatpush1.msra.mxu0 0.0
    %85 = vmatprep.subr.mxu0 0.0
    %86 = vmatpush1.msra.mxu0 0.0
    %87 = vmatprep.subr.mxu0 0.0
    %88 = vmatpush1.msra.mxu0 0.0
    %89 = vmatprep.subr.mxu0 0.0
    %90 = vmatpush1.msra.mxu0 0.0
    %91 = vmatprep.subr.mxu0 0.0
    %92 = vmatpush1.msra.mxu0 0.0
    %93 = vmatprep.subr.mxu0 0.0
    %94 = vmatpush1.msra.mxu0 0.0
    %95 = vmatprep.subr.mxu0 0.0
    %96 = vmatpush1.msra.mxu0 0.0
    %97 = vmatprep.subr.mxu0 0.0
    %98 = vmatpush1.msra.mxu0 0.0
    %99 = vmatprep.subr.mxu0 0.0
    %100 = vmatpush1.msra.mxu0 0.0
    %101 = vmatprep.subr.mxu0 0.0
    %102 = vmatpush1.msra.mxu0 0.0
    %103 = vmatprep.subr.mxu0 0.0
    %104 = vmatpush1.msra.mxu0 0.0
    %105 = vmatprep.subr.mxu0 0.0
    %106 = vmatpush1.msra.mxu0 0.0
    %107 = vmatprep.subr.mxu0 0.0
    %108 = vmatpush1.msra.mxu0 0.0
    %109 = vmatprep.subr.mxu0 0.0
    %110 = vmatpush1.msra.mxu0 0.0
    %111 = vmatprep.subr.mxu0 0.0
    %112 = vmatpush1.msra.mxu0 0.0
    %113 = vmatprep.subr.mxu0 0.0
    %114 = vmatpush1.msra.mxu0 0.0
    %115 = vmatprep.subr.mxu0 0.0
    %116 = vmatpush1.msra.mxu0 0.0
    %117 = vmatprep.subr.mxu0 0.0
    %118 = vmatpush1.msra.mxu0 0.0
    %119 = vmatprep.subr.mxu0 0.0
    %120 = vmatpush1.msra.mxu0 0.0
    %121 = vmatprep.mubr.f32.mxu0 0.0
    %v122 = vand.u32 %v51, 4294901760
    %v123 = vsub.f32 %v51, %v122
    %v124 = vand.u32 %v123, 4294901760
    %v125 = vsub.f32 %v123, %v124
    %v126 = vand.u32 %v125, 4294901760
    %127 = vmatmul.mubr.f32.gmra.mrb[0].mxu0 %v126
    %v128 = vpop.f32.mrb[0].mxu0
    %v129 = vadd.f32 0.0, %v128
    %v130 = vpop.f32.mrb[0].mxu0
    %131 = vdwg.mxu0
    %132 = vmatprep.subr.mxu0 0.0
    %v133 = vand.u32 %v41, 4294901760
    %v134 = vsub.f32 %v41, %v133
    %v135 = vand.u32 %v134, 4294901760
    %v136 = vsub.f32 %v134, %v135
    %v137 = vand.u32 %v136, 4294901760
    %138 = vmatpush1.msra.mxu0 %v137
    %139 = vmatprep.subr.mxu0 0.0
    %v140 = vand.u32 %v42, 4294901760
    %v141 = vsub.f32 %v42, %v140
    %v142 = vand.u32 %v141, 4294901760
    %v143 = vsub.f32 %v141, %v142
    %v144 = vand.u32 %v143, 4294901760
    %145 = vmatpush1.msra.mxu0 %v144
    %146 = vmatprep.subr.mxu0 0.0
    %v147 = vand.u32 %v43, 4294901760
    %v148 = vsub.f32 %v43, %v147
    %v149 = vand.u32 %v148, 4294901760
    %v150 = vsub.f32 %v148, %v149
    %v151 = vand.u32 %v150, 4294901760
    %152 = vmatpush1.msra.mxu0 %v151
    %153 = vmatprep.subr.mxu0 0.0
    %v154 = vand.u32 %v44, 4294901760
    %v155 = vsub.f32 %v44, %v154
    %v156 = vand.u32 %v155, 4294901760
    %v157 = vsub.f32 %v155, %v156
    %v158 = vand.u32 %v157, 4294901760
    %159 = vmatpush1.msra.mxu0 %v158
    %160 = vmatprep.subr.mxu0 0.0
    %161 = vmatpush1.msra.mxu0 0.0
    %162 = vmatprep.subr.mxu0 0.0
    %163 = vmatpush1.msra.mxu0 0.0
    %164 = vmatprep.subr.mxu0 0.0
    %165 = vmatpush1.msra.mxu0 0.0
    %166 = vmatprep.subr.mxu0 0.0
    %167 = vmatpush1.msra.mxu0 0.0
    %168 = vmatprep.subr.mxu0 0.0
    %169 = vmatpush1.msra.mxu0 0.0
    %170 = vmatprep.subr.mxu0 0.0
    %171 = vmatpush1.msra.mxu0 0.0
    %172 = vmatprep.subr.mxu0 0.0
    %173 = vmatpush1.msra.mxu0 0.0
    %174 = vmatprep.subr.mxu0 0.0
    %175 = vmatpush1.msra.mxu0 0.0
    %176 = vmatprep.subr.mxu0 0.0
    %177 = vmatpush1.msra.mxu0 0.0
    %178 = vmatprep.subr.mxu0 0.0
    %179 = vmatpush1.msra.mxu0 0.0
    %180 = vmatprep.subr.mxu0 0.0
    %181 = vmatpush1.msra.mxu0 0.0
    %182 = vmatprep.subr.mxu0 0.0
    %183 = vmatpush1.msra.mxu0 0.0
    %184 = vmatprep.subr.mxu0 0.0
    %185 = vmatpush1.msra.mxu0 0.0
    %186 = vmatprep.subr.mxu0 0.0
    %187 = vmatpush1.msra.mxu0 0.0
    %188 = vmatprep.subr.mxu0 0.0
    %189 = vmatpush1.msra.mxu0 0.0
    %190 = vmatprep.subr.mxu0 0.0
    %191 = vmatpush1.msra.mxu0 0.0
    %192 = vmatprep.subr.mxu0 0.0
    %193 = vmatpush1.msra.mxu0 0.0
    %194 = vmatprep.subr.mxu0 0.0
    %195 = vmatpush1.msra.mxu0 0.0
    %196 = vmatprep.subr.mxu0 0.0
    %197 = vmatpush1.msra.mxu0 0.0
    %198 = vmatprep.subr.mxu0 0.0
    %199 = vmatpush1.msra.mxu0 0.0
    %200 = vmatprep.subr.mxu0 0.0
    %201 = vmatpush1.msra.mxu0 0.0
    %202 = vmatprep.subr.mxu0 0.0
    %203 = vmatpush1.msra.mxu0 0.0
    %204 = vmatprep.subr.mxu0 0.0
    %205 = vmatpush1.msra.mxu0 0.0
    %206 = vmatprep.subr.mxu0 0.0
    %207 = vmatpush1.msra.mxu0 0.0
    %208 = vmatprep.subr.mxu0 0.0
    %209 = vmatpush1.msra.mxu0 0.0
    %210 = vmatprep.subr.mxu0 0.0
    %211 = vmatpush1.msra.mxu0 0.0
    %212 = vmatprep.subr.mxu0 0.0
    %213 = vmatpush1.msra.mxu0 0.0
    %214 = vmatprep.subr.mxu0 0.0
    %215 = vmatpush1.msra.mxu0 0.0
    %216 = vmatprep.mubr.f32.mxu0 0.0
    %v217 = vand.u32 %v51, 4294901760
    %218 = vmatmul.mubr.f32.gmra.mrb[0].mxu0 %v217
    %v219 = vpop.f32.mrb[0].mxu0
    %v220 = vadd.f32 %v129, %v219
    %v221 = vpop.f32.mrb[0].mxu0
    %222 = vdwg.mxu0
    %223 = vmatprep.subr.mxu0 0.0
    %v224 = vand.u32 %v41, 4294901760
    %v225 = vsub.f32 %v41, %v224
    %226 = vmatpush1.msra.mxu0 %v225
    %227 = vmatprep.subr.mxu0 0.0
    %v228 = vand.u32 %v42, 4294901760
    %v229 = vsub.f32 %v42, %v228
    %230 = vmatpush1.msra.mxu0 %v229
    %231 = vmatprep.subr.mxu0 0.0
    %v232 = vand.u32 %v43, 4294901760
    %v233 = vsub.f32 %v43, %v232
    %234 = vmatpush1.msra.mxu0 %v233
    %235 = vmatprep.subr.mxu0 0.0
    %v236 = vand.u32 %v44, 4294901760
    %v237 = vsub.f32 %v44, %v236
    %238 = vmatpush1.msra.mxu0 %v237
    %239 = vmatprep.subr.mxu0 0.0
    %240 = vmatpush1.msra.mxu0 0.0
    %241 = vmatprep.subr.mxu0 0.0
    %242 = vmatpush1.msra.mxu0 0.0
    %243 = vmatprep.subr.mxu0 0.0
    %244 = vmatpush1.msra.mxu0 0.0
    %245 = vmatprep.subr.mxu0 0.0
    %246 = vmatpush1.msra.mxu0 0.0
    %247 = vmatprep.subr.mxu0 0.0
    %248 = vmatpush1.msra.mxu0 0.0
    %249 = vmatprep.subr.mxu0 0.0
    %250 = vmatpush1.msra.mxu0 0.0
    %251 = vmatprep.subr.mxu0 0.0
    %252 = vmatpush1.msra.mxu0 0.0
    %253 = vmatprep.subr.mxu0 0.0
    %254 = vmatpush1.msra.mxu0 0.0
    %255 = vmatprep.subr.mxu0 0.0
    %256 = vmatpush1.msra.mxu0 0.0
    %257 = vmatprep.subr.mxu0 0.0
    %258 = vmatpush1.msra.mxu0 0.0
    %259 = vmatprep.subr.mxu0 0.0
    %260 = vmatpush1.msra.mxu0 0.0
    %261 = vmatprep.subr.mxu0 0.0
    %262 = vmatpush1.msra.mxu0 0.0
    %263 = vmatprep.subr.mxu0 0.0
    %264 = vmatpush1.msra.mxu0 0.0
    %265 = vmatprep.subr.mxu0 0.0
    %266 = vmatpush1.msra.mxu0 0.0
    %267 = vmatprep.subr.mxu0 0.0
    %268 = vmatpush1.msra.mxu0 0.0
    %269 = vmatprep.subr.mxu0 0.0
    %270 = vmatpush1.msra.mxu0 0.0
    %271 = vmatprep.subr.mxu0 0.0
    %272 = vmatpush1.msra.mxu0 0.0
    %273 = vmatprep.subr.mxu0 0.0
    %274 = vmatpush1.msra.mxu0 0.0
    %275 = vmatprep.subr.mxu0 0.0
    %276 = vmatpush1.msra.mxu0 0.0
    %277 = vmatprep.subr.mxu0 0.0
    %278 = vmatpush1.msra.mxu0 0.0
    %279 = vmatprep.subr.mxu0 0.0
    %280 = vmatpush1.msra.mxu0 0.0
    %281 = vmatprep.subr.mxu0 0.0
    %282 = vmatpush1.msra.mxu0 0.0
    %283 = vmatprep.subr.mxu0 0.0
    %284 = vmatpush1.msra.mxu0 0.0
    %285 = vmatprep.subr.mxu0 0.0
    %286 = vmatpush1.msra.mxu0 0.0
    %287 = vmatprep.subr.mxu0 0.0
    %288 = vmatpush1.msra.mxu0 0.0
    %289 = vmatprep.subr.mxu0 0.0
    %290 = vmatpush1.msra.mxu0 0.0
    %291 = vmatprep.subr.mxu0 0.0
    %292 = vmatpush1.msra.mxu0 0.0
    %293 = vmatprep.subr.mxu0 0.0
    %294 = vmatpush1.msra.mxu0 0.0
    %295 = vmatprep.mubr.f32.mxu0 0.0
    %v296 = vand.u32 %v51, 4294901760
    %v297 = vsub.f32 %v51, %v296
    %298 = vmatmul.mubr.f32.gmra.mrb[0].mxu0 %v297
    %v299 = vpop.f32.mrb[0].mxu0
    %v300 = vadd.f32 %v220, %v299
    %v301 = vpop.f32.mrb[0].mxu0
    %302 = vdwg.mxu0
    %303 = vmatprep.subr.mxu0 0.0
    %v304 = vand.u32 %v41, 4294901760
    %305 = vmatpush1.msra.mxu0 %v304
    %306 = vmatprep.subr.mxu0 0.0
    %v307 = vand.u32 %v42, 4294901760
    %308 = vmatpush1.msra.mxu0 %v307
    %309 = vmatprep.subr.mxu0 0.0
    %v310 = vand.u32 %v43, 4294901760
    %311 = vmatpush1.msra.mxu0 %v310
    %312 = vmatprep.subr.mxu0 0.0
    %v313 = vand.u32 %v44, 4294901760
    %314 = vmatpush1.msra.mxu0 %v313
    %315 = vmatprep.subr.mxu0 0.0
    %316 = vmatpush1.msra.mxu0 0.0
    %317 = vmatprep.subr.mxu0 0.0
    %318 = vmatpush1.msra.mxu0 0.0
    %319 = vmatprep.subr.mxu0 0.0
    %320 = vmatpush1.msra.mxu0 0.0
    %321 = vmatprep.subr.mxu0 0.0
    %322 = vmatpush1.msra.mxu0 0.0
    %323 = vmatprep.subr.mxu0 0.0
    %324 = vmatpush1.msra.mxu0 0.0
    %325 = vmatprep.subr.mxu0 0.0
    %326 = vmatpush1.msra.mxu0 0.0
    %327 = vmatprep.subr.mxu0 0.0
    %328 = vmatpush1.msra.mxu0 0.0
    %329 = vmatprep.subr.mxu0 0.0
    %330 = vmatpush1.msra.mxu0 0.0
    %331 = vmatprep.subr.mxu0 0.0
    %332 = vmatpush1.msra.mxu0 0.0
    %333 = vmatprep.subr.mxu0 0.0
    %334 = vmatpush1.msra.mxu0 0.0
    %335 = vmatprep.subr.mxu0 0.0
    %336 = vmatpush1.msra.mxu0 0.0
    %337 = vmatprep.subr.mxu0 0.0
    %338 = vmatpush1.msra.mxu0 0.0
    %339 = vmatprep.subr.mxu0 0.0
    %340 = vmatpush1.msra.mxu0 0.0
    %341 = vmatprep.subr.mxu0 0.0
    %342 = vmatpush1.msra.mxu0 0.0
    %343 = vmatprep.subr.mxu0 0.0
    %344 = vmatpush1.msra.mxu0 0.0
    %345 = vmatprep.subr.mxu0 0.0
    %346 = vmatpush1.msra.mxu0 0.0
    %347 = vmatprep.subr.mxu0 0.0
    %348 = vmatpush1.msra.mxu0 0.0
    %349 = vmatprep.subr.mxu0 0.0
    %350 = vmatpush1.msra.mxu0 0.0
    %351 = vmatprep.subr.mxu0 0.0
    %352 = vmatpush1.msra.mxu0 0.0
    %353 = vmatprep.subr.mxu0 0.0
    %354 = vmatpush1.msra.mxu0 0.0
    %355 = vmatprep.subr.mxu0 0.0
    %356 = vmatpush1.msra.mxu0 0.0
    %357 = vmatprep.subr.mxu0 0.0
    %358 = vmatpush1.msra.mxu0 0.0
    %359 = vmatprep.subr.mxu0 0.0
    %360 = vmatpush1.msra.mxu0 0.0
    %361 = vmatprep.subr.mxu0 0.0
    %362 = vmatpush1.msra.mxu0 0.0
    %363 = vmatprep.subr.mxu0 0.0
    %364 = vmatpush1.msra.mxu0 0.0
    %365 = vmatprep.subr.mxu0 0.0
    %366 = vmatpush1.msra.mxu0 0.0
    %367 = vmatprep.subr.mxu0 0.0
    %368 = vmatpush1.msra.mxu0 0.0
    %369 = vmatprep.subr.mxu0 0.0
    %370 = vmatpush1.msra.mxu0 0.0
    %371 = vmatprep.mubr.f32.mxu0 0.0
    %v372 = vand.u32 %v51, 4294901760
    %v373 = vsub.f32 %v51, %v372
    %v374 = vand.u32 %v373, 4294901760
    %375 = vmatmul.mubr.f32.gmra.mrb[0].mxu0 %v374
    %v376 = vpop.f32.mrb[0].mxu0
    %v377 = vadd.f32 %v300, %v376
    %v378 = vpop.f32.mrb[0].mxu0
    %379 = vdwg.mxu0
    %380 = vmatprep.subr.mxu0 0.0
    %v381 = vand.u32 %v41, 4294901760
    %v382 = vsub.f32 %v41, %v381
    %v383 = vand.u32 %v382, 4294901760
    %384 = vmatpush1.msra.mxu0 %v383
    %385 = vmatprep.subr.mxu0 0.0
    %v386 = vand.u32 %v42, 4294901760
    %v387 = vsub.f32 %v42, %v386
    %v388 = vand.u32 %v387, 4294901760
    %389 = vmatpush1.msra.mxu0 %v388
    %390 = vmatprep.subr.mxu0 0.0
    %v391 = vand.u32 %v43, 4294901760
    %v392 = vsub.f32 %v43, %v391
    %v393 = vand.u32 %v392, 4294901760
    %394 = vmatpush1.msra.mxu0 %v393
    %395 = vmatprep.subr.mxu0 0.0
    %v396 = vand.u32 %v44, 4294901760
    %v397 = vsub.f32 %v44, %v396
    %v398 = vand.u32 %v397, 4294901760
    %399 = vmatpush1.msra.mxu0 %v398
    %400 = vmatprep.subr.mxu0 0.0
    %401 = vmatpush1.msra.mxu0 0.0
    %402 = vmatprep.subr.mxu0 0.0
    %403 = vmatpush1.msra.mxu0 0.0
    %404 = vmatprep.subr.mxu0 0.0
    %405 = vmatpush1.msra.mxu0 0.0
    %406 = vmatprep.subr.mxu0 0.0
    %407 = vmatpush1.msra.mxu0 0.0
    %408 = vmatprep.subr.mxu0 0.0
    %409 = vmatpush1.msra.mxu0 0.0
    %410 = vmatprep.subr.mxu0 0.0
    %411 = vmatpush1.msra.mxu0 0.0
    %412 = vmatprep.subr.mxu0 0.0
    %413 = vmatpush1.msra.mxu0 0.0
    %414 = vmatprep.subr.mxu0 0.0
    %415 = vmatpush1.msra.mxu0 0.0
    %416 = vmatprep.subr.mxu0 0.0
    %417 = vmatpush1.msra.mxu0 0.0
    %418 = vmatprep.subr.mxu0 0.0
    %419 = vmatpush1.msra.mxu0 0.0
    %420 = vmatprep.subr.mxu0 0.0
    %421 = vmatpush1.msra.mxu0 0.0
    %422 = vmatprep.subr.mxu0 0.0
    %423 = vmatpush1.msra.mxu0 0.0
    %424 = vmatprep.subr.mxu0 0.0
    %425 = vmatpush1.msra.mxu0 0.0
    %426 = vmatprep.subr.mxu0 0.0
    %427 = vmatpush1.msra.mxu0 0.0
    %428 = vmatprep.subr.mxu0 0.0
    %429 = vmatpush1.msra.mxu0 0.0
    %430 = vmatprep.subr.mxu0 0.0
    %431 = vmatpush1.msra.mxu0 0.0
    %432 = vmatprep.subr.mxu0 0.0
    %433 = vmatpush1.msra.mxu0 0.0
    %434 = vmatprep.subr.mxu0 0.0
    %435 = vmatpush1.msra.mxu0 0.0
    %436 = vmatprep.subr.mxu0 0.0
    %437 = vmatpush1.msra.mxu0 0.0
    %438 = vmatprep.subr.mxu0 0.0
    %439 = vmatpush1.msra.mxu0 0.0
    %440 = vmatprep.subr.mxu0 0.0
    %441 = vmatpush1.msra.mxu0 0.0
    %442 = vmatprep.subr.mxu0 0.0
    %443 = vmatpush1.msra.mxu0 0.0
    %444 = vmatprep.subr.mxu0 0.0
    %445 = vmatpush1.msra.mxu0 0.0
    %446 = vmatprep.subr.mxu0 0.0
    %447 = vmatpush1.msra.mxu0 0.0
    %448 = vmatprep.subr.mxu0 0.0
    %449 = vmatpush1.msra.mxu0 0.0
    %450 = vmatprep.subr.mxu0 0.0
    %451 = vmatpush1.msra.mxu0 0.0
    %452 = vmatprep.subr.mxu0 0.0
    %453 = vmatpush1.msra.mxu0 0.0
    %454 = vmatprep.subr.mxu0 0.0
    %455 = vmatpush1.msra.mxu0 0.0
    %456 = vmatprep.mubr.f32.mxu0 0.0
    %v457 = vand.u32 %v51, 4294901760
    %458 = vmatmul.mubr.f32.gmra.mrb[0].mxu0 %v457
    %v459 = vpop.f32.mrb[0].mxu0
    %v460 = vadd.f32 %v377, %v459
    %v461 = vpop.f32.mrb[0].mxu0
    %462 = vdwg.mxu0
    %463 = vmatprep.subr.mxu0 0.0
    %v464 = vand.u32 %v41, 4294901760
    %465 = vmatpush1.msra.mxu0 %v464
    %466 = vmatprep.subr.mxu0 0.0
    %v467 = vand.u32 %v42, 4294901760
    %468 = vmatpush1.msra.mxu0 %v467
    %469 = vmatprep.subr.mxu0 0.0
    %v470 = vand.u32 %v43, 4294901760
    %471 = vmatpush1.msra.mxu0 %v470
    %472 = vmatprep.subr.mxu0 0.0
    %v473 = vand.u32 %v44, 4294901760
    %474 = vmatpush1.msra.mxu0 %v473
    %475 = vmatprep.subr.mxu0 0.0
    %476 = vmatpush1.msra.mxu0 0.0
    %477 = vmatprep.subr.mxu0 0.0
    %478 = vmatpush1.msra.mxu0 0.0
    %479 = vmatprep.subr.mxu0 0.0
    %480 = vmatpush1.msra.mxu0 0.0
    %481 = vmatprep.subr.mxu0 0.0
    %482 = vmatpush1.msra.mxu0 0.0
    %483 = vmatprep.subr.mxu0 0.0
    %484 = vmatpush1.msra.mxu0 0.0
    %485 = vmatprep.subr.mxu0 0.0
    %486 = vmatpush1.msra.mxu0 0.0
    %487 = vmatprep.subr.mxu0 0.0
    %488 = vmatpush1.msra.mxu0 0.0
    %489 = vmatprep.subr.mxu0 0.0
    %490 = vmatpush1.msra.mxu0 0.0
    %491 = vmatprep.subr.mxu0 0.0
    %492 = vmatpush1.msra.mxu0 0.0
    %493 = vmatprep.subr.mxu0 0.0
    %494 = vmatpush1.msra.mxu0 0.0
    %495 = vmatprep.subr.mxu0 0.0
    %496 = vmatpush1.msra.mxu0 0.0
    %497 = vmatprep.subr.mxu0 0.0
    %498 = vmatpush1.msra.mxu0 0.0
    %499 = vmatprep.subr.mxu0 0.0
    %500 = vmatpush1.msra.mxu0 0.0
    %501 = vmatprep.subr.mxu0 0.0
    %502 = vmatpush1.msra.mxu0 0.0
    %503 = vmatprep.subr.mxu0 0.0
    %504 = vmatpush1.msra.mxu0 0.0
    %505 = vmatprep.subr.mxu0 0.0
    %506 = vmatpush1.msra.mxu0 0.0
    %507 = vmatprep.subr.mxu0 0.0
    %508 = vmatpush1.msra.mxu0 0.0
    %509 = vmatprep.subr.mxu0 0.0
    %510 = vmatpush1.msra.mxu0 0.0
    %511 = vmatprep.subr.mxu0 0.0
    %512 = vmatpush1.msra.mxu0 0.0
    %513 = vmatprep.subr.mxu0 0.0
    %514 = vmatpush1.msra.mxu0 0.0
    %515 = vmatprep.subr.mxu0 0.0
    %516 = vmatpush1.msra.mxu0 0.0
    %517 = vmatprep.subr.mxu0 0.0
    %518 = vmatpush1.msra.mxu0 0.0
    %519 = vmatprep.subr.mxu0 0.0
    %520 = vmatpush1.msra.mxu0 0.0
    %521 = vmatprep.subr.mxu0 0.0
    %522 = vmatpush1.msra.mxu0 0.0
    %523 = vmatprep.subr.mxu0 0.0
    %524 = vmatpush1.msra.mxu0 0.0
    %525 = vmatprep.subr.mxu0 0.0
    %526 = vmatpush1.msra.mxu0 0.0
    %527 = vmatprep.subr.mxu0 0.0
    %528 = vmatpush1.msra.mxu0 0.0
    %529 = vmatprep.subr.mxu0 0.0
    %530 = vmatpush1.msra.mxu0 0.0
    %531 = vmatprep.mubr.f32.mxu0 0.0
    %v532 = vand.u32 %v51, 4294901760
    %533 = vmatmul.mubr.f32.gmra.mrb[0].mxu0 %v532
    %v534 = vpop.f32.mrb[0].mxu0
    %v535 = vadd.f32 %v460, %v534
    %v536 = vpop.f32.mrb[0].mxu0
    %537 = vdwg.mxu0
    %v539 = vsel %vm49, %v31, 0
    %541 = vmatprep.subr.mxu0 0.0
    %v542 = vand.u32 %v45, 4294901760
    %543 = vmatpush1.msra.mxu0 %v542
    %544 = vmatprep.subr.mxu0 0.0
    %v545 = vand.u32 %v46, 4294901760
    %546 = vmatpush1.msra.mxu0 %v545
    %547 = vmatprep.subr.mxu0 0.0
    %v548 = vand.u32 %v47, 4294901760
    %549 = vmatpush1.msra.mxu0 %v548
    %550 = vmatprep.subr.mxu0 0.0
    %v551 = vand.u32 %v48, 4294901760
    %552 = vmatpush1.msra.mxu0 %v551
    %553 = vmatprep.subr.mxu0 0.0
    %554 = vmatpush1.msra.mxu0 0.0
    %555 = vmatprep.subr.mxu0 0.0
    %556 = vmatpush1.msra.mxu0 0.0
    %557 = vmatprep.subr.mxu0 0.0
    %558 = vmatpush1.msra.mxu0 0.0
    %559 = vmatprep.subr.mxu0 0.0
    %560 = vmatpush1.msra.mxu0 0.0
    %561 = vmatprep.subr.mxu0 0.0
    %562 = vmatpush1.msra.mxu0 0.0
    %563 = vmatprep.subr.mxu0 0.0
    %564 = vmatpush1.msra.mxu0 0.0
    %565 = vmatprep.subr.mxu0 0.0
    %566 = vmatpush1.msra.mxu0 0.0
    %567 = vmatprep.subr.mxu0 0.0
    %568 = vmatpush1.msra.mxu0 0.0
    %569 = vmatprep.subr.mxu0 0.0
    %570 = vmatpush1.msra.mxu0 0.0
    %571 = vmatprep.subr.mxu0 0.0
    %572 = vmatpush1.msra.mxu0 0.0
    %573 = vmatprep.subr.mxu0 0.0
    %574 = vmatpush1.msra.mxu0 0.0
    %575 = vmatprep.subr.mxu0 0.0
    %576 = vmatpush1.msra.mxu0 0.0
    %577 = vmatprep.subr.mxu0 0.0
    %578 = vmatpush1.msra.mxu0 0.0
    %579 = vmatprep.subr.mxu0 0.0
    %580 = vmatpush1.msra.mxu0 0.0
    %581 = vmatprep.subr.mxu0 0.0
    %582 = vmatpush1.msra.mxu0 0.0
    %583 = vmatprep.subr.mxu0 0.0
    %584 = vmatpush1.msra.mxu0 0.0
    %585 = vmatprep.subr.mxu0 0.0
    %586 = vmatpush1.msra.mxu0 0.0
    %587 = vmatprep.subr.mxu0 0.0
    %588 = vmatpush1.msra.mxu0 0.0
    %589 = vmatprep.subr.mxu0 0.0
    %590 = vmatpush1.msra.mxu0 0.0
    %591 = vmatprep.subr.mxu0 0.0
    %592 = vmatpush1.msra.mxu0 0.0
    %593 = vmatprep.subr.mxu0 0.0
    %594 = vmatpush1.msra.mxu0 0.0
    %595 = vmatprep.subr.mxu0 0.0
    %596 = vmatpush1.msra.mxu0 0.0
    %597 = vmatprep.subr.mxu0 0.0
    %598 = vmatpush1.msra.mxu0 0.0
    %599 = vmatprep.subr.mxu0 0.0
    %600 = vmatpush1.msra.mxu0 0.0
    %601 = vmatprep.subr.mxu0 0.0
    %602 = vmatpush1.msra.mxu0 0.0
    %603 = vmatprep.subr.mxu0 0.0
    %604 = vmatpush1.msra.mxu0 0.0
    %605 = vmatprep.subr.mxu0 0.0
    %606 = vmatpush1.msra.mxu0 0.0
    %607 = vmatprep.subr.mxu0 0.0
    %608 = vmatpush1.msra.mxu0 0.0
    %609 = vmatprep.mubr.f32.mxu0 0.0
    %v610 = vand.u32 %v539, 4294901760
    %v611 = vsub.f32 %v539, %v610
    %v612 = vand.u32 %v611, 4294901760
    %v613 = vsub.f32 %v611, %v612
    %v614 = vand.u32 %v613, 4294901760
    %615 = vmatmul.mubr.f32.gmra.mrb[0].mxu0 %v614
    %v616 = vpop.f32.mrb[0].mxu0
    %v617 = vadd.f32 0.0, %v616
    %v618 = vpop.f32.mrb[0].mxu0
    %619 = vdwg.mxu0
    %620 = vmatprep.subr.mxu0 0.0
    %v621 = vand.u32 %v45, 4294901760
    %v622 = vsub.f32 %v45, %v621
    %v623 = vand.u32 %v622, 4294901760
    %v624 = vsub.f32 %v622, %v623
    %v625 = vand.u32 %v624, 4294901760
    %626 = vmatpush1.msra.mxu0 %v625
    %627 = vmatprep.subr.mxu0 0.0
    %v628 = vand.u32 %v46, 4294901760
    %v629 = vsub.f32 %v46, %v628
    %v630 = vand.u32 %v629, 4294901760
    %v631 = vsub.f32 %v629, %v630
    %v632 = vand.u32 %v631, 4294901760
    %633 = vmatpush1.msra.mxu0 %v632
    %634 = vmatprep.subr.mxu0 0.0
    %v635 = vand.u32 %v47, 4294901760
    %v636 = vsub.f32 %v47, %v635
    %v637 = vand.u32 %v636, 4294901760
    %v638 = vsub.f32 %v636, %v637
    %v639 = vand.u32 %v638, 4294901760
    %640 = vmatpush1.msra.mxu0 %v639
    %641 = vmatprep.subr.mxu0 0.0
    %v642 = vand.u32 %v48, 4294901760
    %v643 = vsub.f32 %v48, %v642
    %v644 = vand.u32 %v643, 4294901760
    %v645 = vsub.f32 %v643, %v644
    %v646 = vand.u32 %v645, 4294901760
    %647 = vmatpush1.msra.mxu0 %v646
    %648 = vmatprep.subr.mxu0 0.0
    %649 = vmatpush1.msra.mxu0 0.0
    %650 = vmatprep.subr.mxu0 0.0
    %651 = vmatpush1.msra.mxu0 0.0
    %652 = vmatprep.subr.mxu0 0.0
    %653 = vmatpush1.msra.mxu0 0.0
    %654 = vmatprep.subr.mxu0 0.0
    %655 = vmatpush1.msra.mxu0 0.0
    %656 = vmatprep.subr.mxu0 0.0
    %657 = vmatpush1.msra.mxu0 0.0
    %658 = vmatprep.subr.mxu0 0.0
    %659 = vmatpush1.msra.mxu0 0.0
    %660 = vmatprep.subr.mxu0 0.0
    %661 = vmatpush1.msra.mxu0 0.0
    %662 = vmatprep.subr.mxu0 0.0
    %663 = vmatpush1.msra.mxu0 0.0
    %664 = vmatprep.subr.mxu0 0.0
    %665 = vmatpush1.msra.mxu0 0.0
    %666 = vmatprep.subr.mxu0 0.0
    %667 = vmatpush1.msra.mxu0 0.0
    %668 = vmatprep.subr.mxu0 0.0
    %669 = vmatpush1.msra.mxu0 0.0
    %670 = vmatprep.subr.mxu0 0.0
    %671 = vmatpush1.msra.mxu0 0.0
    %672 = vmatprep.subr.mxu0 0.0
    %673 = vmatpush1.msra.mxu0 0.0
    %674 = vmatprep.subr.mxu0 0.0
    %675 = vmatpush1.msra.mxu0 0.0
    %676 = vmatprep.subr.mxu0 0.0
    %677 = vmatpush1.msra.mxu0 0.0
    %678 = vmatprep.subr.mxu0 0.0
    %679 = vmatpush1.msra.mxu0 0.0
    %680 = vmatprep.subr.mxu0 0.0
    %681 = vmatpush1.msra.mxu0 0.0
    %682 = vmatprep.subr.mxu0 0.0
    %683 = vmatpush1.msra.mxu0 0.0
    %684 = vmatprep.subr.mxu0 0.0
    %685 = vmatpush1.msra.mxu0 0.0
    %686 = vmatprep.subr.mxu0 0.0
    %687 = vmatpush1.msra.mxu0 0.0
    %688 = vmatprep.subr.mxu0 0.0
    %689 = vmatpush1.msra.mxu0 0.0
    %690 = vmatprep.subr.mxu0 0.0
    %691 = vmatpush1.msra.mxu0 0.0
    %692 = vmatprep.subr.mxu0 0.0
    %693 = vmatpush1.msra.mxu0 0.0
    %694 = vmatprep.subr.mxu0 0.0
    %695 = vmatpush1.msra.mxu0 0.0
    %696 = vmatprep.subr.mxu0 0.0
    %697 = vmatpush1.msra.mxu0 0.0
    %698 = vmatprep.subr.mxu0 0.0
    %699 = vmatpush1.msra.mxu0 0.0
    %700 = vmatprep.subr.mxu0 0.0
    %701 = vmatpush1.msra.mxu0 0.0
    %702 = vmatprep.subr.mxu0 0.0
    %703 = vmatpush1.msra.mxu0 0.0
    %704 = vmatprep.mubr.f32.mxu0 0.0
    %v705 = vand.u32 %v539, 4294901760
    %706 = vmatmul.mubr.f32.gmra.mrb[0].mxu0 %v705
    %v707 = vpop.f32.mrb[0].mxu0
    %v708 = vadd.f32 %v617, %v707
    %v709 = vpop.f32.mrb[0].mxu0
    %710 = vdwg.mxu0
    %711 = vmatprep.subr.mxu0 0.0
    %v712 = vand.u32 %v45, 4294901760
    %v713 = vsub.f32 %v45, %v712
    %714 = vmatpush1.msra.mxu0 %v713
    %715 = vmatprep.subr.mxu0 0.0
    %v716 = vand.u32 %v46, 4294901760
    %v717 = vsub.f32 %v46, %v716
    %718 = vmatpush1.msra.mxu0 %v717
    %719 = vmatprep.subr.mxu0 0.0
    %v720 = vand.u32 %v47, 4294901760
    %v721 = vsub.f32 %v47, %v720
    %722 = vmatpush1.msra.mxu0 %v721
    %723 = vmatprep.subr.mxu0 0.0
    %v724 = vand.u32 %v48, 4294901760
    %v725 = vsub.f32 %v48, %v724
    %726 = vmatpush1.msra.mxu0 %v725
    %727 = vmatprep.subr.mxu0 0.0
    %728 = vmatpush1.msra.mxu0 0.0
    %729 = vmatprep.subr.mxu0 0.0
    %730 = vmatpush1.msra.mxu0 0.0
    %731 = vmatprep.subr.mxu0 0.0
    %732 = vmatpush1.msra.mxu0 0.0
    %733 = vmatprep.subr.mxu0 0.0
    %734 = vmatpush1.msra.mxu0 0.0
    %735 = vmatprep.subr.mxu0 0.0
    %736 = vmatpush1.msra.mxu0 0.0
    %737 = vmatprep.subr.mxu0 0.0
    %738 = vmatpush1.msra.mxu0 0.0
    %739 = vmatprep.subr.mxu0 0.0
    %740 = vmatpush1.msra.mxu0 0.0
    %741 = vmatprep.subr.mxu0 0.0
    %742 = vmatpush1.msra.mxu0 0.0
    %743 = vmatprep.subr.mxu0 0.0
    %744 = vmatpush1.msra.mxu0 0.0
    %745 = vmatprep.subr.mxu0 0.0
    %746 = vmatpush1.msra.mxu0 0.0
    %747 = vmatprep.subr.mxu0 0.0
    %748 = vmatpush1.msra.mxu0 0.0
    %749 = vmatprep.subr.mxu0 0.0
    %750 = vmatpush1.msra.mxu0 0.0
    %751 = vmatprep.subr.mxu0 0.0
    %752 = vmatpush1.msra.mxu0 0.0
    %753 = vmatprep.subr.mxu0 0.0
    %754 = vmatpush1.msra.mxu0 0.0
    %755 = vmatprep.subr.mxu0 0.0
    %756 = vmatpush1.msra.mxu0 0.0
    %757 = vmatprep.subr.mxu0 0.0
    %758 = vmatpush1.msra.mxu0 0.0
    %759 = vmatprep.subr.mxu0 0.0
    %760 = vmatpush1.msra.mxu0 0.0
    %761 = vmatprep.subr.mxu0 0.0
    %762 = vmatpush1.msra.mxu0 0.0
    %763 = vmatprep.subr.mxu0 0.0
    %764 = vmatpush1.msra.mxu0 0.0
    %765 = vmatprep.subr.mxu0 0.0
    %766 = vmatpush1.msra.mxu0 0.0
    %767 = vmatprep.subr.mxu0 0.0
    %768 = vmatpush1.msra.mxu0 0.0
    %769 = vmatprep.subr.mxu0 0.0
    %770 = vmatpush1.msra.mxu0 0.0
    %771 = vmatprep.subr.mxu0 0.0
    %772 = vmatpush1.msra.mxu0 0.0
    %773 = vmatprep.subr.mxu0 0.0
    %774 = vmatpush1.msra.mxu0 0.0
    %775 = vmatprep.subr.mxu0 0.0
    %776 = vmatpush1.msra.mxu0 0.0
    %777 = vmatprep.subr.mxu0 0.0
    %778 = vmatpush1.msra.mxu0 0.0
    %779 = vmatprep.subr.mxu0 0.0
    %780 = vmatpush1.msra.mxu0 0.0
    %781 = vmatprep.subr.mxu0 0.0
    %782 = vmatpush1.msra.mxu0 0.0
    %783 = vmatprep.mubr.f32.mxu0 0.0
    %v784 = vand.u32 %v539, 4294901760
    %v785 = vsub.f32 %v539, %v784
    %786 = vmatmul.mubr.f32.gmra.mrb[0].mxu0 %v785
    %v787 = vpop.f32.mrb[0].mxu0
    %v788 = vadd.f32 %v708, %v787
    %v789 = vpop.f32.mrb[0].mxu0
    %790 = vdwg.mxu0
    %791 = vmatprep.subr.mxu0 0.0
    %v792 = vand.u32 %v45, 4294901760
    %793 = vmatpush1.msra.mxu0 %v792
    %794 = vmatprep.subr.mxu0 0.0
    %v795 = vand.u32 %v46, 4294901760
    %796 = vmatpush1.msra.mxu0 %v795
    %797 = vmatprep.subr.mxu0 0.0
    %v798 = vand.u32 %v47, 4294901760
    %799 = vmatpush1.msra.mxu0 %v798
    %800 = vmatprep.subr.mxu0 0.0
    %v801 = vand.u32 %v48, 4294901760
    %802 = vmatpush1.msra.mxu0 %v801
    %803 = vmatprep.subr.mxu0 0.0
    %804 = vmatpush1.msra.mxu0 0.0
    %805 = vmatprep.subr.mxu0 0.0
    %806 = vmatpush1.msra.mxu0 0.0
    %807 = vmatprep.subr.mxu0 0.0
    %808 = vmatpush1.msra.mxu0 0.0
    %809 = vmatprep.subr.mxu0 0.0
    %810 = vmatpush1.msra.mxu0 0.0
    %811 = vmatprep.subr.mxu0 0.0
    %812 = vmatpush1.msra.mxu0 0.0
    %813 = vmatprep.subr.mxu0 0.0
    %814 = vmatpush1.msra.mxu0 0.0
    %815 = vmatprep.subr.mxu0 0.0
    %816 = vmatpush1.msra.mxu0 0.0
    %817 = vmatprep.subr.mxu0 0.0
    %818 = vmatpush1.msra.mxu0 0.0
    %819 = vmatprep.subr.mxu0 0.0
    %820 = vmatpush1.msra.mxu0 0.0
    %821 = vmatprep.subr.mxu0 0.0
    %822 = vmatpush1.msra.mxu0 0.0
    %823 = vmatprep.subr.mxu0 0.0
    %824 = vmatpush1.msra.mxu0 0.0
    %825 = vmatprep.subr.mxu0 0.0
    %826 = vmatpush1.msra.mxu0 0.0
    %827 = vmatprep.subr.mxu0 0.0
    %828 = vmatpush1.msra.mxu0 0.0
    %829 = vmatprep.subr.mxu0 0.0
    %830 = vmatpush1.msra.mxu0 0.0
    %831 = vmatprep.subr.mxu0 0.0
    %832 = vmatpush1.msra.mxu0 0.0
    %833 = vmatprep.subr.mxu0 0.0
    %834 = vmatpush1.msra.mxu0 0.0
    %835 = vmatprep.subr.mxu0 0.0
    %836 = vmatpush1.msra.mxu0 0.0
    %837 = vmatprep.subr.mxu0 0.0
    %838 = vmatpush1.msra.mxu0 0.0
    %839 = vmatprep.subr.mxu0 0.0
    %840 = vmatpush1.msra.mxu0 0.0
    %841 = vmatprep.subr.mxu0 0.0
    %842 = vmatpush1.msra.mxu0 0.0
    %843 = vmatprep.subr.mxu0 0.0
    %844 = vmatpush1.msra.mxu0 0.0
    %845 = vmatprep.subr.mxu0 0.0
    %846 = vmatpush1.msra.mxu0 0.0
    %847 = vmatprep.subr.mxu0 0.0
    %848 = vmatpush1.msra.mxu0 0.0
    %849 = vmatprep.subr.mxu0 0.0
    %850 = vmatpush1.msra.mxu0 0.0
    %851 = vmatprep.subr.mxu0 0.0
    %852 = vmatpush1.msra.mxu0 0.0
    %853 = vmatprep.subr.mxu0 0.0
    %854 = vmatpush1.msra.mxu0 0.0
    %855 = vmatprep.subr.mxu0 0.0
    %856 = vmatpush1.msra.mxu0 0.0
    %857 = vmatprep.subr.mxu0 0.0
    %858 = vmatpush1.msra.mxu0 0.0
    %859 = vmatprep.mubr.f32.mxu0 0.0
    %v860 = vand.u32 %v539, 4294901760
    %v861 = vsub.f32 %v539, %v860
    %v862 = vand.u32 %v861, 4294901760
    %863 = vmatmul.mubr.f32.gmra.mrb[0].mxu0 %v862
    %v864 = vpop.f32.mrb[0].mxu0
    %v865 = vadd.f32 %v788, %v864
    %v866 = vpop.f32.mrb[0].mxu0
    %867 = vdwg.mxu0
    %868 = vmatprep.subr.mxu0 0.0
    %v869 = vand.u32 %v45, 4294901760
    %v870 = vsub.f32 %v45, %v869
    %v871 = vand.u32 %v870, 4294901760
    %872 = vmatpush1.msra.mxu0 %v871
    %873 = vmatprep.subr.mxu0 0.0
    %v874 = vand.u32 %v46, 4294901760
    %v875 = vsub.f32 %v46, %v874
    %v876 = vand.u32 %v875, 4294901760
    %877 = vmatpush1.msra.mxu0 %v876
    %878 = vmatprep.subr.mxu0 0.0
    %v879 = vand.u32 %v47, 4294901760
    %v880 = vsub.f32 %v47, %v879
    %v881 = vand.u32 %v880, 4294901760
    %882 = vmatpush1.msra.mxu0 %v881
    %883 = vmatprep.subr.mxu0 0.0
    %v884 = vand.u32 %v48, 4294901760
    %v885 = vsub.f32 %v48, %v884
    %v886 = vand.u32 %v885, 4294901760
    %887 = vmatpush1.msra.mxu0 %v886
    %888 = vmatprep.subr.mxu0 0.0
    %889 = vmatpush1.msra.mxu0 0.0
    %890 = vmatprep.subr.mxu0 0.0
    %891 = vmatpush1.msra.mxu0 0.0
    %892 = vmatprep.subr.mxu0 0.0
    %893 = vmatpush1.msra.mxu0 0.0
    %894 = vmatprep.subr.mxu0 0.0
    %895 = vmatpush1.msra.mxu0 0.0
    %896 = vmatprep.subr.mxu0 0.0
    %897 = vmatpush1.msra.mxu0 0.0
    %898 = vmatprep.subr.mxu0 0.0
    %899 = vmatpush1.msra.mxu0 0.0
    %900 = vmatprep.subr.mxu0 0.0
    %901 = vmatpush1.msra.mxu0 0.0
    %902 = vmatprep.subr.mxu0 0.0
    %903 = vmatpush1.msra.mxu0 0.0
    %904 = vmatprep.subr.mxu0 0.0
    %905 = vmatpush1.msra.mxu0 0.0
    %906 = vmatprep.subr.mxu0 0.0
    %907 = vmatpush1.msra.mxu0 0.0
    %908 = vmatprep.subr.mxu0 0.0
    %909 = vmatpush1.msra.mxu0 0.0
    %910 = vmatprep.subr.mxu0 0.0
    %911 = vmatpush1.msra.mxu0 0.0
    %912 = vmatprep.subr.mxu0 0.0
    %913 = vmatpush1.msra.mxu0 0.0
    %914 = vmatprep.subr.mxu0 0.0
    %915 = vmatpush1.msra.mxu0 0.0
    %916 = vmatprep.subr.mxu0 0.0
    %917 = vmatpush1.msra.mxu0 0.0
    %918 = vmatprep.subr.mxu0 0.0
    %919 = vmatpush1.msra.mxu0 0.0
    %920 = vmatprep.subr.mxu0 0.0
    %921 = vmatpush1.msra.mxu0 0.0
    %922 = vmatprep.subr.mxu0 0.0
    %923 = vmatpush1.msra.mxu0 0.0
    %924 = vmatprep.subr.mxu0 0.0
    %925 = vmatpush1.msra.mxu0 0.0
    %926 = vmatprep.subr.mxu0 0.0
    %927 = vmatpush1.msra.mxu0 0.0
    %928 = vmatprep.subr.mxu0 0.0
    %929 = vmatpush1.msra.mxu0 0.0
    %930 = vmatprep.subr.mxu0 0.0
    %931 = vmatpush1.msra.mxu0 0.0
    %932 = vmatprep.subr.mxu0 0.0
    %933 = vmatpush1.msra.mxu0 0.0
    %934 = vmatprep.subr.mxu0 0.0
    %935 = vmatpush1.msra.mxu0 0.0
    %936 = vmatprep.subr.mxu0 0.0
    %937 = vmatpush1.msra.mxu0 0.0
    %938 = vmatprep.subr.mxu0 0.0
    %939 = vmatpush1.msra.mxu0 0.0
    %940 = vmatprep.subr.mxu0 0.0
    %941 = vmatpush1.msra.mxu0 0.0
    %942 = vmatprep.subr.mxu0 0.0
    %943 = vmatpush1.msra.mxu0 0.0
    %944 = vmatprep.mubr.f32.mxu0 0.0
    %v945 = vand.u32 %v539, 4294901760
    %946 = vmatmul.mubr.f32.gmra.mrb[0].mxu0 %v945
    %v947 = vpop.f32.mrb[0].mxu0
    %v948 = vadd.f32 %v865, %v947
    %v949 = vpop.f32.mrb[0].mxu0
    %950 = vdwg.mxu0
    %951 = vmatprep.subr.mxu0 0.0
    %v952 = vand.u32 %v45, 4294901760
    %953 = vmatpush1.msra.mxu0 %v952
    %954 = vmatprep.subr.mxu0 0.0
    %v955 = vand.u32 %v46, 4294901760
    %956 = vmatpush1.msra.mxu0 %v955
    %957 = vmatprep.subr.mxu0 0.0
    %v958 = vand.u32 %v47, 4294901760
    %959 = vmatpush1.msra.mxu0 %v958
    %960 = vmatprep.subr.mxu0 0.0
    %v961 = vand.u32 %v48, 4294901760
    %962 = vmatpush1.msra.mxu0 %v961
    %963 = vmatprep.subr.mxu0 0.0
    %964 = vmatpush1.msra.mxu0 0.0
    %965 = vmatprep.subr.mxu0 0.0
    %966 = vmatpush1.msra.mxu0 0.0
    %967 = vmatprep.subr.mxu0 0.0
    %968 = vmatpush1.msra.mxu0 0.0
    %969 = vmatprep.subr.mxu0 0.0
    %970 = vmatpush1.msra.mxu0 0.0
    %971 = vmatprep.subr.mxu0 0.0
    %972 = vmatpush1.msra.mxu0 0.0
    %973 = vmatprep.subr.mxu0 0.0
    %974 = vmatpush1.msra.mxu0 0.0
    %975 = vmatprep.subr.mxu0 0.0
    %976 = vmatpush1.msra.mxu0 0.0
    %977 = vmatprep.subr.mxu0 0.0
    %978 = vmatpush1.msra.mxu0 0.0
    %979 = vmatprep.subr.mxu0 0.0
    %980 = vmatpush1.msra.mxu0 0.0
    %981 = vmatprep.subr.mxu0 0.0
    %982 = vmatpush1.msra.mxu0 0.0
    %983 = vmatprep.subr.mxu0 0.0
    %984 = vmatpush1.msra.mxu0 0.0
    %985 = vmatprep.subr.mxu0 0.0
    %986 = vmatpush1.msra.mxu0 0.0
    %987 = vmatprep.subr.mxu0 0.0
    %988 = vmatpush1.msra.mxu0 0.0
    %989 = vmatprep.subr.mxu0 0.0
    %990 = vmatpush1.msra.mxu0 0.0
    %991 = vmatprep.subr.mxu0 0.0
    %992 = vmatpush1.msra.mxu0 0.0
    %993 = vmatprep.subr.mxu0 0.0
    %994 = vmatpush1.msra.mxu0 0.0
    %995 = vmatprep.subr.mxu0 0.0
    %996 = vmatpush1.msra.mxu0 0.0
    %997 = vmatprep.subr.mxu0 0.0
    %998 = vmatpush1.msra.mxu0 0.0
    %999 = vmatprep.subr.mxu0 0.0
    %1000 = vmatpush1.msra.mxu0 0.0
    %1001 = vmatprep.subr.mxu0 0.0
    %1002 = vmatpush1.msra.mxu0 0.0
    %1003 = vmatprep.subr.mxu0 0.0
    %1004 = vmatpush1.msra.mxu0 0.0
    %1005 = vmatprep.subr.mxu0 0.0
    %1006 = vmatpush1.msra.mxu0 0.0
    %1007 = vmatprep.subr.mxu0 0.0
    %1008 = vmatpush1.msra.mxu0 0.0
    %1009 = vmatprep.subr.mxu0 0.0
    %1010 = vmatpush1.msra.mxu0 0.0
    %1011 = vmatprep.subr.mxu0 0.0
    %1012 = vmatpush1.msra.mxu0 0.0
    %1013 = vmatprep.subr.mxu0 0.0
    %1014 = vmatpush1.msra.mxu0 0.0
    %1015 = vmatprep.subr.mxu0 0.0
    %1016 = vmatpush1.msra.mxu0 0.0
    %1017 = vmatprep.subr.mxu0 0.0
    %1018 = vmatpush1.msra.mxu0 0.0
    %1019 = vmatprep.mubr.f32.mxu0 0.0
    %v1020 = vand.u32 %v539, 4294901760
    %1021 = vmatmul.mubr.f32.gmra.mrb[0].mxu0 %v1020
    %v1022 = vpop.f32.mrb[0].mxu0
    %v1023 = vadd.f32 %v948, %v1022
    %v1024 = vpop.f32.mrb[0].mxu0
    %1025 = vdwg.mxu0
    %v1026 = vmul.f32 %v535, 0.17677669
    %v1027 = vmul.f32 %v1023, 0.17677669
    %v1028 = vsel %vm49, %v1026, -inf
    %1029 = vmax.xlane.f32.xlu0 %v1028
    %v1030 = vpop.xlane.xlu0 %1029
    %v1031 = vsel %vm49, %v1027, -inf
    %1032 = vmax.xlane.f32.xlu0 %v1031
    %v1033 = vpop.xlane.xlu0 %1032
    %v1034 = vsub.f32 %v1026, %v1030
    %v1035 = vsub.f32 %v1027, %v1033
    %v1036 = vmul.f32 %v1034, 1.442695
    %v1037 = vpow.pop %v1036
    %v1038 = vmul.f32 %v1035, 1.442695
    %v1039 = vpow.pop %v1038
    %v1040 = vlaneseq
    %v1041 = vshrl.u32 %v1040, 7
    %v1042 = vadd.s32 %v1041, 8
    %v1043 = vadd.s32 %v1041, 16
    %v1044 = vadd.s32 %v1041, 24
    %v1045 = vlaneseq
    %v1046 = vand.u32 %v1045, 127
    %v1047 = vshra.s32 %v1041, 3
    %v1048 = vshra.s32 %v1042, 3
    %v1049 = vshra.s32 %v1043, 3
    %v1050 = vshra.s32 %v1044, 3
    %v1051 = vshra.s32 %v1046, 3
    %vm1052 = vcmp.eq.s32.totalorder %v1047, %v1051
    %vm1053 = vcmp.eq.s32.totalorder %v1048, %v1051
    %vm1054 = vcmp.eq.s32.totalorder %v1049, %v1051
    %vm1055 = vcmp.eq.s32.totalorder %v1050, %v1051
    %v1056 = vsel %vm1052, 1, 0
    %v1057 = vsel %vm1053, 1, 0
    %v1058 = vsel %vm1054, 1, 0
    %v1059 = vsel %vm1055, 1, 0
    %v1060 = vcvt.s32.f32 %v1056
    %v1061 = vcvt.s32.f32 %v1057
    %v1062 = vcvt.s32.f32 %v1058
    %v1063 = vcvt.s32.f32 %v1059
    %v1065 = vsel %vm49, %v1037, 0
    %v1068 = vsel %vm49, %v1039, 0
    %1070 = vmatprep.subr.mxu0 0.0
    %v1071 = vand.u32 %v1060, 4294901760
    %1072 = vmatpush1.msra.mxu0 %v1071
    %1073 = vmatprep.subr.mxu0 0.0
    %v1074 = vand.u32 %v1061, 4294901760
    %1075 = vmatpush1.msra.mxu0 %v1074
    %1076 = vmatprep.subr.mxu0 0.0
    %v1077 = vand.u32 %v1062, 4294901760
    %1078 = vmatpush1.msra.mxu0 %v1077
    %1079 = vmatprep.subr.mxu0 0.0
    %v1080 = vand.u32 %v1063, 4294901760
    %1081 = vmatpush1.msra.mxu0 %v1080
    %1082 = vmatprep.subr.mxu0 0.0
    %1083 = vmatpush1.msra.mxu0 0.0
    %1084 = vmatprep.subr.mxu0 0.0
    %1085 = vmatpush1.msra.mxu0 0.0
    %1086 = vmatprep.subr.mxu0 0.0
    %1087 = vmatpush1.msra.mxu0 0.0
    %1088 = vmatprep.subr.mxu0 0.0
    %1089 = vmatpush1.msra.mxu0 0.0
    %1090 = vmatprep.subr.mxu0 0.0
    %1091 = vmatpush1.msra.mxu0 0.0
    %1092 = vmatprep.subr.mxu0 0.0
    %1093 = vmatpush1.msra.mxu0 0.0
    %1094 = vmatprep.subr.mxu0 0.0
    %1095 = vmatpush1.msra.mxu0 0.0
    %1096 = vmatprep.subr.mxu0 0.0
    %1097 = vmatpush1.msra.mxu0 0.0
    %1098 = vmatprep.subr.mxu0 0.0
    %1099 = vmatpush1.msra.mxu0 0.0
    %1100 = vmatprep.subr.mxu0 0.0
    %1101 = vmatpush1.msra.mxu0 0.0
    %1102 = vmatprep.subr.mxu0 0.0
    %1103 = vmatpush1.msra.mxu0 0.0
    %1104 = vmatprep.subr.mxu0 0.0
    %1105 = vmatpush1.msra.mxu0 0.0
    %1106 = vmatprep.subr.mxu0 0.0
    %1107 = vmatpush1.msra.mxu0 0.0
    %1108 = vmatprep.subr.mxu0 0.0
    %1109 = vmatpush1.msra.mxu0 0.0
    %1110 = vmatprep.subr.mxu0 0.0
    %1111 = vmatpush1.msra.mxu0 0.0
    %1112 = vmatprep.subr.mxu0 0.0
    %1113 = vmatpush1.msra.mxu0 0.0
    %1114 = vmatprep.subr.mxu0 0.0
    %1115 = vmatpush1.msra.mxu0 0.0
    %1116 = vmatprep.subr.mxu0 0.0
    %1117 = vmatpush1.msra.mxu0 0.0
    %1118 = vmatprep.subr.mxu0 0.0
    %1119 = vmatpush1.msra.mxu0 0.0
    %1120 = vmatprep.subr.mxu0 0.0
    %1121 = vmatpush1.msra.mxu0 0.0
    %1122 = vmatprep.subr.mxu0 0.0
    %1123 = vmatpush1.msra.mxu0 0.0
    %1124 = vmatprep.subr.mxu0 0.0
    %1125 = vmatpush1.msra.mxu0 0.0
    %1126 = vmatprep.subr.mxu0 0.0
    %1127 = vmatpush1.msra.mxu0 0.0
    %1128 = vmatprep.subr.mxu0 0.0
    %1129 = vmatpush1.msra.mxu0 0.0
    %1130 = vmatprep.subr.mxu0 0.0
    %1131 = vmatpush1.msra.mxu0 0.0
    %1132 = vmatprep.subr.mxu0 0.0
    %1133 = vmatpush1.msra.mxu0 0.0
    %1134 = vmatprep.subr.mxu0 0.0
    %1135 = vmatpush1.msra.mxu0 0.0
    %1136 = vmatprep.subr.mxu0 0.0
    %1137 = vmatpush1.msra.mxu0 0.0
    %1138 = vmatprep.mubr.f32.mxu0 0.0
    %v1139 = vand.u32 %v1065, 4294901760
    %v1140 = vsub.f32 %v1065, %v1139
    %v1141 = vand.u32 %v1140, 4294901760
    %v1142 = vsub.f32 %v1140, %v1141
    %v1143 = vand.u32 %v1142, 4294901760
    %1144 = vmatmul.mubr.f32.gmra.mrb[0].mxu0 %v1143
    %v1145 = vpop.f32.mrb[0].mxu0
    %v1146 = vadd.f32 0.0, %v1145
    %v1147 = vpop.f32.mrb[0].mxu0
    %1148 = vmatprep.mubr.f32.mxu0 0.0
    %v1149 = vand.u32 %v1068, 4294901760
    %v1150 = vsub.f32 %v1068, %v1149
    %v1151 = vand.u32 %v1150, 4294901760
    %v1152 = vsub.f32 %v1150, %v1151
    %v1153 = vand.u32 %v1152, 4294901760
    %1154 = vmatmul.mubr.f32.gmra.mrb[0].mxu0 %v1153
    %v1155 = vpop.f32.mrb[0].mxu0
    %v1156 = vadd.f32 0.0, %v1155
    %v1157 = vpop.f32.mrb[0].mxu0
    %1158 = vdwg.mxu0
    %1159 = vmatprep.subr.mxu0 0.0
    %v1160 = vand.u32 %v1060, 4294901760
    %v1161 = vsub.f32 %v1060, %v1160
    %v1162 = vand.u32 %v1161, 4294901760
    %v1163 = vsub.f32 %v1161, %v1162
    %v1164 = vand.u32 %v1163, 4294901760
    %1165 = vmatpush1.msra.mxu0 %v1164
    %1166 = vmatprep.subr.mxu0 0.0
    %v1167 = vand.u32 %v1061, 4294901760
    %v1168 = vsub.f32 %v1061, %v1167
    %v1169 = vand.u32 %v1168, 4294901760
    %v1170 = vsub.f32 %v1168, %v1169
    %v1171 = vand.u32 %v1170, 4294901760
    %1172 = vmatpush1.msra.mxu0 %v1171
    %1173 = vmatprep.subr.mxu0 0.0
    %v1174 = vand.u32 %v1062, 4294901760
    %v1175 = vsub.f32 %v1062, %v1174
    %v1176 = vand.u32 %v1175, 4294901760
    %v1177 = vsub.f32 %v1175, %v1176
    %v1178 = vand.u32 %v1177, 4294901760
    %1179 = vmatpush1.msra.mxu0 %v1178
    %1180 = vmatprep.subr.mxu0 0.0
    %v1181 = vand.u32 %v1063, 4294901760
    %v1182 = vsub.f32 %v1063, %v1181
    %v1183 = vand.u32 %v1182, 4294901760
    %v1184 = vsub.f32 %v1182, %v1183
    %v1185 = vand.u32 %v1184, 4294901760
    %1186 = vmatpush1.msra.mxu0 %v1185
    %1187 = vmatprep.subr.mxu0 0.0
    %1188 = vmatpush1.msra.mxu0 0.0
    %1189 = vmatprep.subr.mxu0 0.0
    %1190 = vmatpush1.msra.mxu0 0.0
    %1191 = vmatprep.subr.mxu0 0.0
    %1192 = vmatpush1.msra.mxu0 0.0
    %1193 = vmatprep.subr.mxu0 0.0
    %1194 = vmatpush1.msra.mxu0 0.0
    %1195 = vmatprep.subr.mxu0 0.0
    %1196 = vmatpush1.msra.mxu0 0.0
    %1197 = vmatprep.subr.mxu0 0.0
    %1198 = vmatpush1.msra.mxu0 0.0
    %1199 = vmatprep.subr.mxu0 0.0
    %1200 = vmatpush1.msra.mxu0 0.0
    %1201 = vmatprep.subr.mxu0 0.0
    %1202 = vmatpush1.msra.mxu0 0.0
    %1203 = vmatprep.subr.mxu0 0.0
    %1204 = vmatpush1.msra.mxu0 0.0
    %1205 = vmatprep.subr.mxu0 0.0
    %1206 = vmatpush1.msra.mxu0 0.0
    %1207 = vmatprep.subr.mxu0 0.0
    %1208 = vmatpush1.msra.mxu0 0.0
    %1209 = vmatprep.subr.mxu0 0.0
    %1210 = vmatpush1.msra.mxu0 0.0
    %1211 = vmatprep.subr.mxu0 0.0
    %1212 = vmatpush1.msra.mxu0 0.0
    %1213 = vmatprep.subr.mxu0 0.0
    %1214 = vmatpush1.msra.mxu0 0.0
    %1215 = vmatprep.subr.mxu0 0.0
    %1216 = vmatpush1.msra.mxu0 0.0
    %1217 = vmatprep.subr.mxu0 0.0
    %1218 = vmatpush1.msra.mxu0 0.0
    %1219 = vmatprep.subr.mxu0 0.0
    %1220 = vmatpush1.msra.mxu0 0.0
    %1221 = vmatprep.subr.mxu0 0.0
    %1222 = vmatpush1.msra.mxu0 0.0
    %1223 = vmatprep.subr.mxu0 0.0
    %1224 = vmatpush1.msra.mxu0 0.0
    %1225 = vmatprep.subr.mxu0 0.0
    %1226 = vmatpush1.msra.mxu0 0.0
    %1227 = vmatprep.subr.mxu0 0.0
    %1228 = vmatpush1.msra.mxu0 0.0
    %1229 = vmatprep.subr.mxu0 0.0
    %1230 = vmatpush1.msra.mxu0 0.0
    %1231 = vmatprep.subr.mxu0 0.0
    %1232 = vmatpush1.msra.mxu0 0.0
    %1233 = vmatprep.subr.mxu0 0.0
    %1234 = vmatpush1.msra.mxu0 0.0
    %1235 = vmatprep.subr.mxu0 0.0
    %1236 = vmatpush1.msra.mxu0 0.0
    %1237 = vmatprep.subr.mxu0 0.0
    %1238 = vmatpush1.msra.mxu0 0.0
    %1239 = vmatprep.subr.mxu0 0.0
    %1240 = vmatpush1.msra.mxu0 0.0
    %1241 = vmatprep.subr.mxu0 0.0
    %1242 = vmatpush1.msra.mxu0 0.0
    %1243 = vmatprep.mubr.f32.mxu0 0.0
    %v1244 = vand.u32 %v1065, 4294901760
    %1245 = vmatmul.mubr.f32.gmra.mrb[0].mxu0 %v1244
    %v1246 = vpop.f32.mrb[0].mxu0
    %v1247 = vadd.f32 %v1146, %v1246
    %v1248 = vpop.f32.mrb[0].mxu0
    %1249 = vmatprep.mubr.f32.mxu0 0.0
    %v1250 = vand.u32 %v1068, 4294901760
    %1251 = vmatmul.mubr.f32.gmra.mrb[0].mxu0 %v1250
    %v1252 = vpop.f32.mrb[0].mxu0
    %v1253 = vadd.f32 %v1156, %v1252
    %v1254 = vpop.f32.mrb[0].mxu0
    %1255 = vdwg.mxu0
    %1256 = vmatprep.subr.mxu0 0.0
    %v1257 = vand.u32 %v1060, 4294901760
    %v1258 = vsub.f32 %v1060, %v1257
    %1259 = vmatpush1.msra.mxu0 %v1258
    %1260 = vmatprep.subr.mxu0 0.0
    %v1261 = vand.u32 %v1061, 4294901760
    %v1262 = vsub.f32 %v1061, %v1261
    %1263 = vmatpush1.msra.mxu0 %v1262
    %1264 = vmatprep.subr.mxu0 0.0
    %v1265 = vand.u32 %v1062, 4294901760
    %v1266 = vsub.f32 %v1062, %v1265
    %1267 = vmatpush1.msra.mxu0 %v1266
    %1268 = vmatprep.subr.mxu0 0.0
    %v1269 = vand.u32 %v1063, 4294901760
    %v1270 = vsub.f32 %v1063, %v1269
    %1271 = vmatpush1.msra.mxu0 %v1270
    %1272 = vmatprep.subr.mxu0 0.0
    %1273 = vmatpush1.msra.mxu0 0.0
    %1274 = vmatprep.subr.mxu0 0.0
    %1275 = vmatpush1.msra.mxu0 0.0
    %1276 = vmatprep.subr.mxu0 0.0
    %1277 = vmatpush1.msra.mxu0 0.0
    %1278 = vmatprep.subr.mxu0 0.0
    %1279 = vmatpush1.msra.mxu0 0.0
    %1280 = vmatprep.subr.mxu0 0.0
    %1281 = vmatpush1.msra.mxu0 0.0
    %1282 = vmatprep.subr.mxu0 0.0
    %1283 = vmatpush1.msra.mxu0 0.0
    %1284 = vmatprep.subr.mxu0 0.0
    %1285 = vmatpush1.msra.mxu0 0.0
    %1286 = vmatprep.subr.mxu0 0.0
    %1287 = vmatpush1.msra.mxu0 0.0
    %1288 = vmatprep.subr.mxu0 0.0
    %1289 = vmatpush1.msra.mxu0 0.0
    %1290 = vmatprep.subr.mxu0 0.0
    %1291 = vmatpush1.msra.mxu0 0.0
    %1292 = vmatprep.subr.mxu0 0.0
    %1293 = vmatpush1.msra.mxu0 0.0
    %1294 = vmatprep.subr.mxu0 0.0
    %1295 = vmatpush1.msra.mxu0 0.0
    %1296 = vmatprep.subr.mxu0 0.0
    %1297 = vmatpush1.msra.mxu0 0.0
    %1298 = vmatprep.subr.mxu0 0.0
    %1299 = vmatpush1.msra.mxu0 0.0
    %1300 = vmatprep.subr.mxu0 0.0
    %1301 = vmatpush1.msra.mxu0 0.0
    %1302 = vmatprep.subr.mxu0 0.0
    %1303 = vmatpush1.msra.mxu0 0.0
    %1304 = vmatprep.subr.mxu0 0.0
    %1305 = vmatpush1.msra.mxu0 0.0
    %1306 = vmatprep.subr.mxu0 0.0
    %1307 = vmatpush1.msra.mxu0 0.0
    %1308 = vmatprep.subr.mxu0 0.0
    %1309 = vmatpush1.msra.mxu0 0.0
    %1310 = vmatprep.subr.mxu0 0.0
    %1311 = vmatpush1.msra.mxu0 0.0
    %1312 = vmatprep.subr.mxu0 0.0
    %1313 = vmatpush1.msra.mxu0 0.0
    %1314 = vmatprep.subr.mxu0 0.0
    %1315 = vmatpush1.msra.mxu0 0.0
    %1316 = vmatprep.subr.mxu0 0.0
    %1317 = vmatpush1.msra.mxu0 0.0
    %1318 = vmatprep.subr.mxu0 0.0
    %1319 = vmatpush1.msra.mxu0 0.0
    %1320 = vmatprep.subr.mxu0 0.0
    %1321 = vmatpush1.msra.mxu0 0.0
    %1322 = vmatprep.subr.mxu0 0.0
    %1323 = vmatpush1.msra.mxu0 0.0
    %1324 = vmatprep.subr.mxu0 0.0
    %1325 = vmatpush1.msra.mxu0 0.0
    %1326 = vmatprep.subr.mxu0 0.0
    %1327 = vmatpush1.msra.mxu0 0.0
    %1328 = vmatprep.mubr.f32.mxu0 0.0
    %v1329 = vand.u32 %v1065, 4294901760
    %v1330 = vsub.f32 %v1065, %v1329
    %1331 = vmatmul.mubr.f32.gmra.mrb[0].mxu0 %v1330
    %v1332 = vpop.f32.mrb[0].mxu0
    %v1333 = vadd.f32 %v1247, %v1332
    %v1334 = vpop.f32.mrb[0].mxu0
    %1335 = vmatprep.mubr.f32.mxu0 0.0
    %v1336 = vand.u32 %v1068, 4294901760
    %v1337 = vsub.f32 %v1068, %v1336
    %1338 = vmatmul.mubr.f32.gmra.mrb[0].mxu0 %v1337
    %v1339 = vpop.f32.mrb[0].mxu0
    %v1340 = vadd.f32 %v1253, %v1339
    %v1341 = vpop.f32.mrb[0].mxu0
    %1342 = vdwg.mxu0
    %1343 = vmatprep.subr.mxu0 0.0
    %v1344 = vand.u32 %v1060, 4294901760
    %1345 = vmatpush1.msra.mxu0 %v1344
    %1346 = vmatprep.subr.mxu0 0.0
    %v1347 = vand.u32 %v1061, 4294901760
    %1348 = vmatpush1.msra.mxu0 %v1347
    %1349 = vmatprep.subr.mxu0 0.0
    %v1350 = vand.u32 %v1062, 4294901760
    %1351 = vmatpush1.msra.mxu0 %v1350
    %1352 = vmatprep.subr.mxu0 0.0
    %v1353 = vand.u32 %v1063, 4294901760
    %1354 = vmatpush1.msra.mxu0 %v1353
    %1355 = vmatprep.subr.mxu0 0.0
    %1356 = vmatpush1.msra.mxu0 0.0
    %1357 = vmatprep.subr.mxu0 0.0
    %1358 = vmatpush1.msra.mxu0 0.0
    %1359 = vmatprep.subr.mxu0 0.0
    %1360 = vmatpush1.msra.mxu0 0.0
    %1361 = vmatprep.subr.mxu0 0.0
    %1362 = vmatpush1.msra.mxu0 0.0
    %1363 = vmatprep.subr.mxu0 0.0
    %1364 = vmatpush1.msra.mxu0 0.0
    %1365 = vmatprep.subr.mxu0 0.0
    %1366 = vmatpush1.msra.mxu0 0.0
    %1367 = vmatprep.subr.mxu0 0.0
    %1368 = vmatpush1.msra.mxu0 0.0
    %1369 = vmatprep.subr.mxu0 0.0
    %1370 = vmatpush1.msra.mxu0 0.0
    %1371 = vmatprep.subr.mxu0 0.0
    %1372 = vmatpush1.msra.mxu0 0.0
    %1373 = vmatprep.subr.mxu0 0.0
    %1374 = vmatpush1.msra.mxu0 0.0
    %1375 = vmatprep.subr.mxu0 0.0
    %1376 = vmatpush1.msra.mxu0 0.0
    %1377 = vmatprep.subr.mxu0 0.0
    %1378 = vmatpush1.msra.mxu0 0.0
    %1379 = vmatprep.subr.mxu0 0.0
    %1380 = vmatpush1.msra.mxu0 0.0
    %1381 = vmatprep.subr.mxu0 0.0
    %1382 = vmatpush1.msra.mxu0 0.0
    %1383 = vmatprep.subr.mxu0 0.0
    %1384 = vmatpush1.msra.mxu0 0.0
    %1385 = vmatprep.subr.mxu0 0.0
    %1386 = vmatpush1.msra.mxu0 0.0
    %1387 = vmatprep.subr.mxu0 0.0
    %1388 = vmatpush1.msra.mxu0 0.0
    %1389 = vmatprep.subr.mxu0 0.0
    %1390 = vmatpush1.msra.mxu0 0.0
    %1391 = vmatprep.subr.mxu0 0.0
    %1392 = vmatpush1.msra.mxu0 0.0
    %1393 = vmatprep.subr.mxu0 0.0
    %1394 = vmatpush1.msra.mxu0 0.0
    %1395 = vmatprep.subr.mxu0 0.0
    %1396 = vmatpush1.msra.mxu0 0.0
    %1397 = vmatprep.subr.mxu0 0.0
    %1398 = vmatpush1.msra.mxu0 0.0
    %1399 = vmatprep.subr.mxu0 0.0
    %1400 = vmatpush1.msra.mxu0 0.0
    %1401 = vmatprep.subr.mxu0 0.0
    %1402 = vmatpush1.msra.mxu0 0.0
    %1403 = vmatprep.subr.mxu0 0.0
    %1404 = vmatpush1.msra.mxu0 0.0
    %1405 = vmatprep.subr.mxu0 0.0
    %1406 = vmatpush1.msra.mxu0 0.0
    %1407 = vmatprep.subr.mxu0 0.0
    %1408 = vmatpush1.msra.mxu0 0.0
    %1409 = vmatprep.subr.mxu0 0.0
    %1410 = vmatpush1.msra.mxu0 0.0
    %1411 = vmatprep.mubr.f32.mxu0 0.0
    %v1412 = vand.u32 %v1065, 4294901760
    %v1413 = vsub.f32 %v1065, %v1412
    %v1414 = vand.u32 %v1413, 4294901760
    %1415 = vmatmul.mubr.f32.gmra.mrb[0].mxu0 %v1414
    %v1416 = vpop.f32.mrb[0].mxu0
    %v1417 = vadd.f32 %v1333, %v1416
    %v1418 = vpop.f32.mrb[0].mxu0
    %1419 = vmatprep.mubr.f32.mxu0 0.0
    %v1420 = vand.u32 %v1068, 4294901760
    %v1421 = vsub.f32 %v1068, %v1420
    %v1422 = vand.u32 %v1421, 4294901760
    %1423 = vmatmul.mubr.f32.gmra.mrb[0].mxu0 %v1422
    %v1424 = vpop.f32.mrb[0].mxu0
    %v1425 = vadd.f32 %v1340, %v1424
    %v1426 = vpop.f32.mrb[0].mxu0
    %1427 = vdwg.mxu0
    %1428 = vmatprep.subr.mxu0 0.0
    %v1429 = vand.u32 %v1060, 4294901760
    %v1430 = vsub.f32 %v1060, %v1429
    %v1431 = vand.u32 %v1430, 4294901760
    %1432 = vmatpush1.msra.mxu0 %v1431
    %1433 = vmatprep.subr.mxu0 0.0
    %v1434 = vand.u32 %v1061, 4294901760
    %v1435 = vsub.f32 %v1061, %v1434
    %v1436 = vand.u32 %v1435, 4294901760
    %1437 = vmatpush1.msra.mxu0 %v1436
    %1438 = vmatprep.subr.mxu0 0.0
    %v1439 = vand.u32 %v1062, 4294901760
    %v1440 = vsub.f32 %v1062, %v1439
    %v1441 = vand.u32 %v1440, 4294901760
    %1442 = vmatpush1.msra.mxu0 %v1441
    %1443 = vmatprep.subr.mxu0 0.0
    %v1444 = vand.u32 %v1063, 4294901760
    %v1445 = vsub.f32 %v1063, %v1444
    %v1446 = vand.u32 %v1445, 4294901760
    %1447 = vmatpush1.msra.mxu0 %v1446
    %1448 = vmatprep.subr.mxu0 0.0
    %1449 = vmatpush1.msra.mxu0 0.0
    %1450 = vmatprep.subr.mxu0 0.0
    %1451 = vmatpush1.msra.mxu0 0.0
    %1452 = vmatprep.subr.mxu0 0.0
    %1453 = vmatpush1.msra.mxu0 0.0
    %1454 = vmatprep.subr.mxu0 0.0
    %1455 = vmatpush1.msra.mxu0 0.0
    %1456 = vmatprep.subr.mxu0 0.0
    %1457 = vmatpush1.msra.mxu0 0.0
    %1458 = vmatprep.subr.mxu0 0.0
    %1459 = vmatpush1.msra.mxu0 0.0
    %1460 = vmatprep.subr.mxu0 0.0
    %1461 = vmatpush1.msra.mxu0 0.0
    %1462 = vmatprep.subr.mxu0 0.0
    %1463 = vmatpush1.msra.mxu0 0.0
    %1464 = vmatprep.subr.mxu0 0.0
    %1465 = vmatpush1.msra.mxu0 0.0
    %1466 = vmatprep.subr.mxu0 0.0
    %1467 = vmatpush1.msra.mxu0 0.0
    %1468 = vmatprep.subr.mxu0 0.0
    %1469 = vmatpush1.msra.mxu0 0.0
    %1470 = vmatprep.subr.mxu0 0.0
    %1471 = vmatpush1.msra.mxu0 0.0
    %1472 = vmatprep.subr.mxu0 0.0
    %1473 = vmatpush1.msra.mxu0 0.0
    %1474 = vmatprep.subr.mxu0 0.0
    %1475 = vmatpush1.msra.mxu0 0.0
    %1476 = vmatprep.subr.mxu0 0.0
    %1477 = vmatpush1.msra.mxu0 0.0
    %1478 = vmatprep.subr.mxu0 0.0
    %1479 = vmatpush1.msra.mxu0 0.0
    %1480 = vmatprep.subr.mxu0 0.0
    %1481 = vmatpush1.msra.mxu0 0.0
    %1482 = vmatprep.subr.mxu0 0.0
    %1483 = vmatpush1.msra.mxu0 0.0
    %1484 = vmatprep.subr.mxu0 0.0
    %1485 = vmatpush1.msra.mxu0 0.0
    %1486 = vmatprep.subr.mxu0 0.0
    %1487 = vmatpush1.msra.mxu0 0.0
    %1488 = vmatprep.subr.mxu0 0.0
    %1489 = vmatpush1.msra.mxu0 0.0
    %1490 = vmatprep.subr.mxu0 0.0
    %1491 = vmatpush1.msra.mxu0 0.0
    %1492 = vmatprep.subr.mxu0 0.0
    %1493 = vmatpush1.msra.mxu0 0.0
    %1494 = vmatprep.subr.mxu0 0.0
    %1495 = vmatpush1.msra.mxu0 0.0
    %1496 = vmatprep.subr.mxu0 0.0
    %1497 = vmatpush1.msra.mxu0 0.0
    %1498 = vmatprep.subr.mxu0 0.0
    %1499 = vmatpush1.msra.mxu0 0.0
    %1500 = vmatprep.subr.mxu0 0.0
    %1501 = vmatpush1.msra.mxu0 0.0
    %1502 = vmatprep.subr.mxu0 0.0
    %1503 = vmatpush1.msra.mxu0 0.0
    %1504 = vmatprep.mubr.f32.mxu0 0.0
    %v1505 = vand.u32 %v1065, 4294901760
    %1506 = vmatmul.mubr.f32.gmra.mrb[0].mxu0 %v1505
    %v1507 = vpop.f32.mrb[0].mxu0
    %v1508 = vadd.f32 %v1417, %v1507
    %v1509 = vpop.f32.mrb[0].mxu0
    %1510 = vmatprep.mubr.f32.mxu0 0.0
    %v1511 = vand.u32 %v1068, 4294901760
    %1512 = vmatmul.mubr.f32.gmra.mrb[0].mxu0 %v1511
    %v1513 = vpop.f32.mrb[0].mxu0
    %v1514 = vadd.f32 %v1425, %v1513
    %v1515 = vpop.f32.mrb[0].mxu0
    %1516 = vdwg.mxu0
    %1517 = vmatprep.subr.mxu0 0.0
    %v1518 = vand.u32 %v1060, 4294901760
    %1519 = vmatpush1.msra.mxu0 %v1518
    %1520 = vmatprep.subr.mxu0 0.0
    %v1521 = vand.u32 %v1061, 4294901760
    %1522 = vmatpush1.msra.mxu0 %v1521
    %1523 = vmatprep.subr.mxu0 0.0
    %v1524 = vand.u32 %v1062, 4294901760
    %1525 = vmatpush1.msra.mxu0 %v1524
    %1526 = vmatprep.subr.mxu0 0.0
    %v1527 = vand.u32 %v1063, 4294901760
    %1528 = vmatpush1.msra.mxu0 %v1527
    %1529 = vmatprep.subr.mxu0 0.0
    %1530 = vmatpush1.msra.mxu0 0.0
    %1531 = vmatprep.subr.mxu0 0.0
    %1532 = vmatpush1.msra.mxu0 0.0
    %1533 = vmatprep.subr.mxu0 0.0
    %1534 = vmatpush1.msra.mxu0 0.0
    %1535 = vmatprep.subr.mxu0 0.0
    %1536 = vmatpush1.msra.mxu0 0.0
    %1537 = vmatprep.subr.mxu0 0.0
    %1538 = vmatpush1.msra.mxu0 0.0
    %1539 = vmatprep.subr.mxu0 0.0
    %1540 = vmatpush1.msra.mxu0 0.0
    %1541 = vmatprep.subr.mxu0 0.0
    %1542 = vmatpush1.msra.mxu0 0.0
    %1543 = vmatprep.subr.mxu0 0.0
    %1544 = vmatpush1.msra.mxu0 0.0
    %1545 = vmatprep.subr.mxu0 0.0
    %1546 = vmatpush1.msra.mxu0 0.0
    %1547 = vmatprep.subr.mxu0 0.0
    %1548 = vmatpush1.msra.mxu0 0.0
    %1549 = vmatprep.subr.mxu0 0.0
    %1550 = vmatpush1.msra.mxu0 0.0
    %1551 = vmatprep.subr.mxu0 0.0
    %1552 = vmatpush1.msra.mxu0 0.0
    %1553 = vmatprep.subr.mxu0 0.0
    %1554 = vmatpush1.msra.mxu0 0.0
    %1555 = vmatprep.subr.mxu0 0.0
    %1556 = vmatpush1.msra.mxu0 0.0
    %1557 = vmatprep.subr.mxu0 0.0
    %1558 = vmatpush1.msra.mxu0 0.0
    %1559 = vmatprep.subr.mxu0 0.0
    %1560 = vmatpush1.msra.mxu0 0.0
    %1561 = vmatprep.subr.mxu0 0.0
    %1562 = vmatpush1.msra.mxu0 0.0
    %1563 = vmatprep.subr.mxu0 0.0
    %1564 = vmatpush1.msra.mxu0 0.0
    %1565 = vmatprep.subr.mxu0 0.0
    %1566 = vmatpush1.msra.mxu0 0.0
    %1567 = vmatprep.subr.mxu0 0.0
    %1568 = vmatpush1.msra.mxu0 0.0
    %1569 = vmatprep.subr.mxu0 0.0
    %1570 = vmatpush1.msra.mxu0 0.0
    %1571 = vmatprep.subr.mxu0 0.0
    %1572 = vmatpush1.msra.mxu0 0.0
    %1573 = vmatprep.subr.mxu0 0.0
    %1574 = vmatpush1.msra.mxu0 0.0
    %1575 = vmatprep.subr.mxu0 0.0
    %1576 = vmatpush1.msra.mxu0 0.0
    %1577 = vmatprep.subr.mxu0 0.0
    %1578 = vmatpush1.msra.mxu0 0.0
    %1579 = vmatprep.subr.mxu0 0.0
    %1580 = vmatpush1.msra.mxu0 0.0
    %1581 = vmatprep.subr.mxu0 0.0
    %1582 = vmatpush1.msra.mxu0 0.0
    %1583 = vmatprep.subr.mxu0 0.0
    %1584 = vmatpush1.msra.mxu0 0.0
    %1585 = vmatprep.mubr.f32.mxu0 0.0
    %v1586 = vand.u32 %v1065, 4294901760
    %1587 = vmatmul.mubr.f32.gmra.mrb[0].mxu0 %v1586
    %v1588 = vpop.f32.mrb[0].mxu0
    %v1589 = vadd.f32 %v1508, %v1588
    %v1590 = vpop.f32.mrb[0].mxu0
    %1591 = vmatprep.mubr.f32.mxu0 0.0
    %v1592 = vand.u32 %v1068, 4294901760
    %1593 = vmatmul.mubr.f32.gmra.mrb[0].mxu0 %v1592
    %v1594 = vpop.f32.mrb[0].mxu0
    %v1595 = vadd.f32 %v1514, %v1594
    %v1596 = vpop.f32.mrb[0].mxu0
    %1597 = vdwg.mxu0
    %v1598 = vrcp.pop %v1589
    %v1599 = vmul.f32 %v1037, %v1598
    %v1600 = vrcp.pop %v1595
    %v1601 = vmul.f32 %v1039, %v1600
    %v1602 = vld [vmem:[%s2] sm:$0xff]
    %v1603 = vld [vmem:[%s2 + $0x8] sm:$0xff]
    %v1604 = vld [vmem:[%s2 + $0x10] sm:$0xff]
    %v1605 = vld [vmem:[%s2 + $0x18] sm:$0xff]
    %v1606 = vld [vmem:[%s2 + $0x20] sm:$0xff]
    %v1607 = vld [vmem:[%s2 + $0x28] sm:$0xff]
    %v1608 = vld [vmem:[%s2 + $0x30] sm:$0xff]
    %v1609 = vld [vmem:[%s2 + $0x38] sm:$0xff]
    %v1611 = vsel %vm49, %v1599, 0
    %1613 = vmatprep.subr.mxu0 0.0
    %v1614 = vand.u32 %v1602, 4294901760
    %1615 = vmatpush1.msra.mxu0 %v1614
    %1616 = vmatprep.subr.mxu0 0.0
    %v1617 = vand.u32 %v1603, 4294901760
    %1618 = vmatpush1.msra.mxu0 %v1617
    %1619 = vmatprep.subr.mxu0 0.0
    %v1620 = vand.u32 %v1604, 4294901760
    %1621 = vmatpush1.msra.mxu0 %v1620
    %1622 = vmatprep.subr.mxu0 0.0
    %v1623 = vand.u32 %v1605, 4294901760
    %1624 = vmatpush1.msra.mxu0 %v1623
    %1625 = vmatprep.subr.mxu0 0.0
    %1626 = vmatpush1.msra.mxu0 0.0
    %1627 = vmatprep.subr.mxu0 0.0
    %1628 = vmatpush1.msra.mxu0 0.0
    %1629 = vmatprep.subr.mxu0 0.0
    %1630 = vmatpush1.msra.mxu0 0.0
    %1631 = vmatprep.subr.mxu0 0.0
    %1632 = vmatpush1.msra.mxu0 0.0
    %1633 = vmatprep.subr.mxu0 0.0
    %1634 = vmatpush1.msra.mxu0 0.0
    %1635 = vmatprep.subr.mxu0 0.0
    %1636 = vmatpush1.msra.mxu0 0.0
    %1637 = vmatprep.subr.mxu0 0.0
    %1638 = vmatpush1.msra.mxu0 0.0
    %1639 = vmatprep.subr.mxu0 0.0
    %1640 = vmatpush1.msra.mxu0 0.0
    %1641 = vmatprep.subr.mxu0 0.0
    %1642 = vmatpush1.msra.mxu0 0.0
    %1643 = vmatprep.subr.mxu0 0.0
    %1644 = vmatpush1.msra.mxu0 0.0
    %1645 = vmatprep.subr.mxu0 0.0
    %1646 = vmatpush1.msra.mxu0 0.0
    %1647 = vmatprep.subr.mxu0 0.0
    %1648 = vmatpush1.msra.mxu0 0.0
    %1649 = vmatprep.subr.mxu0 0.0
    %1650 = vmatpush1.msra.mxu0 0.0
    %1651 = vmatprep.subr.mxu0 0.0
    %1652 = vmatpush1.msra.mxu0 0.0
    %1653 = vmatprep.subr.mxu0 0.0
    %1654 = vmatpush1.msra.mxu0 0.0
    %1655 = vmatprep.subr.mxu0 0.0
    %1656 = vmatpush1.msra.mxu0 0.0
    %1657 = vmatprep.subr.mxu0 0.0
    %1658 = vmatpush1.msra.mxu0 0.0
    %1659 = vmatprep.subr.mxu0 0.0
    %1660 = vmatpush1.msra.mxu0 0.0
    %1661 = vmatprep.subr.mxu0 0.0
    %1662 = vmatpush1.msra.mxu0 0.0
    %1663 = vmatprep.subr.mxu0 0.0
    %1664 = vmatpush1.msra.mxu0 0.0
    %1665 = vmatprep.subr.mxu0 0.0
    %1666 = vmatpush1.msra.mxu0 0.0
    %1667 = vmatprep.subr.mxu0 0.0
    %1668 = vmatpush1.msra.mxu0 0.0
    %1669 = vmatprep.subr.mxu0 0.0
    %1670 = vmatpush1.msra.mxu0 0.0
    %1671 = vmatprep.subr.mxu0 0.0
    %1672 = vmatpush1.msra.mxu0 0.0
    %1673 = vmatprep.subr.mxu0 0.0
    %1674 = vmatpush1.msra.mxu0 0.0
    %1675 = vmatprep.subr.mxu0 0.0
    %1676 = vmatpush1.msra.mxu0 0.0
    %1677 = vmatprep.subr.mxu0 0.0
    %1678 = vmatpush1.msra.mxu0 0.0
    %1679 = vmatprep.subr.mxu0 0.0
    %1680 = vmatpush1.msra.mxu0 0.0
    %1681 = vmatprep.mubr.f32.mxu0 0.0
    %v1682 = vand.u32 %v1611, 4294901760
    %v1683 = vsub.f32 %v1611, %v1682
    %v1684 = vand.u32 %v1683, 4294901760
    %v1685 = vsub.f32 %v1683, %v1684
    %v1686 = vand.u32 %v1685, 4294901760
    %1687 = vmatmul.mubr.f32.gmra.mrb[0].mxu0 %v1686
    %v1688 = vpop.f32.mrb[0].mxu0
    %v1689 = vadd.f32 0.0, %v1688
    %v1690 = vpop.f32.mrb[0].mxu0
    %1691 = vdwg.mxu0
    %1692 = vmatprep.subr.mxu0 0.0
    %v1693 = vand.u32 %v1602, 4294901760
    %v1694 = vsub.f32 %v1602, %v1693
    %v1695 = vand.u32 %v1694, 4294901760
    %v1696 = vsub.f32 %v1694, %v1695
    %v1697 = vand.u32 %v1696, 4294901760
    %1698 = vmatpush1.msra.mxu0 %v1697
    %1699 = vmatprep.subr.mxu0 0.0
    %v1700 = vand.u32 %v1603, 4294901760
    %v1701 = vsub.f32 %v1603, %v1700
    %v1702 = vand.u32 %v1701, 4294901760
    %v1703 = vsub.f32 %v1701, %v1702
    %v1704 = vand.u32 %v1703, 4294901760
    %1705 = vmatpush1.msra.mxu0 %v1704
    %1706 = vmatprep.subr.mxu0 0.0
    %v1707 = vand.u32 %v1604, 4294901760
    %v1708 = vsub.f32 %v1604, %v1707
    %v1709 = vand.u32 %v1708, 4294901760
    %v1710 = vsub.f32 %v1708, %v1709
    %v1711 = vand.u32 %v1710, 4294901760
    %1712 = vmatpush1.msra.mxu0 %v1711
    %1713 = vmatprep.subr.mxu0 0.0
    %v1714 = vand.u32 %v1605, 4294901760
    %v1715 = vsub.f32 %v1605, %v1714
    %v1716 = vand.u32 %v1715, 4294901760
    %v1717 = vsub.f32 %v1715, %v1716
    %v1718 = vand.u32 %v1717, 4294901760
    %1719 = vmatpush1.msra.mxu0 %v1718
    %1720 = vmatprep.subr.mxu0 0.0
    %1721 = vmatpush1.msra.mxu0 0.0
    %1722 = vmatprep.subr.mxu0 0.0
    %1723 = vmatpush1.msra.mxu0 0.0
    %1724 = vmatprep.subr.mxu0 0.0
    %1725 = vmatpush1.msra.mxu0 0.0
    %1726 = vmatprep.subr.mxu0 0.0
    %1727 = vmatpush1.msra.mxu0 0.0
    %1728 = vmatprep.subr.mxu0 0.0
    %1729 = vmatpush1.msra.mxu0 0.0
    %1730 = vmatprep.subr.mxu0 0.0
    %1731 = vmatpush1.msra.mxu0 0.0
    %1732 = vmatprep.subr.mxu0 0.0
    %1733 = vmatpush1.msra.mxu0 0.0
    %1734 = vmatprep.subr.mxu0 0.0
    %1735 = vmatpush1.msra.mxu0 0.0
    %1736 = vmatprep.subr.mxu0 0.0
    %1737 = vmatpush1.msra.mxu0 0.0
    %1738 = vmatprep.subr.mxu0 0.0
    %1739 = vmatpush1.msra.mxu0 0.0
    %1740 = vmatprep.subr.mxu0 0.0
    %1741 = vmatpush1.msra.mxu0 0.0
    %1742 = vmatprep.subr.mxu0 0.0
    %1743 = vmatpush1.msra.mxu0 0.0
    %1744 = vmatprep.subr.mxu0 0.0
    %1745 = vmatpush1.msra.mxu0 0.0
    %1746 = vmatprep.subr.mxu0 0.0
    %1747 = vmatpush1.msra.mxu0 0.0
    %1748 = vmatprep.subr.mxu0 0.0
    %1749 = vmatpush1.msra.mxu0 0.0
    %1750 = vmatprep.subr.mxu0 0.0
    %1751 = vmatpush1.msra.mxu0 0.0
    %1752 = vmatprep.subr.mxu0 0.0
    %1753 = vmatpush1.msra.mxu0 0.0
    %1754 = vmatprep.subr.mxu0 0.0
    %1755 = vmatpush1.msra.mxu0 0.0
    %1756 = vmatprep.subr.mxu0 0.0
    %1757 = vmatpush1.msra.mxu0 0.0
    %1758 = vmatprep.subr.mxu0 0.0
    %1759 = vmatpush1.msra.mxu0 0.0
    %1760 = vmatprep.subr.mxu0 0.0
    %1761 = vmatpush1.msra.mxu0 0.0
    %1762 = vmatprep.subr.mxu0 0.0
    %1763 = vmatpush1.msra.mxu0 0.0
    %1764 = vmatprep.subr.mxu0 0.0
    %1765 = vmatpush1.msra.mxu0 0.0
    %1766 = vmatprep.subr.mxu0 0.0
    %1767 = vmatpush1.msra.mxu0 0.0
    %1768 = vmatprep.subr.mxu0 0.0
    %1769 = vmatpush1.msra.mxu0 0.0
    %1770 = vmatprep.subr.mxu0 0.0
    %1771 = vmatpush1.msra.mxu0 0.0
    %1772 = vmatprep.subr.mxu0 0.0
    %1773 = vmatpush1.msra.mxu0 0.0
    %1774 = vmatprep.subr.mxu0 0.0
    %1775 = vmatpush1.msra.mxu0 0.0
    %1776 = vmatprep.mubr.f32.mxu0 0.0
    %v1777 = vand.u32 %v1611, 4294901760
    %1778 = vmatmul.mubr.f32.gmra.mrb[0].mxu0 %v1777
    %v1779 = vpop.f32.mrb[0].mxu0
    %v1780 = vadd.f32 %v1689, %v1779
    %v1781 = vpop.f32.mrb[0].mxu0
    %1782 = vdwg.mxu0
    %1783 = vmatprep.subr.mxu0 0.0
    %v1784 = vand.u32 %v1602, 4294901760
    %v1785 = vsub.f32 %v1602, %v1784
    %1786 = vmatpush1.msra.mxu0 %v1785
    %1787 = vmatprep.subr.mxu0 0.0
    %v1788 = vand.u32 %v1603, 4294901760
    %v1789 = vsub.f32 %v1603, %v1788
    %1790 = vmatpush1.msra.mxu0 %v1789
    %1791 = vmatprep.subr.mxu0 0.0
    %v1792 = vand.u32 %v1604, 4294901760
    %v1793 = vsub.f32 %v1604, %v1792
    %1794 = vmatpush1.msra.mxu0 %v1793
    %1795 = vmatprep.subr.mxu0 0.0
    %v1796 = vand.u32 %v1605, 4294901760
    %v1797 = vsub.f32 %v1605, %v1796
    %1798 = vmatpush1.msra.mxu0 %v1797
    %1799 = vmatprep.subr.mxu0 0.0
    %1800 = vmatpush1.msra.mxu0 0.0
    %1801 = vmatprep.subr.mxu0 0.0
    %1802 = vmatpush1.msra.mxu0 0.0
    %1803 = vmatprep.subr.mxu0 0.0
    %1804 = vmatpush1.msra.mxu0 0.0
    %1805 = vmatprep.subr.mxu0 0.0
    %1806 = vmatpush1.msra.mxu0 0.0
    %1807 = vmatprep.subr.mxu0 0.0
    %1808 = vmatpush1.msra.mxu0 0.0
    %1809 = vmatprep.subr.mxu0 0.0
    %1810 = vmatpush1.msra.mxu0 0.0
    %1811 = vmatprep.subr.mxu0 0.0
    %1812 = vmatpush1.msra.mxu0 0.0
    %1813 = vmatprep.subr.mxu0 0.0
    %1814 = vmatpush1.msra.mxu0 0.0
    %1815 = vmatprep.subr.mxu0 0.0
    %1816 = vmatpush1.msra.mxu0 0.0
    %1817 = vmatprep.subr.mxu0 0.0
    %1818 = vmatpush1.msra.mxu0 0.0
    %1819 = vmatprep.subr.mxu0 0.0
    %1820 = vmatpush1.msra.mxu0 0.0
    %1821 = vmatprep.subr.mxu0 0.0
    %1822 = vmatpush1.msra.mxu0 0.0
    %1823 = vmatprep.subr.mxu0 0.0
    %1824 = vmatpush1.msra.mxu0 0.0
    %1825 = vmatprep.subr.mxu0 0.0
    %1826 = vmatpush1.msra.mxu0 0.0
    %1827 = vmatprep.subr.mxu0 0.0
    %1828 = vmatpush1.msra.mxu0 0.0
    %1829 = vmatprep.subr.mxu0 0.0
    %1830 = vmatpush1.msra.mxu0 0.0
    %1831 = vmatprep.subr.mxu0 0.0
    %1832 = vmatpush1.msra.mxu0 0.0
    %1833 = vmatprep.subr.mxu0 0.0
    %1834 = vmatpush1.msra.mxu0 0.0
    %1835 = vmatprep.subr.mxu0 0.0
    %1836 = vmatpush1.msra.mxu0 0.0
    %1837 = vmatprep.subr.mxu0 0.0
    %1838 = vmatpush1.msra.mxu0 0.0
    %1839 = vmatprep.subr.mxu0 0.0
    %1840 = vmatpush1.msra.mxu0 0.0
    %1841 = vmatprep.subr.mxu0 0.0
    %1842 = vmatpush1.msra.mxu0 0.0
    %1843 = vmatprep.subr.mxu0 0.0
    %1844 = vmatpush1.msra.mxu0 0.0
    %1845 = vmatprep.subr.mxu0 0.0
    %1846 = vmatpush1.msra.mxu0 0.0
    %1847 = vmatprep.subr.mxu0 0.0
    %1848 = vmatpush1.msra.mxu0 0.0
    %1849 = vmatprep.subr.mxu0 0.0
    %1850 = vmatpush1.msra.mxu0 0.0
    %1851 = vmatprep.subr.mxu0 0.0
    %1852 = vmatpush1.msra.mxu0 0.0
    %1853 = vmatprep.subr.mxu0 0.0
    %1854 = vmatpush1.msra.mxu0 0.0
    %1855 = vmatprep.mubr.f32.mxu0 0.0
    %v1856 = vand.u32 %v1611, 4294901760
    %v1857 = vsub.f32 %v1611, %v1856
    %1858 = vmatmul.mubr.f32.gmra.mrb[0].mxu0 %v1857
    %v1859 = vpop.f32.mrb[0].mxu0
    %v1860 = vadd.f32 %v1780, %v1859
    %v1861 = vpop.f32.mrb[0].mxu0
    %1862 = vdwg.mxu0
    %1863 = vmatprep.subr.mxu0 0.0
    %v1864 = vand.u32 %v1602, 4294901760
    %1865 = vmatpush1.msra.mxu0 %v1864
    %1866 = vmatprep.subr.mxu0 0.0
    %v1867 = vand.u32 %v1603, 4294901760
    %1868 = vmatpush1.msra.mxu0 %v1867
    %1869 = vmatprep.subr.mxu0 0.0
    %v1870 = vand.u32 %v1604, 4294901760
    %1871 = vmatpush1.msra.mxu0 %v1870
    %1872 = vmatprep.subr.mxu0 0.0
    %v1873 = vand.u32 %v1605, 4294901760
    %1874 = vmatpush1.msra.mxu0 %v1873
    %1875 = vmatprep.subr.mxu0 0.0
    %1876 = vmatpush1.msra.mxu0 0.0
    %1877 = vmatprep.subr.mxu0 0.0
    %1878 = vmatpush1.msra.mxu0 0.0
    %1879 = vmatprep.subr.mxu0 0.0
    %1880 = vmatpush1.msra.mxu0 0.0
    %1881 = vmatprep.subr.mxu0 0.0
    %1882 = vmatpush1.msra.mxu0 0.0
    %1883 = vmatprep.subr.mxu0 0.0
    %1884 = vmatpush1.msra.mxu0 0.0
    %1885 = vmatprep.subr.mxu0 0.0
    %1886 = vmatpush1.msra.mxu0 0.0
    %1887 = vmatprep.subr.mxu0 0.0
    %1888 = vmatpush1.msra.mxu0 0.0
    %1889 = vmatprep.subr.mxu0 0.0
    %1890 = vmatpush1.msra.mxu0 0.0
    %1891 = vmatprep.subr.mxu0 0.0
    %1892 = vmatpush1.msra.mxu0 0.0
    %1893 = vmatprep.subr.mxu0 0.0
    %1894 = vmatpush1.msra.mxu0 0.0
    %1895 = vmatprep.subr.mxu0 0.0
    %1896 = vmatpush1.msra.mxu0 0.0
    %1897 = vmatprep.subr.mxu0 0.0
    %1898 = vmatpush1.msra.mxu0 0.0
    %1899 = vmatprep.subr.mxu0 0.0
    %1900 = vmatpush1.msra.mxu0 0.0
    %1901 = vmatprep.subr.mxu0 0.0
    %1902 = vmatpush1.msra.mxu0 0.0
    %1903 = vmatprep.subr.mxu0 0.0
    %1904 = vmatpush1.msra.mxu0 0.0
    %1905 = vmatprep.subr.mxu0 0.0
    %1906 = vmatpush1.msra.mxu0 0.0
    %1907 = vmatprep.subr.mxu0 0.0
    %1908 = vmatpush1.msra.mxu0 0.0
    %1909 = vmatprep.subr.mxu0 0.0
    %1910 = vmatpush1.msra.mxu0 0.0
    %1911 = vmatprep.subr.mxu0 0.0
    %1912 = vmatpush1.msra.mxu0 0.0
    %1913 = vmatprep.subr.mxu0 0.0
    %1914 = vmatpush1.msra.mxu0 0.0
    %1915 = vmatprep.subr.mxu0 0.0
    %1916 = vmatpush1.msra.mxu0 0.0
    %1917 = vmatprep.subr.mxu0 0.0
    %1918 = vmatpush1.msra.mxu0 0.0
    %1919 = vmatprep.subr.mxu0 0.0
    %1920 = vmatpush1.msra.mxu0 0.0
    %1921 = vmatprep.subr.mxu0 0.0
    %1922 = vmatpush1.msra.mxu0 0.0
    %1923 = vmatprep.subr.mxu0 0.0
    %1924 = vmatpush1.msra.mxu0 0.0
    %1925 = vmatprep.subr.mxu0 0.0
    %1926 = vmatpush1.msra.mxu0 0.0
    %1927 = vmatprep.subr.mxu0 0.0
    %1928 = vmatpush1.msra.mxu0 0.0
    %1929 = vmatprep.subr.mxu0 0.0
    %1930 = vmatpush1.msra.mxu0 0.0
    %1931 = vmatprep.mubr.f32.mxu0 0.0
    %v1932 = vand.u32 %v1611, 4294901760
    %v1933 = vsub.f32 %v1611, %v1932
    %v1934 = vand.u32 %v1933, 4294901760
    %1935 = vmatmul.mubr.f32.gmra.mrb[0].mxu0 %v1934
    %v1936 = vpop.f32.mrb[0].mxu0
    %v1937 = vadd.f32 %v1860, %v1936
    %v1938 = vpop.f32.mrb[0].mxu0
    %1939 = vdwg.mxu0
    %1940 = vmatprep.subr.mxu0 0.0
    %v1941 = vand.u32 %v1602, 4294901760
    %v1942 = vsub.f32 %v1602, %v1941
    %v1943 = vand.u32 %v1942, 4294901760
    %1944 = vmatpush1.msra.mxu0 %v1943
    %1945 = vmatprep.subr.mxu0 0.0
    %v1946 = vand.u32 %v1603, 4294901760
    %v1947 = vsub.f32 %v1603, %v1946
    %v1948 = vand.u32 %v1947, 4294901760
    %1949 = vmatpush1.msra.mxu0 %v1948
    %1950 = vmatprep.subr.mxu0 0.0
    %v1951 = vand.u32 %v1604, 4294901760
    %v1952 = vsub.f32 %v1604, %v1951
    %v1953 = vand.u32 %v1952, 4294901760
    %1954 = vmatpush1.msra.mxu0 %v1953
    %1955 = vmatprep.subr.mxu0 0.0
    %v1956 = vand.u32 %v1605, 4294901760
    %v1957 = vsub.f32 %v1605, %v1956
    %v1958 = vand.u32 %v1957, 4294901760
    %1959 = vmatpush1.msra.mxu0 %v1958
    %1960 = vmatprep.subr.mxu0 0.0
    %1961 = vmatpush1.msra.mxu0 0.0
    %1962 = vmatprep.subr.mxu0 0.0
    %1963 = vmatpush1.msra.mxu0 0.0
    %1964 = vmatprep.subr.mxu0 0.0
    %1965 = vmatpush1.msra.mxu0 0.0
    %1966 = vmatprep.subr.mxu0 0.0
    %1967 = vmatpush1.msra.mxu0 0.0
    %1968 = vmatprep.subr.mxu0 0.0
    %1969 = vmatpush1.msra.mxu0 0.0
    %1970 = vmatprep.subr.mxu0 0.0
    %1971 = vmatpush1.msra.mxu0 0.0
    %1972 = vmatprep.subr.mxu0 0.0
    %1973 = vmatpush1.msra.mxu0 0.0
    %1974 = vmatprep.subr.mxu0 0.0
    %1975 = vmatpush1.msra.mxu0 0.0
    %1976 = vmatprep.subr.mxu0 0.0
    %1977 = vmatpush1.msra.mxu0 0.0
    %1978 = vmatprep.subr.mxu0 0.0
    %1979 = vmatpush1.msra.mxu0 0.0
    %1980 = vmatprep.subr.mxu0 0.0
    %1981 = vmatpush1.msra.mxu0 0.0
    %1982 = vmatprep.subr.mxu0 0.0
    %1983 = vmatpush1.msra.mxu0 0.0
    %1984 = vmatprep.subr.mxu0 0.0
    %1985 = vmatpush1.msra.mxu0 0.0
    %1986 = vmatprep.subr.mxu0 0.0
    %1987 = vmatpush1.msra.mxu0 0.0
    %1988 = vmatprep.subr.mxu0 0.0
    %1989 = vmatpush1.msra.mxu0 0.0
    %1990 = vmatprep.subr.mxu0 0.0
    %1991 = vmatpush1.msra.mxu0 0.0
    %1992 = vmatprep.subr.mxu0 0.0
    %1993 = vmatpush1.msra.mxu0 0.0
    %1994 = vmatprep.subr.mxu0 0.0
    %1995 = vmatpush1.msra.mxu0 0.0
    %1996 = vmatprep.subr.mxu0 0.0
    %1997 = vmatpush1.msra.mxu0 0.0
    %1998 = vmatprep.subr.mxu0 0.0
    %1999 = vmatpush1.msra.mxu0 0.0
    %2000 = vmatprep.subr.mxu0 0.0
    %2001 = vmatpush1.msra.mxu0 0.0
    %2002 = vmatprep.subr.mxu0 0.0
    %2003 = vmatpush1.msra.mxu0 0.0
    %2004 = vmatprep.subr.mxu0 0.0
    %2005 = vmatpush1.msra.mxu0 0.0
    %2006 = vmatprep.subr.mxu0 0.0
    %2007 = vmatpush1.msra.mxu0 0.0
    %2008 = vmatprep.subr.mxu0 0.0
    %2009 = vmatpush1.msra.mxu0 0.0
    %2010 = vmatprep.subr.mxu0 0.0
    %2011 = vmatpush1.msra.mxu0 0.0
    %2012 = vmatprep.subr.mxu0 0.0
    %2013 = vmatpush1.msra.mxu0 0.0
    %2014 = vmatprep.subr.mxu0 0.0
    %2015 = vmatpush1.msra.mxu0 0.0
    %2016 = vmatprep.mubr.f32.mxu0 0.0
    %v2017 = vand.u32 %v1611, 4294901760
    %2018 = vmatmul.mubr.f32.gmra.mrb[0].mxu0 %v2017
    %v2019 = vpop.f32.mrb[0].mxu0
    %v2020 = vadd.f32 %v1937, %v2019
    %v2021 = vpop.f32.mrb[0].mxu0
    %2022 = vdwg.mxu0
    %2023 = vmatprep.subr.mxu0 0.0
    %v2024 = vand.u32 %v1602, 4294901760
    %2025 = vmatpush1.msra.mxu0 %v2024
    %2026 = vmatprep.subr.mxu0 0.0
    %v2027 = vand.u32 %v1603, 4294901760
    %2028 = vmatpush1.msra.mxu0 %v2027
    %2029 = vmatprep.subr.mxu0 0.0
    %v2030 = vand.u32 %v1604, 4294901760
    %2031 = vmatpush1.msra.mxu0 %v2030
    %2032 = vmatprep.subr.mxu0 0.0
    %v2033 = vand.u32 %v1605, 4294901760
    %2034 = vmatpush1.msra.mxu0 %v2033
    %2035 = vmatprep.subr.mxu0 0.0
    %2036 = vmatpush1.msra.mxu0 0.0
    %2037 = vmatprep.subr.mxu0 0.0
    %2038 = vmatpush1.msra.mxu0 0.0
    %2039 = vmatprep.subr.mxu0 0.0
    %2040 = vmatpush1.msra.mxu0 0.0
    %2041 = vmatprep.subr.mxu0 0.0
    %2042 = vmatpush1.msra.mxu0 0.0
    %2043 = vmatprep.subr.mxu0 0.0
    %2044 = vmatpush1.msra.mxu0 0.0
    %2045 = vmatprep.subr.mxu0 0.0
    %2046 = vmatpush1.msra.mxu0 0.0
    %2047 = vmatprep.subr.mxu0 0.0
    %2048 = vmatpush1.msra.mxu0 0.0
    %2049 = vmatprep.subr.mxu0 0.0
    %2050 = vmatpush1.msra.mxu0 0.0
    %2051 = vmatprep.subr.mxu0 0.0
    %2052 = vmatpush1.msra.mxu0 0.0
    %2053 = vmatprep.subr.mxu0 0.0
    %2054 = vmatpush1.msra.mxu0 0.0
    %2055 = vmatprep.subr.mxu0 0.0
    %2056 = vmatpush1.msra.mxu0 0.0
    %2057 = vmatprep.subr.mxu0 0.0
    %2058 = vmatpush1.msra.mxu0 0.0
    %2059 = vmatprep.subr.mxu0 0.0
    %2060 = vmatpush1.msra.mxu0 0.0
    %2061 = vmatprep.subr.mxu0 0.0
    %2062 = vmatpush1.msra.mxu0 0.0
    %2063 = vmatprep.subr.mxu0 0.0
    %2064 = vmatpush1.msra.mxu0 0.0
    %2065 = vmatprep.subr.mxu0 0.0
    %2066 = vmatpush1.msra.mxu0 0.0
    %2067 = vmatprep.subr.mxu0 0.0
    %2068 = vmatpush1.msra.mxu0 0.0
    %2069 = vmatprep.subr.mxu0 0.0
    %2070 = vmatpush1.msra.mxu0 0.0
    %2071 = vmatprep.subr.mxu0 0.0
    %2072 = vmatpush1.msra.mxu0 0.0
    %2073 = vmatprep.subr.mxu0 0.0
    %2074 = vmatpush1.msra.mxu0 0.0
    %2075 = vmatprep.subr.mxu0 0.0
    %2076 = vmatpush1.msra.mxu0 0.0
    %2077 = vmatprep.subr.mxu0 0.0
    %2078 = vmatpush1.msra.mxu0 0.0
    %2079 = vmatprep.subr.mxu0 0.0
    %2080 = vmatpush1.msra.mxu0 0.0
    %2081 = vmatprep.subr.mxu0 0.0
    %2082 = vmatpush1.msra.mxu0 0.0
    %2083 = vmatprep.subr.mxu0 0.0
    %2084 = vmatpush1.msra.mxu0 0.0
    %2085 = vmatprep.subr.mxu0 0.0
    %2086 = vmatpush1.msra.mxu0 0.0
    %2087 = vmatprep.subr.mxu0 0.0
    %2088 = vmatpush1.msra.mxu0 0.0
    %2089 = vmatprep.subr.mxu0 0.0
    %2090 = vmatpush1.msra.mxu0 0.0
    %2091 = vmatprep.mubr.f32.mxu0 0.0
    %v2092 = vand.u32 %v1611, 4294901760
    %2093 = vmatmul.mubr.f32.gmra.mrb[0].mxu0 %v2092
    %v2094 = vpop.f32.mrb[0].mxu0
    %v2095 = vadd.f32 %v2020, %v2094
    %v2096 = vpop.f32.mrb[0].mxu0
    %2097 = vdwg.mxu0
    %v2099 = vsel %vm49, %v1601, 0
    %2101 = vmatprep.subr.mxu0 0.0
    %v2102 = vand.u32 %v1606, 4294901760
    %2103 = vmatpush1.msra.mxu0 %v2102
    %2104 = vmatprep.subr.mxu0 0.0
    %v2105 = vand.u32 %v1607, 4294901760
    %2106 = vmatpush1.msra.mxu0 %v2105
    %2107 = vmatprep.subr.mxu0 0.0
    %v2108 = vand.u32 %v1608, 4294901760
    %2109 = vmatpush1.msra.mxu0 %v2108
    %2110 = vmatprep.subr.mxu0 0.0
    %v2111 = vand.u32 %v1609, 4294901760
    %2112 = vmatpush1.msra.mxu0 %v2111
    %2113 = vmatprep.subr.mxu0 0.0
    %2114 = vmatpush1.msra.mxu0 0.0
    %2115 = vmatprep.subr.mxu0 0.0
    %2116 = vmatpush1.msra.mxu0 0.0
    %2117 = vmatprep.subr.mxu0 0.0
    %2118 = vmatpush1.msra.mxu0 0.0
    %2119 = vmatprep.subr.mxu0 0.0
    %2120 = vmatpush1.msra.mxu0 0.0
    %2121 = vmatprep.subr.mxu0 0.0
    %2122 = vmatpush1.msra.mxu0 0.0
    %2123 = vmatprep.subr.mxu0 0.0
    %2124 = vmatpush1.msra.mxu0 0.0
    %2125 = vmatprep.subr.mxu0 0.0
    %2126 = vmatpush1.msra.mxu0 0.0
    %2127 = vmatprep.subr.mxu0 0.0
    %2128 = vmatpush1.msra.mxu0 0.0
    %2129 = vmatprep.subr.mxu0 0.0
    %2130 = vmatpush1.msra.mxu0 0.0
    %2131 = vmatprep.subr.mxu0 0.0
    %2132 = vmatpush1.msra.mxu0 0.0
    %2133 = vmatprep.subr.mxu0 0.0
    %2134 = vmatpush1.msra.mxu0 0.0
    %2135 = vmatprep.subr.mxu0 0.0
    %2136 = vmatpush1.msra.mxu0 0.0
    %2137 = vmatprep.subr.mxu0 0.0
    %2138 = vmatpush1.msra.mxu0 0.0
    %2139 = vmatprep.subr.mxu0 0.0
    %2140 = vmatpush1.msra.mxu0 0.0
    %2141 = vmatprep.subr.mxu0 0.0
    %2142 = vmatpush1.msra.mxu0 0.0
    %2143 = vmatprep.subr.mxu0 0.0
    %2144 = vmatpush1.msra.mxu0 0.0
    %2145 = vmatprep.subr.mxu0 0.0
    %2146 = vmatpush1.msra.mxu0 0.0
    %2147 = vmatprep.subr.mxu0 0.0
    %2148 = vmatpush1.msra.mxu0 0.0
    %2149 = vmatprep.subr.mxu0 0.0
    %2150 = vmatpush1.msra.mxu0 0.0
    %2151 = vmatprep.subr.mxu0 0.0
    %2152 = vmatpush1.msra.mxu0 0.0
    %2153 = vmatprep.subr.mxu0 0.0
    %2154 = vmatpush1.msra.mxu0 0.0
    %2155 = vmatprep.subr.mxu0 0.0
    %2156 = vmatpush1.msra.mxu0 0.0
    %2157 = vmatprep.subr.mxu0 0.0
    %2158 = vmatpush1.msra.mxu0 0.0
    %2159 = vmatprep.subr.mxu0 0.0
    %2160 = vmatpush1.msra.mxu0 0.0
    %2161 = vmatprep.subr.mxu0 0.0
    %2162 = vmatpush1.msra.mxu0 0.0
    %2163 = vmatprep.subr.mxu0 0.0
    %2164 = vmatpush1.msra.mxu0 0.0
    %2165 = vmatprep.subr.mxu0 0.0
    %2166 = vmatpush1.msra.mxu0 0.0
    %2167 = vmatprep.subr.mxu0 0.0
    %2168 = vmatpush1.msra.mxu0 0.0
    %2169 = vmatprep.mubr.f32.mxu0 0.0
    %v2170 = vand.u32 %v2099, 4294901760
    %v2171 = vsub.f32 %v2099, %v2170
    %v2172 = vand.u32 %v2171, 4294901760
    %v2173 = vsub.f32 %v2171, %v2172
    %v2174 = vand.u32 %v2173, 4294901760
    %2175 = vmatmul.mubr.f32.gmra.mrb[0].mxu0 %v2174
    %v2176 = vpop.f32.mrb[0].mxu0
    %v2177 = vadd.f32 0.0, %v2176
    %v2178 = vpop.f32.mrb[0].mxu0
    %2179 = vdwg.mxu0
    %2180 = vmatprep.subr.mxu0 0.0
    %v2181 = vand.u32 %v1606, 4294901760
    %v2182 = vsub.f32 %v1606, %v2181
    %v2183 = vand.u32 %v2182, 4294901760
    %v2184 = vsub.f32 %v2182, %v2183
    %v2185 = vand.u32 %v2184, 4294901760
    %2186 = vmatpush1.msra.mxu0 %v2185
    %2187 = vmatprep.subr.mxu0 0.0
    %v2188 = vand.u32 %v1607, 4294901760
    %v2189 = vsub.f32 %v1607, %v2188
    %v2190 = vand.u32 %v2189, 4294901760
    %v2191 = vsub.f32 %v2189, %v2190
    %v2192 = vand.u32 %v2191, 4294901760
    %2193 = vmatpush1.msra.mxu0 %v2192
    %2194 = vmatprep.subr.mxu0 0.0
    %v2195 = vand.u32 %v1608, 4294901760
    %v2196 = vsub.f32 %v1608, %v2195
    %v2197 = vand.u32 %v2196, 4294901760
    %v2198 = vsub.f32 %v2196, %v2197
    %v2199 = vand.u32 %v2198, 4294901760
    %2200 = vmatpush1.msra.mxu0 %v2199
    %2201 = vmatprep.subr.mxu0 0.0
    %v2202 = vand.u32 %v1609, 4294901760
    %v2203 = vsub.f32 %v1609, %v2202
    %v2204 = vand.u32 %v2203, 4294901760
    %v2205 = vsub.f32 %v2203, %v2204
    %v2206 = vand.u32 %v2205, 4294901760
    %2207 = vmatpush1.msra.mxu0 %v2206
    %2208 = vmatprep.subr.mxu0 0.0
    %2209 = vmatpush1.msra.mxu0 0.0
    %2210 = vmatprep.subr.mxu0 0.0
    %2211 = vmatpush1.msra.mxu0 0.0
    %2212 = vmatprep.subr.mxu0 0.0
    %2213 = vmatpush1.msra.mxu0 0.0
    %2214 = vmatprep.subr.mxu0 0.0
    %2215 = vmatpush1.msra.mxu0 0.0
    %2216 = vmatprep.subr.mxu0 0.0
    %2217 = vmatpush1.msra.mxu0 0.0
    %2218 = vmatprep.subr.mxu0 0.0
    %2219 = vmatpush1.msra.mxu0 0.0
    %2220 = vmatprep.subr.mxu0 0.0
    %2221 = vmatpush1.msra.mxu0 0.0
    %2222 = vmatprep.subr.mxu0 0.0
    %2223 = vmatpush1.msra.mxu0 0.0
    %2224 = vmatprep.subr.mxu0 0.0
    %2225 = vmatpush1.msra.mxu0 0.0
    %2226 = vmatprep.subr.mxu0 0.0
    %2227 = vmatpush1.msra.mxu0 0.0
    %2228 = vmatprep.subr.mxu0 0.0
    %2229 = vmatpush1.msra.mxu0 0.0
    %2230 = vmatprep.subr.mxu0 0.0
    %2231 = vmatpush1.msra.mxu0 0.0
    %2232 = vmatprep.subr.mxu0 0.0
    %2233 = vmatpush1.msra.mxu0 0.0
    %2234 = vmatprep.subr.mxu0 0.0
    %2235 = vmatpush1.msra.mxu0 0.0
    %2236 = vmatprep.subr.mxu0 0.0
    %2237 = vmatpush1.msra.mxu0 0.0
    %2238 = vmatprep.subr.mxu0 0.0
    %2239 = vmatpush1.msra.mxu0 0.0
    %2240 = vmatprep.subr.mxu0 0.0
    %2241 = vmatpush1.msra.mxu0 0.0
    %2242 = vmatprep.subr.mxu0 0.0
    %2243 = vmatpush1.msra.mxu0 0.0
    %2244 = vmatprep.subr.mxu0 0.0
    %2245 = vmatpush1.msra.mxu0 0.0
    %2246 = vmatprep.subr.mxu0 0.0
    %2247 = vmatpush1.msra.mxu0 0.0
    %2248 = vmatprep.subr.mxu0 0.0
    %2249 = vmatpush1.msra.mxu0 0.0
    %2250 = vmatprep.subr.mxu0 0.0
    %2251 = vmatpush1.msra.mxu0 0.0
    %2252 = vmatprep.subr.mxu0 0.0
    %2253 = vmatpush1.msra.mxu0 0.0
    %2254 = vmatprep.subr.mxu0 0.0
    %2255 = vmatpush1.msra.mxu0 0.0
    %2256 = vmatprep.subr.mxu0 0.0
    %2257 = vmatpush1.msra.mxu0 0.0
    %2258 = vmatprep.subr.mxu0 0.0
    %2259 = vmatpush1.msra.mxu0 0.0
    %2260 = vmatprep.subr.mxu0 0.0
    %2261 = vmatpush1.msra.mxu0 0.0
    %2262 = vmatprep.subr.mxu0 0.0
    %2263 = vmatpush1.msra.mxu0 0.0
    %2264 = vmatprep.mubr.f32.mxu0 0.0
    %v2265 = vand.u32 %v2099, 4294901760
    %2266 = vmatmul.mubr.f32.gmra.mrb[0].mxu0 %v2265
    %v2267 = vpop.f32.mrb[0].mxu0
    %v2268 = vadd.f32 %v2177, %v2267
    %v2269 = vpop.f32.mrb[0].mxu0
    %2270 = vdwg.mxu0
    %2271 = vmatprep.subr.mxu0 0.0
    %v2272 = vand.u32 %v1606, 4294901760
    %v2273 = vsub.f32 %v1606, %v2272
    %2274 = vmatpush1.msra.mxu0 %v2273
    %2275 = vmatprep.subr.mxu0 0.0
    %v2276 = vand.u32 %v1607, 4294901760
    %v2277 = vsub.f32 %v1607, %v2276
    %2278 = vmatpush1.msra.mxu0 %v2277
    %2279 = vmatprep.subr.mxu0 0.0
    %v2280 = vand.u32 %v1608, 4294901760
    %v2281 = vsub.f32 %v1608, %v2280
    %2282 = vmatpush1.msra.mxu0 %v2281
    %2283 = vmatprep.subr.mxu0 0.0
    %v2284 = vand.u32 %v1609, 4294901760
    %v2285 = vsub.f32 %v1609, %v2284
    %2286 = vmatpush1.msra.mxu0 %v2285
    %2287 = vmatprep.subr.mxu0 0.0
    %2288 = vmatpush1.msra.mxu0 0.0
    %2289 = vmatprep.subr.mxu0 0.0
    %2290 = vmatpush1.msra.mxu0 0.0
    %2291 = vmatprep.subr.mxu0 0.0
    %2292 = vmatpush1.msra.mxu0 0.0
    %2293 = vmatprep.subr.mxu0 0.0
    %2294 = vmatpush1.msra.mxu0 0.0
    %2295 = vmatprep.subr.mxu0 0.0
    %2296 = vmatpush1.msra.mxu0 0.0
    %2297 = vmatprep.subr.mxu0 0.0
    %2298 = vmatpush1.msra.mxu0 0.0
    %2299 = vmatprep.subr.mxu0 0.0
    %2300 = vmatpush1.msra.mxu0 0.0
    %2301 = vmatprep.subr.mxu0 0.0
    %2302 = vmatpush1.msra.mxu0 0.0
    %2303 = vmatprep.subr.mxu0 0.0
    %2304 = vmatpush1.msra.mxu0 0.0
    %2305 = vmatprep.subr.mxu0 0.0
    %2306 = vmatpush1.msra.mxu0 0.0
    %2307 = vmatprep.subr.mxu0 0.0
    %2308 = vmatpush1.msra.mxu0 0.0
    %2309 = vmatprep.subr.mxu0 0.0
    %2310 = vmatpush1.msra.mxu0 0.0
    %2311 = vmatprep.subr.mxu0 0.0
    %2312 = vmatpush1.msra.mxu0 0.0
    %2313 = vmatprep.subr.mxu0 0.0
    %2314 = vmatpush1.msra.mxu0 0.0
    %2315 = vmatprep.subr.mxu0 0.0
    %2316 = vmatpush1.msra.mxu0 0.0
    %2317 = vmatprep.subr.mxu0 0.0
    %2318 = vmatpush1.msra.mxu0 0.0
    %2319 = vmatprep.subr.mxu0 0.0
    %2320 = vmatpush1.msra.mxu0 0.0
    %2321 = vmatprep.subr.mxu0 0.0
    %2322 = vmatpush1.msra.mxu0 0.0
    %2323 = vmatprep.subr.mxu0 0.0
    %2324 = vmatpush1.msra.mxu0 0.0
    %2325 = vmatprep.subr.mxu0 0.0
    %2326 = vmatpush1.msra.mxu0 0.0
    %2327 = vmatprep.subr.mxu0 0.0
    %2328 = vmatpush1.msra.mxu0 0.0
    %2329 = vmatprep.subr.mxu0 0.0
    %2330 = vmatpush1.msra.mxu0 0.0
    %2331 = vmatprep.subr.mxu0 0.0
    %2332 = vmatpush1.msra.mxu0 0.0
    %2333 = vmatprep.subr.mxu0 0.0
    %2334 = vmatpush1.msra.mxu0 0.0
    %2335 = vmatprep.subr.mxu0 0.0
    %2336 = vmatpush1.msra.mxu0 0.0
    %2337 = vmatprep.subr.mxu0 0.0
    %2338 = vmatpush1.msra.mxu0 0.0
    %2339 = vmatprep.subr.mxu0 0.0
    %2340 = vmatpush1.msra.mxu0 0.0
    %2341 = vmatprep.subr.mxu0 0.0
    %2342 = vmatpush1.msra.mxu0 0.0
    %2343 = vmatprep.mubr.f32.mxu0 0.0
    %v2344 = vand.u32 %v2099, 4294901760
    %v2345 = vsub.f32 %v2099, %v2344
    %2346 = vmatmul.mubr.f32.gmra.mrb[0].mxu0 %v2345
    %v2347 = vpop.f32.mrb[0].mxu0
    %v2348 = vadd.f32 %v2268, %v2347
    %v2349 = vpop.f32.mrb[0].mxu0
    %2350 = vdwg.mxu0
    %2351 = vmatprep.subr.mxu0 0.0
    %v2352 = vand.u32 %v1606, 4294901760
    %2353 = vmatpush1.msra.mxu0 %v2352
    %2354 = vmatprep.subr.mxu0 0.0
    %v2355 = vand.u32 %v1607, 4294901760
    %2356 = vmatpush1.msra.mxu0 %v2355
    %2357 = vmatprep.subr.mxu0 0.0
    %v2358 = vand.u32 %v1608, 4294901760
    %2359 = vmatpush1.msra.mxu0 %v2358
    %2360 = vmatprep.subr.mxu0 0.0
    %v2361 = vand.u32 %v1609, 4294901760
    %2362 = vmatpush1.msra.mxu0 %v2361
    %2363 = vmatprep.subr.mxu0 0.0
    %2364 = vmatpush1.msra.mxu0 0.0
    %2365 = vmatprep.subr.mxu0 0.0
    %2366 = vmatpush1.msra.mxu0 0.0
    %2367 = vmatprep.subr.mxu0 0.0
    %2368 = vmatpush1.msra.mxu0 0.0
    %2369 = vmatprep.subr.mxu0 0.0
    %2370 = vmatpush1.msra.mxu0 0.0
    %2371 = vmatprep.subr.mxu0 0.0
    %2372 = vmatpush1.msra.mxu0 0.0
    %2373 = vmatprep.subr.mxu0 0.0
    %2374 = vmatpush1.msra.mxu0 0.0
    %2375 = vmatprep.subr.mxu0 0.0
    %2376 = vmatpush1.msra.mxu0 0.0
    %2377 = vmatprep.subr.mxu0 0.0
    %2378 = vmatpush1.msra.mxu0 0.0
    %2379 = vmatprep.subr.mxu0 0.0
    %2380 = vmatpush1.msra.mxu0 0.0
    %2381 = vmatprep.subr.mxu0 0.0
    %2382 = vmatpush1.msra.mxu0 0.0
    %2383 = vmatprep.subr.mxu0 0.0
    %2384 = vmatpush1.msra.mxu0 0.0
    %2385 = vmatprep.subr.mxu0 0.0
    %2386 = vmatpush1.msra.mxu0 0.0
    %2387 = vmatprep.subr.mxu0 0.0
    %2388 = vmatpush1.msra.mxu0 0.0
    %2389 = vmatprep.subr.mxu0 0.0
    %2390 = vmatpush1.msra.mxu0 0.0
    %2391 = vmatprep.subr.mxu0 0.0
    %2392 = vmatpush1.msra.mxu0 0.0
    %2393 = vmatprep.subr.mxu0 0.0
    %2394 = vmatpush1.msra.mxu0 0.0
    %2395 = vmatprep.subr.mxu0 0.0
    %2396 = vmatpush1.msra.mxu0 0.0
    %2397 = vmatprep.subr.mxu0 0.0
    %2398 = vmatpush1.msra.mxu0 0.0
    %2399 = vmatprep.subr.mxu0 0.0
    %2400 = vmatpush1.msra.mxu0 0.0
    %2401 = vmatprep.subr.mxu0 0.0
    %2402 = vmatpush1.msra.mxu0 0.0
    %2403 = vmatprep.subr.mxu0 0.0
    %2404 = vmatpush1.msra.mxu0 0.0
    %2405 = vmatprep.subr.mxu0 0.0
    %2406 = vmatpush1.msra.mxu0 0.0
    %2407 = vmatprep.subr.mxu0 0.0
    %2408 = vmatpush1.msra.mxu0 0.0
    %2409 = vmatprep.subr.mxu0 0.0
    %2410 = vmatpush1.msra.mxu0 0.0
    %2411 = vmatprep.subr.mxu0 0.0
    %2412 = vmatpush1.msra.mxu0 0.0
    %2413 = vmatprep.subr.mxu0 0.0
    %2414 = vmatpush1.msra.mxu0 0.0
    %2415 = vmatprep.subr.mxu0 0.0
    %2416 = vmatpush1.msra.mxu0 0.0
    %2417 = vmatprep.subr.mxu0 0.0
    %2418 = vmatpush1.msra.mxu0 0.0
    %2419 = vmatprep.mubr.f32.mxu0 0.0
    %v2420 = vand.u32 %v2099, 4294901760
    %v2421 = vsub.f32 %v2099, %v2420
    %v2422 = vand.u32 %v2421, 4294901760
    %2423 = vmatmul.mubr.f32.gmra.mrb[0].mxu0 %v2422
    %v2424 = vpop.f32.mrb[0].mxu0
    %v2425 = vadd.f32 %v2348, %v2424
    %v2426 = vpop.f32.mrb[0].mxu0
    %2427 = vdwg.mxu0
    %2428 = vmatprep.subr.mxu0 0.0
    %v2429 = vand.u32 %v1606, 4294901760
    %v2430 = vsub.f32 %v1606, %v2429
    %v2431 = vand.u32 %v2430, 4294901760
    %2432 = vmatpush1.msra.mxu0 %v2431
    %2433 = vmatprep.subr.mxu0 0.0
    %v2434 = vand.u32 %v1607, 4294901760
    %v2435 = vsub.f32 %v1607, %v2434
    %v2436 = vand.u32 %v2435, 4294901760
    %2437 = vmatpush1.msra.mxu0 %v2436
    %2438 = vmatprep.subr.mxu0 0.0
    %v2439 = vand.u32 %v1608, 4294901760
    %v2440 = vsub.f32 %v1608, %v2439
    %v2441 = vand.u32 %v2440, 4294901760
    %2442 = vmatpush1.msra.mxu0 %v2441
    %2443 = vmatprep.subr.mxu0 0.0
    %v2444 = vand.u32 %v1609, 4294901760
    %v2445 = vsub.f32 %v1609, %v2444
    %v2446 = vand.u32 %v2445, 4294901760
    %2447 = vmatpush1.msra.mxu0 %v2446
    %2448 = vmatprep.subr.mxu0 0.0
    %2449 = vmatpush1.msra.mxu0 0.0
    %2450 = vmatprep.subr.mxu0 0.0
    %2451 = vmatpush1.msra.mxu0 0.0
    %2452 = vmatprep.subr.mxu0 0.0
    %2453 = vmatpush1.msra.mxu0 0.0
    %2454 = vmatprep.subr.mxu0 0.0
    %2455 = vmatpush1.msra.mxu0 0.0
    %2456 = vmatprep.subr.mxu0 0.0
    %2457 = vmatpush1.msra.mxu0 0.0
    %2458 = vmatprep.subr.mxu0 0.0
    %2459 = vmatpush1.msra.mxu0 0.0
    %2460 = vmatprep.subr.mxu0 0.0
    %2461 = vmatpush1.msra.mxu0 0.0
    %2462 = vmatprep.subr.mxu0 0.0
    %2463 = vmatpush1.msra.mxu0 0.0
    %2464 = vmatprep.subr.mxu0 0.0
    %2465 = vmatpush1.msra.mxu0 0.0
    %2466 = vmatprep.subr.mxu0 0.0
    %2467 = vmatpush1.msra.mxu0 0.0
    %2468 = vmatprep.subr.mxu0 0.0
    %2469 = vmatpush1.msra.mxu0 0.0
    %2470 = vmatprep.subr.mxu0 0.0
    %2471 = vmatpush1.msra.mxu0 0.0
    %2472 = vmatprep.subr.mxu0 0.0
    %2473 = vmatpush1.msra.mxu0 0.0
    %2474 = vmatprep.subr.mxu0 0.0
    %2475 = vmatpush1.msra.mxu0 0.0
    %2476 = vmatprep.subr.mxu0 0.0
    %2477 = vmatpush1.msra.mxu0 0.0
    %2478 = vmatprep.subr.mxu0 0.0
    %2479 = vmatpush1.msra.mxu0 0.0
    %2480 = vmatprep.subr.mxu0 0.0
    %2481 = vmatpush1.msra.mxu0 0.0
    %2482 = vmatprep.subr.mxu0 0.0
    %2483 = vmatpush1.msra.mxu0 0.0
    %2484 = vmatprep.subr.mxu0 0.0
    %2485 = vmatpush1.msra.mxu0 0.0
    %2486 = vmatprep.subr.mxu0 0.0
    %2487 = vmatpush1.msra.mxu0 0.0
    %2488 = vmatprep.subr.mxu0 0.0
    %2489 = vmatpush1.msra.mxu0 0.0
    %2490 = vmatprep.subr.mxu0 0.0
    %2491 = vmatpush1.msra.mxu0 0.0
    %2492 = vmatprep.subr.mxu0 0.0
    %2493 = vmatpush1.msra.mxu0 0.0
    %2494 = vmatprep.subr.mxu0 0.0
    %2495 = vmatpush1.msra.mxu0 0.0
    %2496 = vmatprep.subr.mxu0 0.0
    %2497 = vmatpush1.msra.mxu0 0.0
    %2498 = vmatprep.subr.mxu0 0.0
    %2499 = vmatpush1.msra.mxu0 0.0
    %2500 = vmatprep.subr.mxu0 0.0
    %2501 = vmatpush1.msra.mxu0 0.0
    %2502 = vmatprep.subr.mxu0 0.0
    %2503 = vmatpush1.msra.mxu0 0.0
    %2504 = vmatprep.mubr.f32.mxu0 0.0
    %v2505 = vand.u32 %v2099, 4294901760
    %2506 = vmatmul.mubr.f32.gmra.mrb[0].mxu0 %v2505
    %v2507 = vpop.f32.mrb[0].mxu0
    %v2508 = vadd.f32 %v2425, %v2507
    %v2509 = vpop.f32.mrb[0].mxu0
    %2510 = vdwg.mxu0
    %2511 = vmatprep.subr.mxu0 0.0
    %v2512 = vand.u32 %v1606, 4294901760
    %2513 = vmatpush1.msra.mxu0 %v2512
    %2514 = vmatprep.subr.mxu0 0.0
    %v2515 = vand.u32 %v1607, 4294901760
    %2516 = vmatpush1.msra.mxu0 %v2515
    %2517 = vmatprep.subr.mxu0 0.0
    %v2518 = vand.u32 %v1608, 4294901760
    %2519 = vmatpush1.msra.mxu0 %v2518
    %2520 = vmatprep.subr.mxu0 0.0
    %v2521 = vand.u32 %v1609, 4294901760
    %2522 = vmatpush1.msra.mxu0 %v2521
    %2523 = vmatprep.subr.mxu0 0.0
    %2524 = vmatpush1.msra.mxu0 0.0
    %2525 = vmatprep.subr.mxu0 0.0
    %2526 = vmatpush1.msra.mxu0 0.0
    %2527 = vmatprep.subr.mxu0 0.0
    %2528 = vmatpush1.msra.mxu0 0.0
    %2529 = vmatprep.subr.mxu0 0.0
    %2530 = vmatpush1.msra.mxu0 0.0
    %2531 = vmatprep.subr.mxu0 0.0
    %2532 = vmatpush1.msra.mxu0 0.0
    %2533 = vmatprep.subr.mxu0 0.0
    %2534 = vmatpush1.msra.mxu0 0.0
    %2535 = vmatprep.subr.mxu0 0.0
    %2536 = vmatpush1.msra.mxu0 0.0
    %2537 = vmatprep.subr.mxu0 0.0
    %2538 = vmatpush1.msra.mxu0 0.0
    %2539 = vmatprep.subr.mxu0 0.0
    %2540 = vmatpush1.msra.mxu0 0.0
    %2541 = vmatprep.subr.mxu0 0.0
    %2542 = vmatpush1.msra.mxu0 0.0
    %2543 = vmatprep.subr.mxu0 0.0
    %2544 = vmatpush1.msra.mxu0 0.0
    %2545 = vmatprep.subr.mxu0 0.0
    %2546 = vmatpush1.msra.mxu0 0.0
    %2547 = vmatprep.subr.mxu0 0.0
    %2548 = vmatpush1.msra.mxu0 0.0
    %2549 = vmatprep.subr.mxu0 0.0
    %2550 = vmatpush1.msra.mxu0 0.0
    %2551 = vmatprep.subr.mxu0 0.0
    %2552 = vmatpush1.msra.mxu0 0.0
    %2553 = vmatprep.subr.mxu0 0.0
    %2554 = vmatpush1.msra.mxu0 0.0
    %2555 = vmatprep.subr.mxu0 0.0
    %2556 = vmatpush1.msra.mxu0 0.0
    %2557 = vmatprep.subr.mxu0 0.0
    %2558 = vmatpush1.msra.mxu0 0.0
    %2559 = vmatprep.subr.mxu0 0.0
    %2560 = vmatpush1.msra.mxu0 0.0
    %2561 = vmatprep.subr.mxu0 0.0
    %2562 = vmatpush1.msra.mxu0 0.0
    %2563 = vmatprep.subr.mxu0 0.0
    %2564 = vmatpush1.msra.mxu0 0.0
    %2565 = vmatprep.subr.mxu0 0.0
    %2566 = vmatpush1.msra.mxu0 0.0
    %2567 = vmatprep.subr.mxu0 0.0
    %2568 = vmatpush1.msra.mxu0 0.0
    %2569 = vmatprep.subr.mxu0 0.0
    %2570 = vmatpush1.msra.mxu0 0.0
    %2571 = vmatprep.subr.mxu0 0.0
    %2572 = vmatpush1.msra.mxu0 0.0
    %2573 = vmatprep.subr.mxu0 0.0
    %2574 = vmatpush1.msra.mxu0 0.0
    %2575 = vmatprep.subr.mxu0 0.0
    %2576 = vmatpush1.msra.mxu0 0.0
    %2577 = vmatprep.subr.mxu0 0.0
    %2578 = vmatpush1.msra.mxu0 0.0
    %2579 = vmatprep.mubr.f32.mxu0 0.0
    %v2580 = vand.u32 %v2099, 4294901760
    %2581 = vmatmul.mubr.f32.gmra.mrb[0].mxu0 %v2580
    %v2582 = vpop.f32.mrb[0].mxu0
    %v2583 = vadd.f32 %v2508, %v2582
    %v2584 = vpop.f32.mrb[0].mxu0
    %2585 = vdwg.mxu0
    %v2586 = vld [vmem:[%s4] sm:$0xff]
    %v2587 = vld [vmem:[%s4 + $0x8] sm:$0xff]
    %v2588 = vld [vmem:[%s4 + $0x10] sm:$0xff]
    %v2589 = vld [vmem:[%s4 + $0x18] sm:$0xff]
    %v2590 = vlaneseq
    %v2591 = vshrl.u32 %v2590, 7
    %v2592 = vsub.s32 0, %v2591
    %v2593 = vrot.slane %v34, %v2592
    %v2595 = vsel %vm49, %v2095, 0
    %v2598 = vsel %vm49, %v2583, 0
    %2600 = vmatprep.subr.mxu0 0.0
    %v2601 = vand.u32 %v2586, 4294901760
    %2602 = vmatpush1.msra.mxu0 %v2601
    %2603 = vmatprep.subr.mxu0 0.0
    %v2604 = vand.u32 %v2587, 4294901760
    %2605 = vmatpush1.msra.mxu0 %v2604
    %2606 = vmatprep.subr.mxu0 0.0
    %v2607 = vand.u32 %v2588, 4294901760
    %2608 = vmatpush1.msra.mxu0 %v2607
    %2609 = vmatprep.subr.mxu0 0.0
    %v2610 = vand.u32 %v2589, 4294901760
    %2611 = vmatpush1.msra.mxu0 %v2610
    %2612 = vmatprep.subr.mxu0 0.0
    %2613 = vmatpush1.msra.mxu0 0.0
    %2614 = vmatprep.subr.mxu0 0.0
    %2615 = vmatpush1.msra.mxu0 0.0
    %2616 = vmatprep.subr.mxu0 0.0
    %2617 = vmatpush1.msra.mxu0 0.0
    %2618 = vmatprep.subr.mxu0 0.0
    %2619 = vmatpush1.msra.mxu0 0.0
    %2620 = vmatprep.subr.mxu0 0.0
    %2621 = vmatpush1.msra.mxu0 0.0
    %2622 = vmatprep.subr.mxu0 0.0
    %2623 = vmatpush1.msra.mxu0 0.0
    %2624 = vmatprep.subr.mxu0 0.0
    %2625 = vmatpush1.msra.mxu0 0.0
    %2626 = vmatprep.subr.mxu0 0.0
    %2627 = vmatpush1.msra.mxu0 0.0
    %2628 = vmatprep.subr.mxu0 0.0
    %2629 = vmatpush1.msra.mxu0 0.0
    %2630 = vmatprep.subr.mxu0 0.0
    %2631 = vmatpush1.msra.mxu0 0.0
    %2632 = vmatprep.subr.mxu0 0.0
    %2633 = vmatpush1.msra.mxu0 0.0
    %2634 = vmatprep.subr.mxu0 0.0
    %2635 = vmatpush1.msra.mxu0 0.0
    %2636 = vmatprep.subr.mxu0 0.0
    %2637 = vmatpush1.msra.mxu0 0.0
    %2638 = vmatprep.subr.mxu0 0.0
    %2639 = vmatpush1.msra.mxu0 0.0
    %2640 = vmatprep.subr.mxu0 0.0
    %2641 = vmatpush1.msra.mxu0 0.0
    %2642 = vmatprep.subr.mxu0 0.0
    %2643 = vmatpush1.msra.mxu0 0.0
    %2644 = vmatprep.subr.mxu0 0.0
    %2645 = vmatpush1.msra.mxu0 0.0
    %2646 = vmatprep.subr.mxu0 0.0
    %2647 = vmatpush1.msra.mxu0 0.0
    %2648 = vmatprep.subr.mxu0 0.0
    %2649 = vmatpush1.msra.mxu0 0.0
    %2650 = vmatprep.subr.mxu0 0.0
    %2651 = vmatpush1.msra.mxu0 0.0
    %2652 = vmatprep.subr.mxu0 0.0
    %2653 = vmatpush1.msra.mxu0 0.0
    %2654 = vmatprep.subr.mxu0 0.0
    %2655 = vmatpush1.msra.mxu0 0.0
    %2656 = vmatprep.subr.mxu0 0.0
    %2657 = vmatpush1.msra.mxu0 0.0
    %2658 = vmatprep.subr.mxu0 0.0
    %2659 = vmatpush1.msra.mxu0 0.0
    %2660 = vmatprep.subr.mxu0 0.0
    %2661 = vmatpush1.msra.mxu0 0.0
    %2662 = vmatprep.subr.mxu0 0.0
    %2663 = vmatpush1.msra.mxu0 0.0
    %2664 = vmatprep.subr.mxu0 0.0
    %2665 = vmatpush1.msra.mxu0 0.0
    %2666 = vmatprep.subr.mxu0 0.0
    %2667 = vmatpush1.msra.mxu0 0.0
    %2668 = vmatprep.mubr.f32.mxu0 0.0
    %v2669 = vand.u32 %v2595, 4294901760
    %v2670 = vsub.f32 %v2595, %v2669
    %v2671 = vand.u32 %v2670, 4294901760
    %v2672 = vsub.f32 %v2670, %v2671
    %v2673 = vand.u32 %v2672, 4294901760
    %2674 = vmatmul.mubr.f32.gmra.mrb[0].mxu0 %v2673
    %v2675 = vpop.f32.mrb[0].mxu0
    %v2676 = vadd.f32 %v2593, %v2675
    %v2677 = vpop.f32.mrb[0].mxu0
    %2678 = vmatprep.mubr.f32.mxu0 0.0
    %v2679 = vand.u32 %v2598, 4294901760
    %v2680 = vsub.f32 %v2598, %v2679
    %v2681 = vand.u32 %v2680, 4294901760
    %v2682 = vsub.f32 %v2680, %v2681
    %v2683 = vand.u32 %v2682, 4294901760
    %2684 = vmatmul.mubr.f32.gmra.mrb[0].mxu0 %v2683
    %v2685 = vpop.f32.mrb[0].mxu0
    %v2686 = vadd.f32 %v2593, %v2685
    %v2687 = vpop.f32.mrb[0].mxu0
    %2688 = vdwg.mxu0
    %2689 = vmatprep.subr.mxu0 0.0
    %v2690 = vand.u32 %v2586, 4294901760
    %v2691 = vsub.f32 %v2586, %v2690
    %v2692 = vand.u32 %v2691, 4294901760
    %v2693 = vsub.f32 %v2691, %v2692
    %v2694 = vand.u32 %v2693, 4294901760
    %2695 = vmatpush1.msra.mxu0 %v2694
    %2696 = vmatprep.subr.mxu0 0.0
    %v2697 = vand.u32 %v2587, 4294901760
    %v2698 = vsub.f32 %v2587, %v2697
    %v2699 = vand.u32 %v2698, 4294901760
    %v2700 = vsub.f32 %v2698, %v2699
    %v2701 = vand.u32 %v2700, 4294901760
    %2702 = vmatpush1.msra.mxu0 %v2701
    %2703 = vmatprep.subr.mxu0 0.0
    %v2704 = vand.u32 %v2588, 4294901760
    %v2705 = vsub.f32 %v2588, %v2704
    %v2706 = vand.u32 %v2705, 4294901760
    %v2707 = vsub.f32 %v2705, %v2706
    %v2708 = vand.u32 %v2707, 4294901760
    %2709 = vmatpush1.msra.mxu0 %v2708
    %2710 = vmatprep.subr.mxu0 0.0
    %v2711 = vand.u32 %v2589, 4294901760
    %v2712 = vsub.f32 %v2589, %v2711
    %v2713 = vand.u32 %v2712, 4294901760
    %v2714 = vsub.f32 %v2712, %v2713
    %v2715 = vand.u32 %v2714, 4294901760
    %2716 = vmatpush1.msra.mxu0 %v2715
    %2717 = vmatprep.subr.mxu0 0.0
    %2718 = vmatpush1.msra.mxu0 0.0
    %2719 = vmatprep.subr.mxu0 0.0
    %2720 = vmatpush1.msra.mxu0 0.0
    %2721 = vmatprep.subr.mxu0 0.0
    %2722 = vmatpush1.msra.mxu0 0.0
    %2723 = vmatprep.subr.mxu0 0.0
    %2724 = vmatpush1.msra.mxu0 0.0
    %2725 = vmatprep.subr.mxu0 0.0
    %2726 = vmatpush1.msra.mxu0 0.0
    %2727 = vmatprep.subr.mxu0 0.0
    %2728 = vmatpush1.msra.mxu0 0.0
    %2729 = vmatprep.subr.mxu0 0.0
    %2730 = vmatpush1.msra.mxu0 0.0
    %2731 = vmatprep.subr.mxu0 0.0
    %2732 = vmatpush1.msra.mxu0 0.0
    %2733 = vmatprep.subr.mxu0 0.0
    %2734 = vmatpush1.msra.mxu0 0.0
    %2735 = vmatprep.subr.mxu0 0.0
    %2736 = vmatpush1.msra.mxu0 0.0
    %2737 = vmatprep.subr.mxu0 0.0
    %2738 = vmatpush1.msra.mxu0 0.0
    %2739 = vmatprep.subr.mxu0 0.0
    %2740 = vmatpush1.msra.mxu0 0.0
    %2741 = vmatprep.subr.mxu0 0.0
    %2742 = vmatpush1.msra.mxu0 0.0
    %2743 = vmatprep.subr.mxu0 0.0
    %2744 = vmatpush1.msra.mxu0 0.0
    %2745 = vmatprep.subr.mxu0 0.0
    %2746 = vmatpush1.msra.mxu0 0.0
    %2747 = vmatprep.subr.mxu0 0.0
    %2748 = vmatpush1.msra.mxu0 0.0
    %2749 = vmatprep.subr.mxu0 0.0
    %2750 = vmatpush1.msra.mxu0 0.0
    %2751 = vmatprep.subr.mxu0 0.0
    %2752 = vmatpush1.msra.mxu0 0.0
    %2753 = vmatprep.subr.mxu0 0.0
    %2754 = vmatpush1.msra.mxu0 0.0
    %2755 = vmatprep.subr.mxu0 0.0
    %2756 = vmatpush1.msra.mxu0 0.0
    %2757 = vmatprep.subr.mxu0 0.0
    %2758 = vmatpush1.msra.mxu0 0.0
    %2759 = vmatprep.subr.mxu0 0.0
    %2760 = vmatpush1.msra.mxu0 0.0
    %2761 = vmatprep.subr.mxu0 0.0
    %2762 = vmatpush1.msra.mxu0 0.0
    %2763 = vmatprep.subr.mxu0 0.0
    %2764 = vmatpush1.msra.mxu0 0.0
    %2765 = vmatprep.subr.mxu0 0.0
    %2766 = vmatpush1.msra.mxu0 0.0
    %2767 = vmatprep.subr.mxu0 0.0
    %2768 = vmatpush1.msra.mxu0 0.0
    %2769 = vmatprep.subr.mxu0 0.0
    %2770 = vmatpush1.msra.mxu0 0.0
    %2771 = vmatprep.subr.mxu0 0.0
    %2772 = vmatpush1.msra.mxu0 0.0
    %2773 = vmatprep.mubr.f32.mxu0 0.0
    %v2774 = vand.u32 %v2595, 4294901760
    %2775 = vmatmul.mubr.f32.gmra.mrb[0].mxu0 %v2774
    %v2776 = vpop.f32.mrb[0].mxu0
    %v2777 = vadd.f32 %v2676, %v2776
    %v2778 = vpop.f32.mrb[0].mxu0
    %2779 = vmatprep.mubr.f32.mxu0 0.0
    %v2780 = vand.u32 %v2598, 4294901760
    %2781 = vmatmul.mubr.f32.gmra.mrb[0].mxu0 %v2780
    %v2782 = vpop.f32.mrb[0].mxu0
    %v2783 = vadd.f32 %v2686, %v2782
    %v2784 = vpop.f32.mrb[0].mxu0
    %2785 = vdwg.mxu0
    %2786 = vmatprep.subr.mxu0 0.0
    %v2787 = vand.u32 %v2586, 4294901760
    %v2788 = vsub.f32 %v2586, %v2787
    %2789 = vmatpush1.msra.mxu0 %v2788
    %2790 = vmatprep.subr.mxu0 0.0
    %v2791 = vand.u32 %v2587, 4294901760
    %v2792 = vsub.f32 %v2587, %v2791
    %2793 = vmatpush1.msra.mxu0 %v2792
    %2794 = vmatprep.subr.mxu0 0.0
    %v2795 = vand.u32 %v2588, 4294901760
    %v2796 = vsub.f32 %v2588, %v2795
    %2797 = vmatpush1.msra.mxu0 %v2796
    %2798 = vmatprep.subr.mxu0 0.0
    %v2799 = vand.u32 %v2589, 4294901760
    %v2800 = vsub.f32 %v2589, %v2799
    %2801 = vmatpush1.msra.mxu0 %v2800
    %2802 = vmatprep.subr.mxu0 0.0
    %2803 = vmatpush1.msra.mxu0 0.0
    %2804 = vmatprep.subr.mxu0 0.0
    %2805 = vmatpush1.msra.mxu0 0.0
    %2806 = vmatprep.subr.mxu0 0.0
    %2807 = vmatpush1.msra.mxu0 0.0
    %2808 = vmatprep.subr.mxu0 0.0
    %2809 = vmatpush1.msra.mxu0 0.0
    %2810 = vmatprep.subr.mxu0 0.0
    %2811 = vmatpush1.msra.mxu0 0.0
    %2812 = vmatprep.subr.mxu0 0.0
    %2813 = vmatpush1.msra.mxu0 0.0
    %2814 = vmatprep.subr.mxu0 0.0
    %2815 = vmatpush1.msra.mxu0 0.0
    %2816 = vmatprep.subr.mxu0 0.0
    %2817 = vmatpush1.msra.mxu0 0.0
    %2818 = vmatprep.subr.mxu0 0.0
    %2819 = vmatpush1.msra.mxu0 0.0
    %2820 = vmatprep.subr.mxu0 0.0
    %2821 = vmatpush1.msra.mxu0 0.0
    %2822 = vmatprep.subr.mxu0 0.0
    %2823 = vmatpush1.msra.mxu0 0.0
    %2824 = vmatprep.subr.mxu0 0.0
    %2825 = vmatpush1.msra.mxu0 0.0
    %2826 = vmatprep.subr.mxu0 0.0
    %2827 = vmatpush1.msra.mxu0 0.0
    %2828 = vmatprep.subr.mxu0 0.0
    %2829 = vmatpush1.msra.mxu0 0.0
    %2830 = vmatprep.subr.mxu0 0.0
    %2831 = vmatpush1.msra.mxu0 0.0
    %2832 = vmatprep.subr.mxu0 0.0
    %2833 = vmatpush1.msra.mxu0 0.0
    %2834 = vmatprep.subr.mxu0 0.0
    %2835 = vmatpush1.msra.mxu0 0.0
    %2836 = vmatprep.subr.mxu0 0.0
    %2837 = vmatpush1.msra.mxu0 0.0
    %2838 = vmatprep.subr.mxu0 0.0
    %2839 = vmatpush1.msra.mxu0 0.0
    %2840 = vmatprep.subr.mxu0 0.0
    %2841 = vmatpush1.msra.mxu0 0.0
    %2842 = vmatprep.subr.mxu0 0.0
    %2843 = vmatpush1.msra.mxu0 0.0
    %2844 = vmatprep.subr.mxu0 0.0
    %2845 = vmatpush1.msra.mxu0 0.0
    %2846 = vmatprep.subr.mxu0 0.0
    %2847 = vmatpush1.msra.mxu0 0.0
    %2848 = vmatprep.subr.mxu0 0.0
    %2849 = vmatpush1.msra.mxu0 0.0
    %2850 = vmatprep.subr.mxu0 0.0
    %2851 = vmatpush1.msra.mxu0 0.0
    %2852 = vmatprep.subr.mxu0 0.0
    %2853 = vmatpush1.msra.mxu0 0.0
    %2854 = vmatprep.subr.mxu0 0.0
    %2855 = vmatpush1.msra.mxu0 0.0
    %2856 = vmatprep.subr.mxu0 0.0
    %2857 = vmatpush1.msra.mxu0 0.0
    %2858 = vmatprep.mubr.f32.mxu0 0.0
    %v2859 = vand.u32 %v2595, 4294901760
    %v2860 = vsub.f32 %v2595, %v2859
    %2861 = vmatmul.mubr.f32.gmra.mrb[0].mxu0 %v2860
    %v2862 = vpop.f32.mrb[0].mxu0
    %v2863 = vadd.f32 %v2777, %v2862
    %v2864 = vpop.f32.mrb[0].mxu0
    %2865 = vmatprep.mubr.f32.mxu0 0.0
    %v2866 = vand.u32 %v2598, 4294901760
    %v2867 = vsub.f32 %v2598, %v2866
    %2868 = vmatmul.mubr.f32.gmra.mrb[0].mxu0 %v2867
    %v2869 = vpop.f32.mrb[0].mxu0
    %v2870 = vadd.f32 %v2783, %v2869
    %v2871 = vpop.f32.mrb[0].mxu0
    %2872 = vdwg.mxu0
    %2873 = vmatprep.subr.mxu0 0.0
    %v2874 = vand.u32 %v2586, 4294901760
    %2875 = vmatpush1.msra.mxu0 %v2874
    %2876 = vmatprep.subr.mxu0 0.0
    %v2877 = vand.u32 %v2587, 4294901760
    %2878 = vmatpush1.msra.mxu0 %v2877
    %2879 = vmatprep.subr.mxu0 0.0
    %v2880 = vand.u32 %v2588, 4294901760
    %2881 = vmatpush1.msra.mxu0 %v2880
    %2882 = vmatprep.subr.mxu0 0.0
    %v2883 = vand.u32 %v2589, 4294901760
    %2884 = vmatpush1.msra.mxu0 %v2883
    %2885 = vmatprep.subr.mxu0 0.0
    %2886 = vmatpush1.msra.mxu0 0.0
    %2887 = vmatprep.subr.mxu0 0.0
    %2888 = vmatpush1.msra.mxu0 0.0
    %2889 = vmatprep.subr.mxu0 0.0
    %2890 = vmatpush1.msra.mxu0 0.0
    %2891 = vmatprep.subr.mxu0 0.0
    %2892 = vmatpush1.msra.mxu0 0.0
    %2893 = vmatprep.subr.mxu0 0.0
    %2894 = vmatpush1.msra.mxu0 0.0
    %2895 = vmatprep.subr.mxu0 0.0
    %2896 = vmatpush1.msra.mxu0 0.0
    %2897 = vmatprep.subr.mxu0 0.0
    %2898 = vmatpush1.msra.mxu0 0.0
    %2899 = vmatprep.subr.mxu0 0.0
    %2900 = vmatpush1.msra.mxu0 0.0
    %2901 = vmatprep.subr.mxu0 0.0
    %2902 = vmatpush1.msra.mxu0 0.0
    %2903 = vmatprep.subr.mxu0 0.0
    %2904 = vmatpush1.msra.mxu0 0.0
    %2905 = vmatprep.subr.mxu0 0.0
    %2906 = vmatpush1.msra.mxu0 0.0
    %2907 = vmatprep.subr.mxu0 0.0
    %2908 = vmatpush1.msra.mxu0 0.0
    %2909 = vmatprep.subr.mxu0 0.0
    %2910 = vmatpush1.msra.mxu0 0.0
    %2911 = vmatprep.subr.mxu0 0.0
    %2912 = vmatpush1.msra.mxu0 0.0
    %2913 = vmatprep.subr.mxu0 0.0
    %2914 = vmatpush1.msra.mxu0 0.0
    %2915 = vmatprep.subr.mxu0 0.0
    %2916 = vmatpush1.msra.mxu0 0.0
    %2917 = vmatprep.subr.mxu0 0.0
    %2918 = vmatpush1.msra.mxu0 0.0
    %2919 = vmatprep.subr.mxu0 0.0
    %2920 = vmatpush1.msra.mxu0 0.0
    %2921 = vmatprep.subr.mxu0 0.0
    %2922 = vmatpush1.msra.mxu0 0.0
    %2923 = vmatprep.subr.mxu0 0.0
    %2924 = vmatpush1.msra.mxu0 0.0
    %2925 = vmatprep.subr.mxu0 0.0
    %2926 = vmatpush1.msra.mxu0 0.0
    %2927 = vmatprep.subr.mxu0 0.0
    %2928 = vmatpush1.msra.mxu0 0.0
    %2929 = vmatprep.subr.mxu0 0.0
    %2930 = vmatpush1.msra.mxu0 0.0
    %2931 = vmatprep.subr.mxu0 0.0
    %2932 = vmatpush1.msra.mxu0 0.0
    %2933 = vmatprep.subr.mxu0 0.0
    %2934 = vmatpush1.msra.mxu0 0.0
    %2935 = vmatprep.subr.mxu0 0.0
    %2936 = vmatpush1.msra.mxu0 0.0
    %2937 = vmatprep.subr.mxu0 0.0
    %2938 = vmatpush1.msra.mxu0 0.0
    %2939 = vmatprep.subr.mxu0 0.0
    %2940 = vmatpush1.msra.mxu0 0.0
    %2941 = vmatprep.mubr.f32.mxu0 0.0
    %v2942 = vand.u32 %v2595, 4294901760
    %v2943 = vsub.f32 %v2595, %v2942
    %v2944 = vand.u32 %v2943, 4294901760
    %2945 = vmatmul.mubr.f32.gmra.mrb[0].mxu0 %v2944
    %v2946 = vpop.f32.mrb[0].mxu0
    %v2947 = vadd.f32 %v2863, %v2946
    %v2948 = vpop.f32.mrb[0].mxu0
    %2949 = vmatprep.mubr.f32.mxu0 0.0
    %v2950 = vand.u32 %v2598, 4294901760
    %v2951 = vsub.f32 %v2598, %v2950
    %v2952 = vand.u32 %v2951, 4294901760
    %2953 = vmatmul.mubr.f32.gmra.mrb[0].mxu0 %v2952
    %v2954 = vpop.f32.mrb[0].mxu0
    %v2955 = vadd.f32 %v2870, %v2954
    %v2956 = vpop.f32.mrb[0].mxu0
    %2957 = vdwg.mxu0
    %2958 = vmatprep.subr.mxu0 0.0
    %v2959 = vand.u32 %v2586, 4294901760
    %v2960 = vsub.f32 %v2586, %v2959
    %v2961 = vand.u32 %v2960, 4294901760
    %2962 = vmatpush1.msra.mxu0 %v2961
    %2963 = vmatprep.subr.mxu0 0.0
    %v2964 = vand.u32 %v2587, 4294901760
    %v2965 = vsub.f32 %v2587, %v2964
    %v2966 = vand.u32 %v2965, 4294901760
    %2967 = vmatpush1.msra.mxu0 %v2966
    %2968 = vmatprep.subr.mxu0 0.0
    %v2969 = vand.u32 %v2588, 4294901760
    %v2970 = vsub.f32 %v2588, %v2969
    %v2971 = vand.u32 %v2970, 4294901760
    %2972 = vmatpush1.msra.mxu0 %v2971
    %2973 = vmatprep.subr.mxu0 0.0
    %v2974 = vand.u32 %v2589, 4294901760
    %v2975 = vsub.f32 %v2589, %v2974
    %v2976 = vand.u32 %v2975, 4294901760
    %2977 = vmatpush1.msra.mxu0 %v2976
    %2978 = vmatprep.subr.mxu0 0.0
    %2979 = vmatpush1.msra.mxu0 0.0
    %2980 = vmatprep.subr.mxu0 0.0
    %2981 = vmatpush1.msra.mxu0 0.0
    %2982 = vmatprep.subr.mxu0 0.0
    %2983 = vmatpush1.msra.mxu0 0.0
    %2984 = vmatprep.subr.mxu0 0.0
    %2985 = vmatpush1.msra.mxu0 0.0
    %2986 = vmatprep.subr.mxu0 0.0
    %2987 = vmatpush1.msra.mxu0 0.0
    %2988 = vmatprep.subr.mxu0 0.0
    %2989 = vmatpush1.msra.mxu0 0.0
    %2990 = vmatprep.subr.mxu0 0.0
    %2991 = vmatpush1.msra.mxu0 0.0
    %2992 = vmatprep.subr.mxu0 0.0
    %2993 = vmatpush1.msra.mxu0 0.0
    %2994 = vmatprep.subr.mxu0 0.0
    %2995 = vmatpush1.msra.mxu0 0.0
    %2996 = vmatprep.subr.mxu0 0.0
    %2997 = vmatpush1.msra.mxu0 0.0
    %2998 = vmatprep.subr.mxu0 0.0
    %2999 = vmatpush1.msra.mxu0 0.0
    %3000 = vmatprep.subr.mxu0 0.0
    %3001 = vmatpush1.msra.mxu0 0.0
    %3002 = vmatprep.subr.mxu0 0.0
    %3003 = vmatpush1.msra.mxu0 0.0
    %3004 = vmatprep.subr.mxu0 0.0
    %3005 = vmatpush1.msra.mxu0 0.0
    %3006 = vmatprep.subr.mxu0 0.0
    %3007 = vmatpush1.msra.mxu0 0.0
    %3008 = vmatprep.subr.mxu0 0.0
    %3009 = vmatpush1.msra.mxu0 0.0
    %3010 = vmatprep.subr.mxu0 0.0
    %3011 = vmatpush1.msra.mxu0 0.0
    %3012 = vmatprep.subr.mxu0 0.0
    %3013 = vmatpush1.msra.mxu0 0.0
    %3014 = vmatprep.subr.mxu0 0.0
    %3015 = vmatpush1.msra.mxu0 0.0
    %3016 = vmatprep.subr.mxu0 0.0
    %3017 = vmatpush1.msra.mxu0 0.0
    %3018 = vmatprep.subr.mxu0 0.0
    %3019 = vmatpush1.msra.mxu0 0.0
    %3020 = vmatprep.subr.mxu0 0.0
    %3021 = vmatpush1.msra.mxu0 0.0
    %3022 = vmatprep.subr.mxu0 0.0
    %3023 = vmatpush1.msra.mxu0 0.0
    %3024 = vmatprep.subr.mxu0 0.0
    %3025 = vmatpush1.msra.mxu0 0.0
    %3026 = vmatprep.subr.mxu0 0.0
    %3027 = vmatpush1.msra.mxu0 0.0
    %3028 = vmatprep.subr.mxu0 0.0
    %3029 = vmatpush1.msra.mxu0 0.0
    %3030 = vmatprep.subr.mxu0 0.0
    %3031 = vmatpush1.msra.mxu0 0.0
    %3032 = vmatprep.subr.mxu0 0.0
    %3033 = vmatpush1.msra.mxu0 0.0
    %3034 = vmatprep.mubr.f32.mxu0 0.0
    %v3035 = vand.u32 %v2595, 4294901760
    %3036 = vmatmul.mubr.f32.gmra.mrb[0].mxu0 %v3035
    %v3037 = vpop.f32.mrb[0].mxu0
    %v3038 = vadd.f32 %v2947, %v3037
    %v3039 = vpop.f32.mrb[0].mxu0
    %3040 = vmatprep.mubr.f32.mxu0 0.0
    %v3041 = vand.u32 %v2598, 4294901760
    %3042 = vmatmul.mubr.f32.gmra.mrb[0].mxu0 %v3041
    %v3043 = vpop.f32.mrb[0].mxu0
    %v3044 = vadd.f32 %v2955, %v3043
    %v3045 = vpop.f32.mrb[0].mxu0
    %3046 = vdwg.mxu0
    %3047 = vmatprep.subr.mxu0 0.0
    %v3048 = vand.u32 %v2586, 4294901760
    %3049 = vmatpush1.msra.mxu0 %v3048
    %3050 = vmatprep.subr.mxu0 0.0
    %v3051 = vand.u32 %v2587, 4294901760
    %3052 = vmatpush1.msra.mxu0 %v3051
    %3053 = vmatprep.subr.mxu0 0.0
    %v3054 = vand.u32 %v2588, 4294901760
    %3055 = vmatpush1.msra.mxu0 %v3054
    %3056 = vmatprep.subr.mxu0 0.0
    %v3057 = vand.u32 %v2589, 4294901760
    %3058 = vmatpush1.msra.mxu0 %v3057
    %3059 = vmatprep.subr.mxu0 0.0
    %3060 = vmatpush1.msra.mxu0 0.0
    %3061 = vmatprep.subr.mxu0 0.0
    %3062 = vmatpush1.msra.mxu0 0.0
    %3063 = vmatprep.subr.mxu0 0.0
    %3064 = vmatpush1.msra.mxu0 0.0
    %3065 = vmatprep.subr.mxu0 0.0
    %3066 = vmatpush1.msra.mxu0 0.0
    %3067 = vmatprep.subr.mxu0 0.0
    %3068 = vmatpush1.msra.mxu0 0.0
    %3069 = vmatprep.subr.mxu0 0.0
    %3070 = vmatpush1.msra.mxu0 0.0
    %3071 = vmatprep.subr.mxu0 0.0
    %3072 = vmatpush1.msra.mxu0 0.0
    %3073 = vmatprep.subr.mxu0 0.0
    %3074 = vmatpush1.msra.mxu0 0.0
    %3075 = vmatprep.subr.mxu0 0.0
    %3076 = vmatpush1.msra.mxu0 0.0
    %3077 = vmatprep.subr.mxu0 0.0
    %3078 = vmatpush1.msra.mxu0 0.0
    %3079 = vmatprep.subr.mxu0 0.0
    %3080 = vmatpush1.msra.mxu0 0.0
    %3081 = vmatprep.subr.mxu0 0.0
    %3082 = vmatpush1.msra.mxu0 0.0
    %3083 = vmatprep.subr.mxu0 0.0
    %3084 = vmatpush1.msra.mxu0 0.0
    %3085 = vmatprep.subr.mxu0 0.0
    %3086 = vmatpush1.msra.mxu0 0.0
    %3087 = vmatprep.subr.mxu0 0.0
    %3088 = vmatpush1.msra.mxu0 0.0
    %3089 = vmatprep.subr.mxu0 0.0
    %3090 = vmatpush1.msra.mxu0 0.0
    %3091 = vmatprep.subr.mxu0 0.0
    %3092 = vmatpush1.msra.mxu0 0.0
    %3093 = vmatprep.subr.mxu0 0.0
    %3094 = vmatpush1.msra.mxu0 0.0
    %3095 = vmatprep.subr.mxu0 0.0
    %3096 = vmatpush1.msra.mxu0 0.0
    %3097 = vmatprep.subr.mxu0 0.0
    %3098 = vmatpush1.msra.mxu0 0.0
    %3099 = vmatprep.subr.mxu0 0.0
    %3100 = vmatpush1.msra.mxu0 0.0
    %3101 = vmatprep.subr.mxu0 0.0
    %3102 = vmatpush1.msra.mxu0 0.0
    %3103 = vmatprep.subr.mxu0 0.0
    %3104 = vmatpush1.msra.mxu0 0.0
    %3105 = vmatprep.subr.mxu0 0.0
    %3106 = vmatpush1.msra.mxu0 0.0
    %3107 = vmatprep.subr.mxu0 0.0
    %3108 = vmatpush1.msra.mxu0 0.0
    %3109 = vmatprep.subr.mxu0 0.0
    %3110 = vmatpush1.msra.mxu0 0.0
    %3111 = vmatprep.subr.mxu0 0.0
    %3112 = vmatpush1.msra.mxu0 0.0
    %3113 = vmatprep.subr.mxu0 0.0
    %3114 = vmatpush1.msra.mxu0 0.0
    %3115 = vmatprep.mubr.f32.mxu0 0.0
    %v3116 = vand.u32 %v2595, 4294901760
    %3117 = vmatmul.mubr.f32.gmra.mrb[0].mxu0 %v3116
    %v3118 = vpop.f32.mrb[0].mxu0
    %v3119 = vadd.f32 %v3038, %v3118
    %v3120 = vpop.f32.mrb[0].mxu0
    %3121 = vmatprep.mubr.f32.mxu0 0.0
    %v3122 = vand.u32 %v2598, 4294901760
    %3123 = vmatmul.mubr.f32.gmra.mrb[0].mxu0 %v3122
    %v3124 = vpop.f32.mrb[0].mxu0
    %v3125 = vadd.f32 %v3044, %v3124
    %v3126 = vpop.f32.mrb[0].mxu0
    %3127 = vdwg.mxu0
    %v3128 = vadd.f32 %v3119, %v32
    %v3129 = vadd.f32 %v3125, %v33
    %v3130 = vsel %vm49, %v3128, 0.0
    %3131 = vadd.xlane.f32.xlu0 %v3130
    %v3132 = vpop.xlane.xlu0 %3131
    %v3133 = vsel %vm49, %v3129, 0.0
    %3134 = vadd.xlane.f32.xlu0 %v3133
    %v3135 = vpop.xlane.xlu0 %3134
    %v3136 = vrcp.pop 32.0
    %v3137 = vmul.f32 %v3132, %v3136
    %v3138 = vmul.f32 %v3135, %v3136
    %v3139 = vsub.f32 %v3128, %v3137
    %v3140 = vsub.f32 %v3129, %v3138
    %v3141 = vmul.f32 %v3139, %v3139
    %v3142 = vmul.f32 %v3140, %v3140
    %v3143 = vsel %vm49, %v3141, 0.0
    %3144 = vadd.xlane.f32.xlu0 %v3143
    %v3145 = vpop.xlane.xlu0 %3144
    %v3146 = vsel %vm49, %v3142, 0.0
    %3147 = vadd.xlane.f32.xlu0 %v3146
    %v3148 = vpop.xlane.xlu0 %3147
    %v3149 = vmul.f32 %v3145, %v3136
    %v3150 = vmul.f32 %v3148, %v3136
    %v3151 = vadd.f32 %v3149, 1e-05
    %v3152 = vadd.f32 %v3150, 1e-05
    %v3153 = vrsqrt.pop %v3151
    %v3154 = vrsqrt.pop %v3152
    %v3155 = vmul.f32 %v3139, %v3153
    %v3156 = vmul.f32 %v3140, %v3154
    %v3157 = vlaneseq
    %v3158 = vshrl.u32 %v3157, 7
    %v3159 = vsub.s32 0, %v3158
    %v3160 = vrot.slane %v35, %v3159
    %v3161 = vmul.f32 %v3155, %v3160
    %v3162 = vmul.f32 %v3156, %v3160
    %v3163 = vlaneseq
    %v3164 = vshrl.u32 %v3163, 7
    %v3165 = vsub.s32 0, %v3164
    %v3166 = vrot.slane %v36, %v3165
    %v3167 = vadd.f32 %v3161, %v3166
    %v3168 = vadd.f32 %v3162, %v3166
    %v3169 = vld [vmem:[%s5] sm:$0xff]
    %v3170 = vld [vmem:[%s5 + $0x8] sm:$0xff]
    %v3171 = vld [vmem:[%s5 + $0x10] sm:$0xff]
    %v3172 = vld [vmem:[%s5 + $0x18] sm:$0xff]
    %v3173 = vlaneseq
    %v3174 = vshrl.u32 %v3173, 7
    %v3175 = vsub.s32 0, %v3174
    %v3176 = vrot.slane %v40, %v3175
    %v3178 = vsel %vm49, %v3167, 0
    %v3181 = vsel %vm49, %v3168, 0
    %3183 = vmatprep.subr.mxu0 0.0
    %v3184 = vand.u32 %v3169, 4294901760
    %3185 = vmatpush1.msra.mxu0 %v3184
    %3186 = vmatprep.subr.mxu0 0.0
    %v3187 = vand.u32 %v3170, 4294901760
    %3188 = vmatpush1.msra.mxu0 %v3187
    %3189 = vmatprep.subr.mxu0 0.0
    %v3190 = vand.u32 %v3171, 4294901760
    %3191 = vmatpush1.msra.mxu0 %v3190
    %3192 = vmatprep.subr.mxu0 0.0
    %v3193 = vand.u32 %v3172, 4294901760
    %3194 = vmatpush1.msra.mxu0 %v3193
    %3195 = vmatprep.subr.mxu0 0.0
    %3196 = vmatpush1.msra.mxu0 0.0
    %3197 = vmatprep.subr.mxu0 0.0
    %3198 = vmatpush1.msra.mxu0 0.0
    %3199 = vmatprep.subr.mxu0 0.0
    %3200 = vmatpush1.msra.mxu0 0.0
    %3201 = vmatprep.subr.mxu0 0.0
    %3202 = vmatpush1.msra.mxu0 0.0
    %3203 = vmatprep.subr.mxu0 0.0
    %3204 = vmatpush1.msra.mxu0 0.0
    %3205 = vmatprep.subr.mxu0 0.0
    %3206 = vmatpush1.msra.mxu0 0.0
    %3207 = vmatprep.subr.mxu0 0.0
    %3208 = vmatpush1.msra.mxu0 0.0
    %3209 = vmatprep.subr.mxu0 0.0
    %3210 = vmatpush1.msra.mxu0 0.0
    %3211 = vmatprep.subr.mxu0 0.0
    %3212 = vmatpush1.msra.mxu0 0.0
    %3213 = vmatprep.subr.mxu0 0.0
    %3214 = vmatpush1.msra.mxu0 0.0
    %3215 = vmatprep.subr.mxu0 0.0
    %3216 = vmatpush1.msra.mxu0 0.0
    %3217 = vmatprep.subr.mxu0 0.0
    %3218 = vmatpush1.msra.mxu0 0.0
    %3219 = vmatprep.subr.mxu0 0.0
    %3220 = vmatpush1.msra.mxu0 0.0
    %3221 = vmatprep.subr.mxu0 0.0
    %3222 = vmatpush1.msra.mxu0 0.0
    %3223 = vmatprep.subr.mxu0 0.0
    %3224 = vmatpush1.msra.mxu0 0.0
    %3225 = vmatprep.subr.mxu0 0.0
    %3226 = vmatpush1.msra.mxu0 0.0
    %3227 = vmatprep.subr.mxu0 0.0
    %3228 = vmatpush1.msra.mxu0 0.0
    %3229 = vmatprep.subr.mxu0 0.0
    %3230 = vmatpush1.msra.mxu0 0.0
    %3231 = vmatprep.subr.mxu0 0.0
    %3232 = vmatpush1.msra.mxu0 0.0
    %3233 = vmatprep.subr.mxu0 0.0
    %3234 = vmatpush1.msra.mxu0 0.0
    %3235 = vmatprep.subr.mxu0 0.0
    %3236 = vmatpush1.msra.mxu0 0.0
    %3237 = vmatprep.subr.mxu0 0.0
    %3238 = vmatpush1.msra.mxu0 0.0
    %3239 = vmatprep.subr.mxu0 0.0
    %3240 = vmatpush1.msra.mxu0 0.0
    %3241 = vmatprep.subr.mxu0 0.0
    %3242 = vmatpush1.msra.mxu0 0.0
    %3243 = vmatprep.subr.mxu0 0.0
    %3244 = vmatpush1.msra.mxu0 0.0
    %3245 = vmatprep.subr.mxu0 0.0
    %3246 = vmatpush1.msra.mxu0 0.0
    %3247 = vmatprep.subr.mxu0 0.0
    %3248 = vmatpush1.msra.mxu0 0.0
    %3249 = vmatprep.subr.mxu0 0.0
    %3250 = vmatpush1.msra.mxu0 0.0
    %3251 = vmatprep.mubr.f32.mxu0 0.0
    %v3252 = vand.u32 %v3178, 4294901760
    %v3253 = vsub.f32 %v3178, %v3252
    %v3254 = vand.u32 %v3253, 4294901760
    %v3255 = vsub.f32 %v3253, %v3254
    %v3256 = vand.u32 %v3255, 4294901760
    %3257 = vmatmul.mubr.f32.gmra.mrb[0].mxu0 %v3256
    %v3258 = vpop.f32.mrb[0].mxu0
    %v3259 = vadd.f32 %v3176, %v3258
    %v3260 = vpop.f32.mrb[0].mxu0
    %3261 = vmatprep.mubr.f32.mxu0 0.0
    %v3262 = vand.u32 %v3181, 4294901760
    %v3263 = vsub.f32 %v3181, %v3262
    %v3264 = vand.u32 %v3263, 4294901760
    %v3265 = vsub.f32 %v3263, %v3264
    %v3266 = vand.u32 %v3265, 4294901760
    %3267 = vmatmul.mubr.f32.gmra.mrb[0].mxu0 %v3266
    %v3268 = vpop.f32.mrb[0].mxu0
    %v3269 = vadd.f32 %v3176, %v3268
    %v3270 = vpop.f32.mrb[0].mxu0
    %3271 = vdwg.mxu0
    %3272 = vmatprep.subr.mxu0 0.0
    %v3273 = vand.u32 %v3169, 4294901760
    %v3274 = vsub.f32 %v3169, %v3273
    %v3275 = vand.u32 %v3274, 4294901760
    %v3276 = vsub.f32 %v3274, %v3275
    %v3277 = vand.u32 %v3276, 4294901760
    %3278 = vmatpush1.msra.mxu0 %v3277
    %3279 = vmatprep.subr.mxu0 0.0
    %v3280 = vand.u32 %v3170, 4294901760
    %v3281 = vsub.f32 %v3170, %v3280
    %v3282 = vand.u32 %v3281, 4294901760
    %v3283 = vsub.f32 %v3281, %v3282
    %v3284 = vand.u32 %v3283, 4294901760
    %3285 = vmatpush1.msra.mxu0 %v3284
    %3286 = vmatprep.subr.mxu0 0.0
    %v3287 = vand.u32 %v3171, 4294901760
    %v3288 = vsub.f32 %v3171, %v3287
    %v3289 = vand.u32 %v3288, 4294901760
    %v3290 = vsub.f32 %v3288, %v3289
    %v3291 = vand.u32 %v3290, 4294901760
    %3292 = vmatpush1.msra.mxu0 %v3291
    %3293 = vmatprep.subr.mxu0 0.0
    %v3294 = vand.u32 %v3172, 4294901760
    %v3295 = vsub.f32 %v3172, %v3294
    %v3296 = vand.u32 %v3295, 4294901760
    %v3297 = vsub.f32 %v3295, %v3296
    %v3298 = vand.u32 %v3297, 4294901760
    %3299 = vmatpush1.msra.mxu0 %v3298
    %3300 = vmatprep.subr.mxu0 0.0
    %3301 = vmatpush1.msra.mxu0 0.0
    %3302 = vmatprep.subr.mxu0 0.0
    %3303 = vmatpush1.msra.mxu0 0.0
    %3304 = vmatprep.subr.mxu0 0.0
    %3305 = vmatpush1.msra.mxu0 0.0
    %3306 = vmatprep.subr.mxu0 0.0
    %3307 = vmatpush1.msra.mxu0 0.0
    %3308 = vmatprep.subr.mxu0 0.0
    %3309 = vmatpush1.msra.mxu0 0.0
    %3310 = vmatprep.subr.mxu0 0.0
    %3311 = vmatpush1.msra.mxu0 0.0
    %3312 = vmatprep.subr.mxu0 0.0
    %3313 = vmatpush1.msra.mxu0 0.0
    %3314 = vmatprep.subr.mxu0 0.0
    %3315 = vmatpush1.msra.mxu0 0.0
    %3316 = vmatprep.subr.mxu0 0.0
    %3317 = vmatpush1.msra.mxu0 0.0
    %3318 = vmatprep.subr.mxu0 0.0
    %3319 = vmatpush1.msra.mxu0 0.0
    %3320 = vmatprep.subr.mxu0 0.0
    %3321 = vmatpush1.msra.mxu0 0.0
    %3322 = vmatprep.subr.mxu0 0.0
    %3323 = vmatpush1.msra.mxu0 0.0
    %3324 = vmatprep.subr.mxu0 0.0
    %3325 = vmatpush1.msra.mxu0 0.0
    %3326 = vmatprep.subr.mxu0 0.0
    %3327 = vmatpush1.msra.mxu0 0.0
    %3328 = vmatprep.subr.mxu0 0.0
    %3329 = vmatpush1.msra.mxu0 0.0
    %3330 = vmatprep.subr.mxu0 0.0
    %3331 = vmatpush1.msra.mxu0 0.0
    %3332 = vmatprep.subr.mxu0 0.0
    %3333 = vmatpush1.msra.mxu0 0.0
    %3334 = vmatprep.subr.mxu0 0.0
    %3335 = vmatpush1.msra.mxu0 0.0
    %3336 = vmatprep.subr.mxu0 0.0
    %3337 = vmatpush1.msra.mxu0 0.0
    %3338 = vmatprep.subr.mxu0 0.0
    %3339 = vmatpush1.msra.mxu0 0.0
    %3340 = vmatprep.subr.mxu0 0.0
    %3341 = vmatpush1.msra.mxu0 0.0
    %3342 = vmatprep.subr.mxu0 0.0
    %3343 = vmatpush1.msra.mxu0 0.0
    %3344 = vmatprep.subr.mxu0 0.0
    %3345 = vmatpush1.msra.mxu0 0.0
    %3346 = vmatprep.subr.mxu0 0.0
    %3347 = vmatpush1.msra.mxu0 0.0
    %3348 = vmatprep.subr.mxu0 0.0
    %3349 = vmatpush1.msra.mxu0 0.0
    %3350 = vmatprep.subr.mxu0 0.0
    %3351 = vmatpush1.msra.mxu0 0.0
    %3352 = vmatprep.subr.mxu0 0.0
    %3353 = vmatpush1.msra.mxu0 0.0
    %3354 = vmatprep.subr.mxu0 0.0
    %3355 = vmatpush1.msra.mxu0 0.0
    %3356 = vmatprep.mubr.f32.mxu0 0.0
    %v3357 = vand.u32 %v3178, 4294901760
    %3358 = vmatmul.mubr.f32.gmra.mrb[0].mxu0 %v3357
    %v3359 = vpop.f32.mrb[0].mxu0
    %v3360 = vadd.f32 %v3259, %v3359
    %v3361 = vpop.f32.mrb[0].mxu0
    %3362 = vmatprep.mubr.f32.mxu0 0.0
    %v3363 = vand.u32 %v3181, 4294901760
    %3364 = vmatmul.mubr.f32.gmra.mrb[0].mxu0 %v3363
    %v3365 = vpop.f32.mrb[0].mxu0
    %v3366 = vadd.f32 %v3269, %v3365
    %v3367 = vpop.f32.mrb[0].mxu0
    %3368 = vdwg.mxu0
    %3369 = vmatprep.subr.mxu0 0.0
    %v3370 = vand.u32 %v3169, 4294901760
    %v3371 = vsub.f32 %v3169, %v3370
    %3372 = vmatpush1.msra.mxu0 %v3371
    %3373 = vmatprep.subr.mxu0 0.0
    %v3374 = vand.u32 %v3170, 4294901760
    %v3375 = vsub.f32 %v3170, %v3374
    %3376 = vmatpush1.msra.mxu0 %v3375
    %3377 = vmatprep.subr.mxu0 0.0
    %v3378 = vand.u32 %v3171, 4294901760
    %v3379 = vsub.f32 %v3171, %v3378
    %3380 = vmatpush1.msra.mxu0 %v3379
    %3381 = vmatprep.subr.mxu0 0.0
    %v3382 = vand.u32 %v3172, 4294901760
    %v3383 = vsub.f32 %v3172, %v3382
    %3384 = vmatpush1.msra.mxu0 %v3383
    %3385 = vmatprep.subr.mxu0 0.0
    %3386 = vmatpush1.msra.mxu0 0.0
    %3387 = vmatprep.subr.mxu0 0.0
    %3388 = vmatpush1.msra.mxu0 0.0
    %3389 = vmatprep.subr.mxu0 0.0
    %3390 = vmatpush1.msra.mxu0 0.0
    %3391 = vmatprep.subr.mxu0 0.0
    %3392 = vmatpush1.msra.mxu0 0.0
    %3393 = vmatprep.subr.mxu0 0.0
    %3394 = vmatpush1.msra.mxu0 0.0
    %3395 = vmatprep.subr.mxu0 0.0
    %3396 = vmatpush1.msra.mxu0 0.0
    %3397 = vmatprep.subr.mxu0 0.0
    %3398 = vmatpush1.msra.mxu0 0.0
    %3399 = vmatprep.subr.mxu0 0.0
    %3400 = vmatpush1.msra.mxu0 0.0
    %3401 = vmatprep.subr.mxu0 0.0
    %3402 = vmatpush1.msra.mxu0 0.0
    %3403 = vmatprep.subr.mxu0 0.0
    %3404 = vmatpush1.msra.mxu0 0.0
    %3405 = vmatprep.subr.mxu0 0.0
    %3406 = vmatpush1.msra.mxu0 0.0
    %3407 = vmatprep.subr.mxu0 0.0
    %3408 = vmatpush1.msra.mxu0 0.0
    %3409 = vmatprep.subr.mxu0 0.0
    %3410 = vmatpush1.msra.mxu0 0.0
    %3411 = vmatprep.subr.mxu0 0.0
    %3412 = vmatpush1.msra.mxu0 0.0
    %3413 = vmatprep.subr.mxu0 0.0
    %3414 = vmatpush1.msra.mxu0 0.0
    %3415 = vmatprep.subr.mxu0 0.0
    %3416 = vmatpush1.msra.mxu0 0.0
    %3417 = vmatprep.subr.mxu0 0.0
    %3418 = vmatpush1.msra.mxu0 0.0
    %3419 = vmatprep.subr.mxu0 0.0
    %3420 = vmatpush1.msra.mxu0 0.0
    %3421 = vmatprep.subr.mxu0 0.0
    %3422 = vmatpush1.msra.mxu0 0.0
    %3423 = vmatprep.subr.mxu0 0.0
    %3424 = vmatpush1.msra.mxu0 0.0
    %3425 = vmatprep.subr.mxu0 0.0
    %3426 = vmatpush1.msra.mxu0 0.0
    %3427 = vmatprep.subr.mxu0 0.0
    %3428 = vmatpush1.msra.mxu0 0.0
    %3429 = vmatprep.subr.mxu0 0.0
    %3430 = vmatpush1.msra.mxu0 0.0
    %3431 = vmatprep.subr.mxu0 0.0
    %3432 = vmatpush1.msra.mxu0 0.0
    %3433 = vmatprep.subr.mxu0 0.0
    %3434 = vmatpush1.msra.mxu0 0.0
    %3435 = vmatprep.subr.mxu0 0.0
    %3436 = vmatpush1.msra.mxu0 0.0
    %3437 = vmatprep.subr.mxu0 0.0
    %3438 = vmatpush1.msra.mxu0 0.0
    %3439 = vmatprep.subr.mxu0 0.0
    %3440 = vmatpush1.msra.mxu0 0.0
    %3441 = vmatprep.mubr.f32.mxu0 0.0
    %v3442 = vand.u32 %v3178, 4294901760
    %v3443 = vsub.f32 %v3178, %v3442
    %3444 = vmatmul.mubr.f32.gmra.mrb[0].mxu0 %v3443
    %v3445 = vpop.f32.mrb[0].mxu0
    %v3446 = vadd.f32 %v3360, %v3445
    %v3447 = vpop.f32.mrb[0].mxu0
    %3448 = vmatprep.mubr.f32.mxu0 0.0
    %v3449 = vand.u32 %v3181, 4294901760
    %v3450 = vsub.f32 %v3181, %v3449
    %3451 = vmatmul.mubr.f32.gmra.mrb[0].mxu0 %v3450
    %v3452 = vpop.f32.mrb[0].mxu0
    %v3453 = vadd.f32 %v3366, %v3452
    %v3454 = vpop.f32.mrb[0].mxu0
    %3455 = vdwg.mxu0
    %3456 = vmatprep.subr.mxu0 0.0
    %v3457 = vand.u32 %v3169, 4294901760
    %3458 = vmatpush1.msra.mxu0 %v3457
    %3459 = vmatprep.subr.mxu0 0.0
    %v3460 = vand.u32 %v3170, 4294901760
    %3461 = vmatpush1.msra.mxu0 %v3460
    %3462 = vmatprep.subr.mxu0 0.0
    %v3463 = vand.u32 %v3171, 4294901760
    %3464 = vmatpush1.msra.mxu0 %v3463
    %3465 = vmatprep.subr.mxu0 0.0
    %v3466 = vand.u32 %v3172, 4294901760
    %3467 = vmatpush1.msra.mxu0 %v3466
    %3468 = vmatprep.subr.mxu0 0.0
    %3469 = vmatpush1.msra.mxu0 0.0
    %3470 = vmatprep.subr.mxu0 0.0
    %3471 = vmatpush1.msra.mxu0 0.0
    %3472 = vmatprep.subr.mxu0 0.0
    %3473 = vmatpush1.msra.mxu0 0.0
    %3474 = vmatprep.subr.mxu0 0.0
    %3475 = vmatpush1.msra.mxu0 0.0
    %3476 = vmatprep.subr.mxu0 0.0
    %3477 = vmatpush1.msra.mxu0 0.0
    %3478 = vmatprep.subr.mxu0 0.0
    %3479 = vmatpush1.msra.mxu0 0.0
    %3480 = vmatprep.subr.mxu0 0.0
    %3481 = vmatpush1.msra.mxu0 0.0
    %3482 = vmatprep.subr.mxu0 0.0
    %3483 = vmatpush1.msra.mxu0 0.0
    %3484 = vmatprep.subr.mxu0 0.0
    %3485 = vmatpush1.msra.mxu0 0.0
    %3486 = vmatprep.subr.mxu0 0.0
    %3487 = vmatpush1.msra.mxu0 0.0
    %3488 = vmatprep.subr.mxu0 0.0
    %3489 = vmatpush1.msra.mxu0 0.0
    %3490 = vmatprep.subr.mxu0 0.0
    %3491 = vmatpush1.msra.mxu0 0.0
    %3492 = vmatprep.subr.mxu0 0.0
    %3493 = vmatpush1.msra.mxu0 0.0
    %3494 = vmatprep.subr.mxu0 0.0
    %3495 = vmatpush1.msra.mxu0 0.0
    %3496 = vmatprep.subr.mxu0 0.0
    %3497 = vmatpush1.msra.mxu0 0.0
    %3498 = vmatprep.subr.mxu0 0.0
    %3499 = vmatpush1.msra.mxu0 0.0
    %3500 = vmatprep.subr.mxu0 0.0
    %3501 = vmatpush1.msra.mxu0 0.0
    %3502 = vmatprep.subr.mxu0 0.0
    %3503 = vmatpush1.msra.mxu0 0.0
    %3504 = vmatprep.subr.mxu0 0.0
    %3505 = vmatpush1.msra.mxu0 0.0
    %3506 = vmatprep.subr.mxu0 0.0
    %3507 = vmatpush1.msra.mxu0 0.0
    %3508 = vmatprep.subr.mxu0 0.0
    %3509 = vmatpush1.msra.mxu0 0.0
    %3510 = vmatprep.subr.mxu0 0.0
    %3511 = vmatpush1.msra.mxu0 0.0
    %3512 = vmatprep.subr.mxu0 0.0
    %3513 = vmatpush1.msra.mxu0 0.0
    %3514 = vmatprep.subr.mxu0 0.0
    %3515 = vmatpush1.msra.mxu0 0.0
    %3516 = vmatprep.subr.mxu0 0.0
    %3517 = vmatpush1.msra.mxu0 0.0
    %3518 = vmatprep.subr.mxu0 0.0
    %3519 = vmatpush1.msra.mxu0 0.0
    %3520 = vmatprep.subr.mxu0 0.0
    %3521 = vmatpush1.msra.mxu0 0.0
    %3522 = vmatprep.subr.mxu0 0.0
    %3523 = vmatpush1.msra.mxu0 0.0
    %3524 = vmatprep.mubr.f32.mxu0 0.0
    %v3525 = vand.u32 %v3178, 4294901760
    %v3526 = vsub.f32 %v3178, %v3525
    %v3527 = vand.u32 %v3526, 4294901760
    %3528 = vmatmul.mubr.f32.gmra.mrb[0].mxu0 %v3527
    %v3529 = vpop.f32.mrb[0].mxu0
    %v3530 = vadd.f32 %v3446, %v3529
    %v3531 = vpop.f32.mrb[0].mxu0
    %3532 = vmatprep.mubr.f32.mxu0 0.0
    %v3533 = vand.u32 %v3181, 4294901760
    %v3534 = vsub.f32 %v3181, %v3533
    %v3535 = vand.u32 %v3534, 4294901760
    %3536 = vmatmul.mubr.f32.gmra.mrb[0].mxu0 %v3535
    %v3537 = vpop.f32.mrb[0].mxu0
    %v3538 = vadd.f32 %v3453, %v3537
    %v3539 = vpop.f32.mrb[0].mxu0
    %3540 = vdwg.mxu0
    %3541 = vmatprep.subr.mxu0 0.0
    %v3542 = vand.u32 %v3169, 4294901760
    %v3543 = vsub.f32 %v3169, %v3542
    %v3544 = vand.u32 %v3543, 4294901760
    %3545 = vmatpush1.msra.mxu0 %v3544
    %3546 = vmatprep.subr.mxu0 0.0
    %v3547 = vand.u32 %v3170, 4294901760
    %v3548 = vsub.f32 %v3170, %v3547
    %v3549 = vand.u32 %v3548, 4294901760
    %3550 = vmatpush1.msra.mxu0 %v3549
    %3551 = vmatprep.subr.mxu0 0.0
    %v3552 = vand.u32 %v3171, 4294901760
    %v3553 = vsub.f32 %v3171, %v3552
    %v3554 = vand.u32 %v3553, 4294901760
    %3555 = vmatpush1.msra.mxu0 %v3554
    %3556 = vmatprep.subr.mxu0 0.0
    %v3557 = vand.u32 %v3172, 4294901760
    %v3558 = vsub.f32 %v3172, %v3557
    %v3559 = vand.u32 %v3558, 4294901760
    %3560 = vmatpush1.msra.mxu0 %v3559
    %3561 = vmatprep.subr.mxu0 0.0
    %3562 = vmatpush1.msra.mxu0 0.0
    %3563 = vmatprep.subr.mxu0 0.0
    %3564 = vmatpush1.msra.mxu0 0.0
    %3565 = vmatprep.subr.mxu0 0.0
    %3566 = vmatpush1.msra.mxu0 0.0
    %3567 = vmatprep.subr.mxu0 0.0
    %3568 = vmatpush1.msra.mxu0 0.0
    %3569 = vmatprep.subr.mxu0 0.0
    %3570 = vmatpush1.msra.mxu0 0.0
    %3571 = vmatprep.subr.mxu0 0.0
    %3572 = vmatpush1.msra.mxu0 0.0
    %3573 = vmatprep.subr.mxu0 0.0
    %3574 = vmatpush1.msra.mxu0 0.0
    %3575 = vmatprep.subr.mxu0 0.0
    %3576 = vmatpush1.msra.mxu0 0.0
    %3577 = vmatprep.subr.mxu0 0.0
    %3578 = vmatpush1.msra.mxu0 0.0
    %3579 = vmatprep.subr.mxu0 0.0
    %3580 = vmatpush1.msra.mxu0 0.0
    %3581 = vmatprep.subr.mxu0 0.0
    %3582 = vmatpush1.msra.mxu0 0.0
    %3583 = vmatprep.subr.mxu0 0.0
    %3584 = vmatpush1.msra.mxu0 0.0
    %3585 = vmatprep.subr.mxu0 0.0
    %3586 = vmatpush1.msra.mxu0 0.0
    %3587 = vmatprep.subr.mxu0 0.0
    %3588 = vmatpush1.msra.mxu0 0.0
    %3589 = vmatprep.subr.mxu0 0.0
    %3590 = vmatpush1.msra.mxu0 0.0
    %3591 = vmatprep.subr.mxu0 0.0
    %3592 = vmatpush1.msra.mxu0 0.0
    %3593 = vmatprep.subr.mxu0 0.0
    %3594 = vmatpush1.msra.mxu0 0.0
    %3595 = vmatprep.subr.mxu0 0.0
    %3596 = vmatpush1.msra.mxu0 0.0
    %3597 = vmatprep.subr.mxu0 0.0
    %3598 = vmatpush1.msra.mxu0 0.0
    %3599 = vmatprep.subr.mxu0 0.0
    %3600 = vmatpush1.msra.mxu0 0.0
    %3601 = vmatprep.subr.mxu0 0.0
    %3602 = vmatpush1.msra.mxu0 0.0
    %3603 = vmatprep.subr.mxu0 0.0
    %3604 = vmatpush1.msra.mxu0 0.0
    %3605 = vmatprep.subr.mxu0 0.0
    %3606 = vmatpush1.msra.mxu0 0.0
    %3607 = vmatprep.subr.mxu0 0.0
    %3608 = vmatpush1.msra.mxu0 0.0
    %3609 = vmatprep.subr.mxu0 0.0
    %3610 = vmatpush1.msra.mxu0 0.0
    %3611 = vmatprep.subr.mxu0 0.0
    %3612 = vmatpush1.msra.mxu0 0.0
    %3613 = vmatprep.subr.mxu0 0.0
    %3614 = vmatpush1.msra.mxu0 0.0
    %3615 = vmatprep.subr.mxu0 0.0
    %3616 = vmatpush1.msra.mxu0 0.0
    %3617 = vmatprep.mubr.f32.mxu0 0.0
    %v3618 = vand.u32 %v3178, 4294901760
    %3619 = vmatmul.mubr.f32.gmra.mrb[0].mxu0 %v3618
    %v3620 = vpop.f32.mrb[0].mxu0
    %v3621 = vadd.f32 %v3530, %v3620
    %v3622 = vpop.f32.mrb[0].mxu0
    %3623 = vmatprep.mubr.f32.mxu0 0.0
    %v3624 = vand.u32 %v3181, 4294901760
    %3625 = vmatmul.mubr.f32.gmra.mrb[0].mxu0 %v3624
    %v3626 = vpop.f32.mrb[0].mxu0
    %v3627 = vadd.f32 %v3538, %v3626
    %v3628 = vpop.f32.mrb[0].mxu0
    %3629 = vdwg.mxu0
    %3630 = vmatprep.subr.mxu0 0.0
    %v3631 = vand.u32 %v3169, 4294901760
    %3632 = vmatpush1.msra.mxu0 %v3631
    %3633 = vmatprep.subr.mxu0 0.0
    %v3634 = vand.u32 %v3170, 4294901760
    %3635 = vmatpush1.msra.mxu0 %v3634
    %3636 = vmatprep.subr.mxu0 0.0
    %v3637 = vand.u32 %v3171, 4294901760
    %3638 = vmatpush1.msra.mxu0 %v3637
    %3639 = vmatprep.subr.mxu0 0.0
    %v3640 = vand.u32 %v3172, 4294901760
    %3641 = vmatpush1.msra.mxu0 %v3640
    %3642 = vmatprep.subr.mxu0 0.0
    %3643 = vmatpush1.msra.mxu0 0.0
    %3644 = vmatprep.subr.mxu0 0.0
    %3645 = vmatpush1.msra.mxu0 0.0
    %3646 = vmatprep.subr.mxu0 0.0
    %3647 = vmatpush1.msra.mxu0 0.0
    %3648 = vmatprep.subr.mxu0 0.0
    %3649 = vmatpush1.msra.mxu0 0.0
    %3650 = vmatprep.subr.mxu0 0.0
    %3651 = vmatpush1.msra.mxu0 0.0
    %3652 = vmatprep.subr.mxu0 0.0
    %3653 = vmatpush1.msra.mxu0 0.0
    %3654 = vmatprep.subr.mxu0 0.0
    %3655 = vmatpush1.msra.mxu0 0.0
    %3656 = vmatprep.subr.mxu0 0.0
    %3657 = vmatpush1.msra.mxu0 0.0
    %3658 = vmatprep.subr.mxu0 0.0
    %3659 = vmatpush1.msra.mxu0 0.0
    %3660 = vmatprep.subr.mxu0 0.0
    %3661 = vmatpush1.msra.mxu0 0.0
    %3662 = vmatprep.subr.mxu0 0.0
    %3663 = vmatpush1.msra.mxu0 0.0
    %3664 = vmatprep.subr.mxu0 0.0
    %3665 = vmatpush1.msra.mxu0 0.0
    %3666 = vmatprep.subr.mxu0 0.0
    %3667 = vmatpush1.msra.mxu0 0.0
    %3668 = vmatprep.subr.mxu0 0.0
    %3669 = vmatpush1.msra.mxu0 0.0
    %3670 = vmatprep.subr.mxu0 0.0
    %3671 = vmatpush1.msra.mxu0 0.0
    %3672 = vmatprep.subr.mxu0 0.0
    %3673 = vmatpush1.msra.mxu0 0.0
    %3674 = vmatprep.subr.mxu0 0.0
    %3675 = vmatpush1.msra.mxu0 0.0
    %3676 = vmatprep.subr.mxu0 0.0
    %3677 = vmatpush1.msra.mxu0 0.0
    %3678 = vmatprep.subr.mxu0 0.0
    %3679 = vmatpush1.msra.mxu0 0.0
    %3680 = vmatprep.subr.mxu0 0.0
    %3681 = vmatpush1.msra.mxu0 0.0
    %3682 = vmatprep.subr.mxu0 0.0
    %3683 = vmatpush1.msra.mxu0 0.0
    %3684 = vmatprep.subr.mxu0 0.0
    %3685 = vmatpush1.msra.mxu0 0.0
    %3686 = vmatprep.subr.mxu0 0.0
    %3687 = vmatpush1.msra.mxu0 0.0
    %3688 = vmatprep.subr.mxu0 0.0
    %3689 = vmatpush1.msra.mxu0 0.0
    %3690 = vmatprep.subr.mxu0 0.0
    %3691 = vmatpush1.msra.mxu0 0.0
    %3692 = vmatprep.subr.mxu0 0.0
    %3693 = vmatpush1.msra.mxu0 0.0
    %3694 = vmatprep.subr.mxu0 0.0
    %3695 = vmatpush1.msra.mxu0 0.0
    %3696 = vmatprep.subr.mxu0 0.0
    %3697 = vmatpush1.msra.mxu0 0.0
    %3698 = vmatprep.mubr.f32.mxu0 0.0
    %v3699 = vand.u32 %v3178, 4294901760
    %3700 = vmatmul.mubr.f32.gmra.mrb[0].mxu0 %v3699
    %v3701 = vpop.f32.mrb[0].mxu0
    %v3702 = vadd.f32 %v3621, %v3701
    %v3703 = vpop.f32.mrb[0].mxu0
    %3704 = vmatprep.mubr.f32.mxu0 0.0
    %v3705 = vand.u32 %v3181, 4294901760
    %3706 = vmatmul.mubr.f32.gmra.mrb[0].mxu0 %v3705
    %v3707 = vpop.f32.mrb[0].mxu0
    %v3708 = vadd.f32 %v3627, %v3707
    %v3709 = vpop.f32.mrb[0].mxu0
    %3710 = vdwg.mxu0
    %v3711 = vmax.f32 %v3702, 0.0
    %v3712 = vmax.f32 %v3708, 0.0
    %v3713 = vld [vmem:[%s6] sm:$0xff]
    %v3714 = vld [vmem:[%s6 + $0x8] sm:$0xff]
    %v3715 = vld [vmem:[%s6 + $0x10] sm:$0xff]
    %v3716 = vld [vmem:[%s6 + $0x18] sm:$0xff]
    %v3717 = vld [vmem:[%s6 + $0x20] sm:$0xff]
    %v3718 = vld [vmem:[%s6 + $0x28] sm:$0xff]
    %v3719 = vld [vmem:[%s6 + $0x30] sm:$0xff]
    %v3720 = vld [vmem:[%s6 + $0x38] sm:$0xff]
    %v3721 = vld [vmem:[%s6 + $0x40] sm:$0xff]
    %v3722 = vld [vmem:[%s6 + $0x48] sm:$0xff]
    %v3723 = vld [vmem:[%s6 + $0x50] sm:$0xff]
    %v3724 = vld [vmem:[%s6 + $0x58] sm:$0xff]
    %v3725 = vld [vmem:[%s6 + $0x60] sm:$0xff]
    %v3726 = vld [vmem:[%s6 + $0x68] sm:$0xff]
    %v3727 = vld [vmem:[%s6 + $0x70] sm:$0xff]
    %v3728 = vld [vmem:[%s6 + $0x78] sm:$0xff]
    %v3729 = vlaneseq
    %v3730 = vshrl.u32 %v3729, 7
    %v3731 = vsub.s32 0, %v3730
    %v3732 = vrot.slane %v37, %v3731
    %3733 = vmatprep.subr.mxu0 0.0
    %v3734 = vand.u32 %v3713, 4294901760
    %3735 = vmatpush1.msra.mxu0 %v3734
    %3736 = vmatprep.subr.mxu0 0.0
    %v3737 = vand.u32 %v3714, 4294901760
    %3738 = vmatpush1.msra.mxu0 %v3737
    %3739 = vmatprep.subr.mxu0 0.0
    %v3740 = vand.u32 %v3715, 4294901760
    %3741 = vmatpush1.msra.mxu0 %v3740
    %3742 = vmatprep.subr.mxu0 0.0
    %v3743 = vand.u32 %v3716, 4294901760
    %3744 = vmatpush1.msra.mxu0 %v3743
    %3745 = vmatprep.subr.mxu0 0.0
    %v3746 = vand.u32 %v3717, 4294901760
    %3747 = vmatpush1.msra.mxu0 %v3746
    %3748 = vmatprep.subr.mxu0 0.0
    %v3749 = vand.u32 %v3718, 4294901760
    %3750 = vmatpush1.msra.mxu0 %v3749
    %3751 = vmatprep.subr.mxu0 0.0
    %v3752 = vand.u32 %v3719, 4294901760
    %3753 = vmatpush1.msra.mxu0 %v3752
    %3754 = vmatprep.subr.mxu0 0.0
    %v3755 = vand.u32 %v3720, 4294901760
    %3756 = vmatpush1.msra.mxu0 %v3755
    %3757 = vmatprep.subr.mxu0 0.0
    %v3758 = vand.u32 %v3721, 4294901760
    %3759 = vmatpush1.msra.mxu0 %v3758
    %3760 = vmatprep.subr.mxu0 0.0
    %v3761 = vand.u32 %v3722, 4294901760
    %3762 = vmatpush1.msra.mxu0 %v3761
    %3763 = vmatprep.subr.mxu0 0.0
    %v3764 = vand.u32 %v3723, 4294901760
    %3765 = vmatpush1.msra.mxu0 %v3764
    %3766 = vmatprep.subr.mxu0 0.0
    %v3767 = vand.u32 %v3724, 4294901760
    %3768 = vmatpush1.msra.mxu0 %v3767
    %3769 = vmatprep.subr.mxu0 0.0
    %v3770 = vand.u32 %v3725, 4294901760
    %3771 = vmatpush1.msra.mxu0 %v3770
    %3772 = vmatprep.subr.mxu0 0.0
    %v3773 = vand.u32 %v3726, 4294901760
    %3774 = vmatpush1.msra.mxu0 %v3773
    %3775 = vmatprep.subr.mxu0 0.0
    %v3776 = vand.u32 %v3727, 4294901760
    %3777 = vmatpush1.msra.mxu0 %v3776
    %3778 = vmatprep.subr.mxu0 0.0
    %v3779 = vand.u32 %v3728, 4294901760
    %3780 = vmatpush1.msra.mxu0 %v3779
    %3781 = vmatprep.subr.mxu0 0.0
    %3782 = vmatpush1.msra.mxu0 0.0
    %3783 = vmatprep.subr.mxu0 0.0
    %3784 = vmatpush1.msra.mxu0 0.0
    %3785 = vmatprep.subr.mxu0 0.0
    %3786 = vmatpush1.msra.mxu0 0.0
    %3787 = vmatprep.subr.mxu0 0.0
    %3788 = vmatpush1.msra.mxu0 0.0
    %3789 = vmatprep.subr.mxu0 0.0
    %3790 = vmatpush1.msra.mxu0 0.0
    %3791 = vmatprep.subr.mxu0 0.0
    %3792 = vmatpush1.msra.mxu0 0.0
    %3793 = vmatprep.subr.mxu0 0.0
    %3794 = vmatpush1.msra.mxu0 0.0
    %3795 = vmatprep.subr.mxu0 0.0
    %3796 = vmatpush1.msra.mxu0 0.0
    %3797 = vmatprep.subr.mxu0 0.0
    %3798 = vmatpush1.msra.mxu0 0.0
    %3799 = vmatprep.subr.mxu0 0.0
    %3800 = vmatpush1.msra.mxu0 0.0
    %3801 = vmatprep.subr.mxu0 0.0
    %3802 = vmatpush1.msra.mxu0 0.0
    %3803 = vmatprep.subr.mxu0 0.0
    %3804 = vmatpush1.msra.mxu0 0.0
    %3805 = vmatprep.subr.mxu0 0.0
    %3806 = vmatpush1.msra.mxu0 0.0
    %3807 = vmatprep.subr.mxu0 0.0
    %3808 = vmatpush1.msra.mxu0 0.0
    %3809 = vmatprep.subr.mxu0 0.0
    %3810 = vmatpush1.msra.mxu0 0.0
    %3811 = vmatprep.subr.mxu0 0.0
    %3812 = vmatpush1.msra.mxu0 0.0
    %3813 = vmatprep.mubr.f32.mxu0 0.0
    %v3814 = vand.u32 %v3711, 4294901760
    %v3815 = vsub.f32 %v3711, %v3814
    %v3816 = vand.u32 %v3815, 4294901760
    %v3817 = vsub.f32 %v3815, %v3816
    %v3818 = vand.u32 %v3817, 4294901760
    %3819 = vmatmul.mubr.f32.gmra.mrb[0].mxu0 %v3818
    %v3820 = vpop.f32.mrb[0].mxu0
    %v3821 = vadd.f32 %v3732, %v3820
    %v3822 = vpop.f32.mrb[0].mxu0
    %3823 = vmatprep.mubr.f32.mxu0 0.0
    %v3824 = vand.u32 %v3712, 4294901760
    %v3825 = vsub.f32 %v3712, %v3824
    %v3826 = vand.u32 %v3825, 4294901760
    %v3827 = vsub.f32 %v3825, %v3826
    %v3828 = vand.u32 %v3827, 4294901760
    %3829 = vmatmul.mubr.f32.gmra.mrb[0].mxu0 %v3828
    %v3830 = vpop.f32.mrb[0].mxu0
    %v3831 = vadd.f32 %v3732, %v3830
    %v3832 = vpop.f32.mrb[0].mxu0
    %3833 = vdwg.mxu0
    %3834 = vmatprep.subr.mxu0 0.0
    %v3835 = vand.u32 %v3713, 4294901760
    %v3836 = vsub.f32 %v3713, %v3835
    %v3837 = vand.u32 %v3836, 4294901760
    %v3838 = vsub.f32 %v3836, %v3837
    %v3839 = vand.u32 %v3838, 4294901760
    %3840 = vmatpush1.msra.mxu0 %v3839
    %3841 = vmatprep.subr.mxu0 0.0
    %v3842 = vand.u32 %v3714, 4294901760
    %v3843 = vsub.f32 %v3714, %v3842
    %v3844 = vand.u32 %v3843, 4294901760
    %v3845 = vsub.f32 %v3843, %v3844
    %v3846 = vand.u32 %v3845, 4294901760
    %3847 = vmatpush1.msra.mxu0 %v3846
    %3848 = vmatprep.subr.mxu0 0.0
    %v3849 = vand.u32 %v3715, 4294901760
    %v3850 = vsub.f32 %v3715, %v3849
    %v3851 = vand.u32 %v3850, 4294901760
    %v3852 = vsub.f32 %v3850, %v3851
    %v3853 = vand.u32 %v3852, 4294901760
    %3854 = vmatpush1.msra.mxu0 %v3853
    %3855 = vmatprep.subr.mxu0 0.0
    %v3856 = vand.u32 %v3716, 4294901760
    %v3857 = vsub.f32 %v3716, %v3856
    %v3858 = vand.u32 %v3857, 4294901760
    %v3859 = vsub.f32 %v3857, %v3858
    %v3860 = vand.u32 %v3859, 4294901760
    %3861 = vmatpush1.msra.mxu0 %v3860
    %3862 = vmatprep.subr.mxu0 0.0
    %v3863 = vand.u32 %v3717, 4294901760
    %v3864 = vsub.f32 %v3717, %v3863
    %v3865 = vand.u32 %v3864, 4294901760
    %v3866 = vsub.f32 %v3864, %v3865
    %v3867 = vand.u32 %v3866, 4294901760
    %3868 = vmatpush1.msra.mxu0 %v3867
    %3869 = vmatprep.subr.mxu0 0.0
    %v3870 = vand.u32 %v3718, 4294901760
    %v3871 = vsub.f32 %v3718, %v3870
    %v3872 = vand.u32 %v3871, 4294901760
    %v3873 = vsub.f32 %v3871, %v3872
    %v3874 = vand.u32 %v3873, 4294901760
    %3875 = vmatpush1.msra.mxu0 %v3874
    %3876 = vmatprep.subr.mxu0 0.0
    %v3877 = vand.u32 %v3719, 4294901760
    %v3878 = vsub.f32 %v3719, %v3877
    %v3879 = vand.u32 %v3878, 4294901760
    %v3880 = vsub.f32 %v3878, %v3879
    %v3881 = vand.u32 %v3880, 4294901760
    %3882 = vmatpush1.msra.mxu0 %v3881
    %3883 = vmatprep.subr.mxu0 0.0
    %v3884 = vand.u32 %v3720, 4294901760
    %v3885 = vsub.f32 %v3720, %v3884
    %v3886 = vand.u32 %v3885, 4294901760
    %v3887 = vsub.f32 %v3885, %v3886
    %v3888 = vand.u32 %v3887, 4294901760
    %3889 = vmatpush1.msra.mxu0 %v3888
    %3890 = vmatprep.subr.mxu0 0.0
    %v3891 = vand.u32 %v3721, 4294901760
    %v3892 = vsub.f32 %v3721, %v3891
    %v3893 = vand.u32 %v3892, 4294901760
    %v3894 = vsub.f32 %v3892, %v3893
    %v3895 = vand.u32 %v3894, 4294901760
    %3896 = vmatpush1.msra.mxu0 %v3895
    %3897 = vmatprep.subr.mxu0 0.0
    %v3898 = vand.u32 %v3722, 4294901760
    %v3899 = vsub.f32 %v3722, %v3898
    %v3900 = vand.u32 %v3899, 4294901760
    %v3901 = vsub.f32 %v3899, %v3900
    %v3902 = vand.u32 %v3901, 4294901760
    %3903 = vmatpush1.msra.mxu0 %v3902
    %3904 = vmatprep.subr.mxu0 0.0
    %v3905 = vand.u32 %v3723, 4294901760
    %v3906 = vsub.f32 %v3723, %v3905
    %v3907 = vand.u32 %v3906, 4294901760
    %v3908 = vsub.f32 %v3906, %v3907
    %v3909 = vand.u32 %v3908, 4294901760
    %3910 = vmatpush1.msra.mxu0 %v3909
    %3911 = vmatprep.subr.mxu0 0.0
    %v3912 = vand.u32 %v3724, 4294901760
    %v3913 = vsub.f32 %v3724, %v3912
    %v3914 = vand.u32 %v3913, 4294901760
    %v3915 = vsub.f32 %v3913, %v3914
    %v3916 = vand.u32 %v3915, 4294901760
    %3917 = vmatpush1.msra.mxu0 %v3916
    %3918 = vmatprep.subr.mxu0 0.0
    %v3919 = vand.u32 %v3725, 4294901760
    %v3920 = vsub.f32 %v3725, %v3919
    %v3921 = vand.u32 %v3920, 4294901760
    %v3922 = vsub.f32 %v3920, %v3921
    %v3923 = vand.u32 %v3922, 4294901760
    %3924 = vmatpush1.msra.mxu0 %v3923
    %3925 = vmatprep.subr.mxu0 0.0
    %v3926 = vand.u32 %v3726, 4294901760
    %v3927 = vsub.f32 %v3726, %v3926
    %v3928 = vand.u32 %v3927, 4294901760
    %v3929 = vsub.f32 %v3927, %v3928
    %v3930 = vand.u32 %v3929, 4294901760
    %3931 = vmatpush1.msra.mxu0 %v3930
    %3932 = vmatprep.subr.mxu0 0.0
    %v3933 = vand.u32 %v3727, 4294901760
    %v3934 = vsub.f32 %v3727, %v3933
    %v3935 = vand.u32 %v3934, 4294901760
    %v3936 = vsub.f32 %v3934, %v3935
    %v3937 = vand.u32 %v3936, 4294901760
    %3938 = vmatpush1.msra.mxu0 %v3937
    %3939 = vmatprep.subr.mxu0 0.0
    %v3940 = vand.u32 %v3728, 4294901760
    %v3941 = vsub.f32 %v3728, %v3940
    %v3942 = vand.u32 %v3941, 4294901760
    %v3943 = vsub.f32 %v3941, %v3942
    %v3944 = vand.u32 %v3943, 4294901760
    %3945 = vmatpush1.msra.mxu0 %v3944
    %3946 = vmatprep.subr.mxu0 0.0
    %3947 = vmatpush1.msra.mxu0 0.0
    %3948 = vmatprep.subr.mxu0 0.0
    %3949 = vmatpush1.msra.mxu0 0.0
    %3950 = vmatprep.subr.mxu0 0.0
    %3951 = vmatpush1.msra.mxu0 0.0
    %3952 = vmatprep.subr.mxu0 0.0
    %3953 = vmatpush1.msra.mxu0 0.0
    %3954 = vmatprep.subr.mxu0 0.0
    %3955 = vmatpush1.msra.mxu0 0.0
    %3956 = vmatprep.subr.mxu0 0.0
    %3957 = vmatpush1.msra.mxu0 0.0
    %3958 = vmatprep.subr.mxu0 0.0
    %3959 = vmatpush1.msra.mxu0 0.0
    %3960 = vmatprep.subr.mxu0 0.0
    %3961 = vmatpush1.msra.mxu0 0.0
    %3962 = vmatprep.subr.mxu0 0.0
    %3963 = vmatpush1.msra.mxu0 0.0
    %3964 = vmatprep.subr.mxu0 0.0
    %3965 = vmatpush1.msra.mxu0 0.0
    %3966 = vmatprep.subr.mxu0 0.0
    %3967 = vmatpush1.msra.mxu0 0.0
    %3968 = vmatprep.subr.mxu0 0.0
    %3969 = vmatpush1.msra.mxu0 0.0
    %3970 = vmatprep.subr.mxu0 0.0
    %3971 = vmatpush1.msra.mxu0 0.0
    %3972 = vmatprep.subr.mxu0 0.0
    %3973 = vmatpush1.msra.mxu0 0.0
    %3974 = vmatprep.subr.mxu0 0.0
    %3975 = vmatpush1.msra.mxu0 0.0
    %3976 = vmatprep.subr.mxu0 0.0
    %3977 = vmatpush1.msra.mxu0 0.0
    %3978 = vmatprep.mubr.f32.mxu0 0.0
    %v3979 = vand.u32 %v3711, 4294901760
    %3980 = vmatmul.mubr.f32.gmra.mrb[0].mxu0 %v3979
    %v3981 = vpop.f32.mrb[0].mxu0
    %v3982 = vadd.f32 %v3821, %v3981
    %v3983 = vpop.f32.mrb[0].mxu0
    %3984 = vmatprep.mubr.f32.mxu0 0.0
    %v3985 = vand.u32 %v3712, 4294901760
    %3986 = vmatmul.mubr.f32.gmra.mrb[0].mxu0 %v3985
    %v3987 = vpop.f32.mrb[0].mxu0
    %v3988 = vadd.f32 %v3831, %v3987
    %v3989 = vpop.f32.mrb[0].mxu0
    %3990 = vdwg.mxu0
    %3991 = vmatprep.subr.mxu0 0.0
    %v3992 = vand.u32 %v3713, 4294901760
    %v3993 = vsub.f32 %v3713, %v3992
    %3994 = vmatpush1.msra.mxu0 %v3993
    %3995 = vmatprep.subr.mxu0 0.0
    %v3996 = vand.u32 %v3714, 4294901760
    %v3997 = vsub.f32 %v3714, %v3996
    %3998 = vmatpush1.msra.mxu0 %v3997
    %3999 = vmatprep.subr.mxu0 0.0
    %v4000 = vand.u32 %v3715, 4294901760
    %v4001 = vsub.f32 %v3715, %v4000
    %4002 = vmatpush1.msra.mxu0 %v4001
    %4003 = vmatprep.subr.mxu0 0.0
    %v4004 = vand.u32 %v3716, 4294901760
    %v4005 = vsub.f32 %v3716, %v4004
    %4006 = vmatpush1.msra.mxu0 %v4005
    %4007 = vmatprep.subr.mxu0 0.0
    %v4008 = vand.u32 %v3717, 4294901760
    %v4009 = vsub.f32 %v3717, %v4008
    %4010 = vmatpush1.msra.mxu0 %v4009
    %4011 = vmatprep.subr.mxu0 0.0
    %v4012 = vand.u32 %v3718, 4294901760
    %v4013 = vsub.f32 %v3718, %v4012
    %4014 = vmatpush1.msra.mxu0 %v4013
    %4015 = vmatprep.subr.mxu0 0.0
    %v4016 = vand.u32 %v3719, 4294901760
    %v4017 = vsub.f32 %v3719, %v4016
    %4018 = vmatpush1.msra.mxu0 %v4017
    %4019 = vmatprep.subr.mxu0 0.0
    %v4020 = vand.u32 %v3720, 4294901760
    %v4021 = vsub.f32 %v3720, %v4020
    %4022 = vmatpush1.msra.mxu0 %v4021
    %4023 = vmatprep.subr.mxu0 0.0
    %v4024 = vand.u32 %v3721, 4294901760
    %v4025 = vsub.f32 %v3721, %v4024
    %4026 = vmatpush1.msra.mxu0 %v4025
    %4027 = vmatprep.subr.mxu0 0.0
    %v4028 = vand.u32 %v3722, 4294901760
    %v4029 = vsub.f32 %v3722, %v4028
    %4030 = vmatpush1.msra.mxu0 %v4029
    %4031 = vmatprep.subr.mxu0 0.0
    %v4032 = vand.u32 %v3723, 4294901760
    %v4033 = vsub.f32 %v3723, %v4032
    %4034 = vmatpush1.msra.mxu0 %v4033
    %4035 = vmatprep.subr.mxu0 0.0
    %v4036 = vand.u32 %v3724, 4294901760
    %v4037 = vsub.f32 %v3724, %v4036
    %4038 = vmatpush1.msra.mxu0 %v4037
    %4039 = vmatprep.subr.mxu0 0.0
    %v4040 = vand.u32 %v3725, 4294901760
    %v4041 = vsub.f32 %v3725, %v4040
    %4042 = vmatpush1.msra.mxu0 %v4041
    %4043 = vmatprep.subr.mxu0 0.0
    %v4044 = vand.u32 %v3726, 4294901760
    %v4045 = vsub.f32 %v3726, %v4044
    %4046 = vmatpush1.msra.mxu0 %v4045
    %4047 = vmatprep.subr.mxu0 0.0
    %v4048 = vand.u32 %v3727, 4294901760
    %v4049 = vsub.f32 %v3727, %v4048
    %4050 = vmatpush1.msra.mxu0 %v4049
    %4051 = vmatprep.subr.mxu0 0.0
    %v4052 = vand.u32 %v3728, 4294901760
    %v4053 = vsub.f32 %v3728, %v4052
    %4054 = vmatpush1.msra.mxu0 %v4053
    %4055 = vmatprep.subr.mxu0 0.0
    %4056 = vmatpush1.msra.mxu0 0.0
    %4057 = vmatprep.subr.mxu0 0.0
    %4058 = vmatpush1.msra.mxu0 0.0
    %4059 = vmatprep.subr.mxu0 0.0
    %4060 = vmatpush1.msra.mxu0 0.0
    %4061 = vmatprep.subr.mxu0 0.0
    %4062 = vmatpush1.msra.mxu0 0.0
    %4063 = vmatprep.subr.mxu0 0.0
    %4064 = vmatpush1.msra.mxu0 0.0
    %4065 = vmatprep.subr.mxu0 0.0
    %4066 = vmatpush1.msra.mxu0 0.0
    %4067 = vmatprep.subr.mxu0 0.0
    %4068 = vmatpush1.msra.mxu0 0.0
    %4069 = vmatprep.subr.mxu0 0.0
    %4070 = vmatpush1.msra.mxu0 0.0
    %4071 = vmatprep.subr.mxu0 0.0
    %4072 = vmatpush1.msra.mxu0 0.0
    %4073 = vmatprep.subr.mxu0 0.0
    %4074 = vmatpush1.msra.mxu0 0.0
    %4075 = vmatprep.subr.mxu0 0.0
    %4076 = vmatpush1.msra.mxu0 0.0
    %4077 = vmatprep.subr.mxu0 0.0
    %4078 = vmatpush1.msra.mxu0 0.0
    %4079 = vmatprep.subr.mxu0 0.0
    %4080 = vmatpush1.msra.mxu0 0.0
    %4081 = vmatprep.subr.mxu0 0.0
    %4082 = vmatpush1.msra.mxu0 0.0
    %4083 = vmatprep.subr.mxu0 0.0
    %4084 = vmatpush1.msra.mxu0 0.0
    %4085 = vmatprep.subr.mxu0 0.0
    %4086 = vmatpush1.msra.mxu0 0.0
    %4087 = vmatprep.mubr.f32.mxu0 0.0
    %v4088 = vand.u32 %v3711, 4294901760
    %v4089 = vsub.f32 %v3711, %v4088
    %4090 = vmatmul.mubr.f32.gmra.mrb[0].mxu0 %v4089
    %v4091 = vpop.f32.mrb[0].mxu0
    %v4092 = vadd.f32 %v3982, %v4091
    %v4093 = vpop.f32.mrb[0].mxu0
    %4094 = vmatprep.mubr.f32.mxu0 0.0
    %v4095 = vand.u32 %v3712, 4294901760
    %v4096 = vsub.f32 %v3712, %v4095
    %4097 = vmatmul.mubr.f32.gmra.mrb[0].mxu0 %v4096
    %v4098 = vpop.f32.mrb[0].mxu0
    %v4099 = vadd.f32 %v3988, %v4098
    %v4100 = vpop.f32.mrb[0].mxu0
    %4101 = vdwg.mxu0
    %4102 = vmatprep.subr.mxu0 0.0
    %v4103 = vand.u32 %v3713, 4294901760
    %4104 = vmatpush1.msra.mxu0 %v4103
    %4105 = vmatprep.subr.mxu0 0.0
    %v4106 = vand.u32 %v3714, 4294901760
    %4107 = vmatpush1.msra.mxu0 %v4106
    %4108 = vmatprep.subr.mxu0 0.0
    %v4109 = vand.u32 %v3715, 4294901760
    %4110 = vmatpush1.msra.mxu0 %v4109
    %4111 = vmatprep.subr.mxu0 0.0
    %v4112 = vand.u32 %v3716, 4294901760
    %4113 = vmatpush1.msra.mxu0 %v4112
    %4114 = vmatprep.subr.mxu0 0.0
    %v4115 = vand.u32 %v3717, 4294901760
    %4116 = vmatpush1.msra.mxu0 %v4115
    %4117 = vmatprep.subr.mxu0 0.0
    %v4118 = vand.u32 %v3718, 4294901760
    %4119 = vmatpush1.msra.mxu0 %v4118
    %4120 = vmatprep.subr.mxu0 0.0
    %v4121 = vand.u32 %v3719, 4294901760
    %4122 = vmatpush1.msra.mxu0 %v4121
    %4123 = vmatprep.subr.mxu0 0.0
    %v4124 = vand.u32 %v3720, 4294901760
    %4125 = vmatpush1.msra.mxu0 %v4124
    %4126 = vmatprep.subr.mxu0 0.0
    %v4127 = vand.u32 %v3721, 4294901760
    %4128 = vmatpush1.msra.mxu0 %v4127
    %4129 = vmatprep.subr.mxu0 0.0
    %v4130 = vand.u32 %v3722, 4294901760
    %4131 = vmatpush1.msra.mxu0 %v4130
    %4132 = vmatprep.subr.mxu0 0.0
    %v4133 = vand.u32 %v3723, 4294901760
    %4134 = vmatpush1.msra.mxu0 %v4133
    %4135 = vmatprep.subr.mxu0 0.0
    %v4136 = vand.u32 %v3724, 4294901760
    %4137 = vmatpush1.msra.mxu0 %v4136
    %4138 = vmatprep.subr.mxu0 0.0
    %v4139 = vand.u32 %v3725, 4294901760
    %4140 = vmatpush1.msra.mxu0 %v4139
    %4141 = vmatprep.subr.mxu0 0.0
    %v4142 = vand.u32 %v3726, 4294901760
    %4143 = vmatpush1.msra.mxu0 %v4142
    %4144 = vmatprep.subr.mxu0 0.0
    %v4145 = vand.u32 %v3727, 4294901760
    %4146 = vmatpush1.msra.mxu0 %v4145
    %4147 = vmatprep.subr.mxu0 0.0
    %v4148 = vand.u32 %v3728, 4294901760
    %4149 = vmatpush1.msra.mxu0 %v4148
    %4150 = vmatprep.subr.mxu0 0.0
    %4151 = vmatpush1.msra.mxu0 0.0
    %4152 = vmatprep.subr.mxu0 0.0
    %4153 = vmatpush1.msra.mxu0 0.0
    %4154 = vmatprep.subr.mxu0 0.0
    %4155 = vmatpush1.msra.mxu0 0.0
    %4156 = vmatprep.subr.mxu0 0.0
    %4157 = vmatpush1.msra.mxu0 0.0
    %4158 = vmatprep.subr.mxu0 0.0
    %4159 = vmatpush1.msra.mxu0 0.0
    %4160 = vmatprep.subr.mxu0 0.0
    %4161 = vmatpush1.msra.mxu0 0.0
    %4162 = vmatprep.subr.mxu0 0.0
    %4163 = vmatpush1.msra.mxu0 0.0
    %4164 = vmatprep.subr.mxu0 0.0
    %4165 = vmatpush1.msra.mxu0 0.0
    %4166 = vmatprep.subr.mxu0 0.0
    %4167 = vmatpush1.msra.mxu0 0.0
    %4168 = vmatprep.subr.mxu0 0.0
    %4169 = vmatpush1.msra.mxu0 0.0
    %4170 = vmatprep.subr.mxu0 0.0
    %4171 = vmatpush1.msra.mxu0 0.0
    %4172 = vmatprep.subr.mxu0 0.0
    %4173 = vmatpush1.msra.mxu0 0.0
    %4174 = vmatprep.subr.mxu0 0.0
    %4175 = vmatpush1.msra.mxu0 0.0
    %4176 = vmatprep.subr.mxu0 0.0
    %4177 = vmatpush1.msra.mxu0 0.0
    %4178 = vmatprep.subr.mxu0 0.0
    %4179 = vmatpush1.msra.mxu0 0.0
    %4180 = vmatprep.subr.mxu0 0.0
    %4181 = vmatpush1.msra.mxu0 0.0
    %4182 = vmatprep.mubr.f32.mxu0 0.0
    %v4183 = vand.u32 %v3711, 4294901760
    %v4184 = vsub.f32 %v3711, %v4183
    %v4185 = vand.u32 %v4184, 4294901760
    %4186 = vmatmul.mubr.f32.gmra.mrb[0].mxu0 %v4185
    %v4187 = vpop.f32.mrb[0].mxu0
    %v4188 = vadd.f32 %v4092, %v4187
    %v4189 = vpop.f32.mrb[0].mxu0
    %4190 = vmatprep.mubr.f32.mxu0 0.0
    %v4191 = vand.u32 %v3712, 4294901760
    %v4192 = vsub.f32 %v3712, %v4191
    %v4193 = vand.u32 %v4192, 4294901760
    %4194 = vmatmul.mubr.f32.gmra.mrb[0].mxu0 %v4193
    %v4195 = vpop.f32.mrb[0].mxu0
    %v4196 = vadd.f32 %v4099, %v4195
    %v4197 = vpop.f32.mrb[0].mxu0
    %4198 = vdwg.mxu0
    %4199 = vmatprep.subr.mxu0 0.0
    %v4200 = vand.u32 %v3713, 4294901760
    %v4201 = vsub.f32 %v3713, %v4200
    %v4202 = vand.u32 %v4201, 4294901760
    %4203 = vmatpush1.msra.mxu0 %v4202
    %4204 = vmatprep.subr.mxu0 0.0
    %v4205 = vand.u32 %v3714, 4294901760
    %v4206 = vsub.f32 %v3714, %v4205
    %v4207 = vand.u32 %v4206, 4294901760
    %4208 = vmatpush1.msra.mxu0 %v4207
    %4209 = vmatprep.subr.mxu0 0.0
    %v4210 = vand.u32 %v3715, 4294901760
    %v4211 = vsub.f32 %v3715, %v4210
    %v4212 = vand.u32 %v4211, 4294901760
    %4213 = vmatpush1.msra.mxu0 %v4212
    %4214 = vmatprep.subr.mxu0 0.0
    %v4215 = vand.u32 %v3716, 4294901760
    %v4216 = vsub.f32 %v3716, %v4215
    %v4217 = vand.u32 %v4216, 4294901760
    %4218 = vmatpush1.msra.mxu0 %v4217
    %4219 = vmatprep.subr.mxu0 0.0
    %v4220 = vand.u32 %v3717, 4294901760
    %v4221 = vsub.f32 %v3717, %v4220
    %v4222 = vand.u32 %v4221, 4294901760
    %4223 = vmatpush1.msra.mxu0 %v4222
    %4224 = vmatprep.subr.mxu0 0.0
    %v4225 = vand.u32 %v3718, 4294901760
    %v4226 = vsub.f32 %v3718, %v4225
    %v4227 = vand.u32 %v4226, 4294901760
    %4228 = vmatpush1.msra.mxu0 %v4227
    %4229 = vmatprep.subr.mxu0 0.0
    %v4230 = vand.u32 %v3719, 4294901760
    %v4231 = vsub.f32 %v3719, %v4230
    %v4232 = vand.u32 %v4231, 4294901760
    %4233 = vmatpush1.msra.mxu0 %v4232
    %4234 = vmatprep.subr.mxu0 0.0
    %v4235 = vand.u32 %v3720, 4294901760
    %v4236 = vsub.f32 %v3720, %v4235
    %v4237 = vand.u32 %v4236, 4294901760
    %4238 = vmatpush1.msra.mxu0 %v4237
    %4239 = vmatprep.subr.mxu0 0.0
    %v4240 = vand.u32 %v3721, 4294901760
    %v4241 = vsub.f32 %v3721, %v4240
    %v4242 = vand.u32 %v4241, 4294901760
    %4243 = vmatpush1.msra.mxu0 %v4242
    %4244 = vmatprep.subr.mxu0 0.0
    %v4245 = vand.u32 %v3722, 4294901760
    %v4246 = vsub.f32 %v3722, %v4245
    %v4247 = vand.u32 %v4246, 4294901760
    %4248 = vmatpush1.msra.mxu0 %v4247
    %4249 = vmatprep.subr.mxu0 0.0
    %v4250 = vand.u32 %v3723, 4294901760
    %v4251 = vsub.f32 %v3723, %v4250
    %v4252 = vand.u32 %v4251, 4294901760
    %4253 = vmatpush1.msra.mxu0 %v4252
    %4254 = vmatprep.subr.mxu0 0.0
    %v4255 = vand.u32 %v3724, 4294901760
    %v4256 = vsub.f32 %v3724, %v4255
    %v4257 = vand.u32 %v4256, 4294901760
    %4258 = vmatpush1.msra.mxu0 %v4257
    %4259 = vmatprep.subr.mxu0 0.0
    %v4260 = vand.u32 %v3725, 4294901760
    %v4261 = vsub.f32 %v3725, %v4260
    %v4262 = vand.u32 %v4261, 4294901760
    %4263 = vmatpush1.msra.mxu0 %v4262
    %4264 = vmatprep.subr.mxu0 0.0
    %v4265 = vand.u32 %v3726, 4294901760
    %v4266 = vsub.f32 %v3726, %v4265
    %v4267 = vand.u32 %v4266, 4294901760
    %4268 = vmatpush1.msra.mxu0 %v4267
    %4269 = vmatprep.subr.mxu0 0.0
    %v4270 = vand.u32 %v3727, 4294901760
    %v4271 = vsub.f32 %v3727, %v4270
    %v4272 = vand.u32 %v4271, 4294901760
    %4273 = vmatpush1.msra.mxu0 %v4272
    %4274 = vmatprep.subr.mxu0 0.0
    %v4275 = vand.u32 %v3728, 4294901760
    %v4276 = vsub.f32 %v3728, %v4275
    %v4277 = vand.u32 %v4276, 4294901760
    %4278 = vmatpush1.msra.mxu0 %v4277
    %4279 = vmatprep.subr.mxu0 0.0
    %4280 = vmatpush1.msra.mxu0 0.0
    %4281 = vmatprep.subr.mxu0 0.0
    %4282 = vmatpush1.msra.mxu0 0.0
    %4283 = vmatprep.subr.mxu0 0.0
    %4284 = vmatpush1.msra.mxu0 0.0
    %4285 = vmatprep.subr.mxu0 0.0
    %4286 = vmatpush1.msra.mxu0 0.0
    %4287 = vmatprep.subr.mxu0 0.0
    %4288 = vmatpush1.msra.mxu0 0.0
    %4289 = vmatprep.subr.mxu0 0.0
    %4290 = vmatpush1.msra.mxu0 0.0
    %4291 = vmatprep.subr.mxu0 0.0
    %4292 = vmatpush1.msra.mxu0 0.0
    %4293 = vmatprep.subr.mxu0 0.0
    %4294 = vmatpush1.msra.mxu0 0.0
    %4295 = vmatprep.subr.mxu0 0.0
    %4296 = vmatpush1.msra.mxu0 0.0
    %4297 = vmatprep.subr.mxu0 0.0
    %4298 = vmatpush1.msra.mxu0 0.0
    %4299 = vmatprep.subr.mxu0 0.0
    %4300 = vmatpush1.msra.mxu0 0.0
    %4301 = vmatprep.subr.mxu0 0.0
    %4302 = vmatpush1.msra.mxu0 0.0
    %4303 = vmatprep.subr.mxu0 0.0
    %4304 = vmatpush1.msra.mxu0 0.0
    %4305 = vmatprep.subr.mxu0 0.0
    %4306 = vmatpush1.msra.mxu0 0.0
    %4307 = vmatprep.subr.mxu0 0.0
    %4308 = vmatpush1.msra.mxu0 0.0
    %4309 = vmatprep.subr.mxu0 0.0
    %4310 = vmatpush1.msra.mxu0 0.0
    %4311 = vmatprep.mubr.f32.mxu0 0.0
    %v4312 = vand.u32 %v3711, 4294901760
    %4313 = vmatmul.mubr.f32.gmra.mrb[0].mxu0 %v4312
    %v4314 = vpop.f32.mrb[0].mxu0
    %v4315 = vadd.f32 %v4188, %v4314
    %v4316 = vpop.f32.mrb[0].mxu0
    %4317 = vmatprep.mubr.f32.mxu0 0.0
    %v4318 = vand.u32 %v3712, 4294901760
    %4319 = vmatmul.mubr.f32.gmra.mrb[0].mxu0 %v4318
    %v4320 = vpop.f32.mrb[0].mxu0
    %v4321 = vadd.f32 %v4196, %v4320
    %v4322 = vpop.f32.mrb[0].mxu0
    %4323 = vdwg.mxu0
    %4324 = vmatprep.subr.mxu0 0.0
    %v4325 = vand.u32 %v3713, 4294901760
    %4326 = vmatpush1.msra.mxu0 %v4325
    %4327 = vmatprep.subr.mxu0 0.0
    %v4328 = vand.u32 %v3714, 4294901760
    %4329 = vmatpush1.msra.mxu0 %v4328
    %4330 = vmatprep.subr.mxu0 0.0
    %v4331 = vand.u32 %v3715, 4294901760
    %4332 = vmatpush1.msra.mxu0 %v4331
    %4333 = vmatprep.subr.mxu0 0.0
    %v4334 = vand.u32 %v3716, 4294901760
    %4335 = vmatpush1.msra.mxu0 %v4334
    %4336 = vmatprep.subr.mxu0 0.0
    %v4337 = vand.u32 %v3717, 4294901760
    %4338 = vmatpush1.msra.mxu0 %v4337
    %4339 = vmatprep.subr.mxu0 0.0
    %v4340 = vand.u32 %v3718, 4294901760
    %4341 = vmatpush1.msra.mxu0 %v4340
    %4342 = vmatprep.subr.mxu0 0.0
    %v4343 = vand.u32 %v3719, 4294901760
    %4344 = vmatpush1.msra.mxu0 %v4343
    %4345 = vmatprep.subr.mxu0 0.0
    %v4346 = vand.u32 %v3720, 4294901760
    %4347 = vmatpush1.msra.mxu0 %v4346
    %4348 = vmatprep.subr.mxu0 0.0
    %v4349 = vand.u32 %v3721, 4294901760
    %4350 = vmatpush1.msra.mxu0 %v4349
    %4351 = vmatprep.subr.mxu0 0.0
    %v4352 = vand.u32 %v3722, 4294901760
    %4353 = vmatpush1.msra.mxu0 %v4352
    %4354 = vmatprep.subr.mxu0 0.0
    %v4355 = vand.u32 %v3723, 4294901760
    %4356 = vmatpush1.msra.mxu0 %v4355
    %4357 = vmatprep.subr.mxu0 0.0
    %v4358 = vand.u32 %v3724, 4294901760
    %4359 = vmatpush1.msra.mxu0 %v4358
    %4360 = vmatprep.subr.mxu0 0.0
    %v4361 = vand.u32 %v3725, 4294901760
    %4362 = vmatpush1.msra.mxu0 %v4361
    %4363 = vmatprep.subr.mxu0 0.0
    %v4364 = vand.u32 %v3726, 4294901760
    %4365 = vmatpush1.msra.mxu0 %v4364
    %4366 = vmatprep.subr.mxu0 0.0
    %v4367 = vand.u32 %v3727, 4294901760
    %4368 = vmatpush1.msra.mxu0 %v4367
    %4369 = vmatprep.subr.mxu0 0.0
    %v4370 = vand.u32 %v3728, 4294901760
    %4371 = vmatpush1.msra.mxu0 %v4370
    %4372 = vmatprep.subr.mxu0 0.0
    %4373 = vmatpush1.msra.mxu0 0.0
    %4374 = vmatprep.subr.mxu0 0.0
    %4375 = vmatpush1.msra.mxu0 0.0
    %4376 = vmatprep.subr.mxu0 0.0
    %4377 = vmatpush1.msra.mxu0 0.0
    %4378 = vmatprep.subr.mxu0 0.0
    %4379 = vmatpush1.msra.mxu0 0.0
    %4380 = vmatprep.subr.mxu0 0.0
    %4381 = vmatpush1.msra.mxu0 0.0
    %4382 = vmatprep.subr.mxu0 0.0
    %4383 = vmatpush1.msra.mxu0 0.0
    %4384 = vmatprep.subr.mxu0 0.0
    %4385 = vmatpush1.msra.mxu0 0.0
    %4386 = vmatprep.subr.mxu0 0.0
    %4387 = vmatpush1.msra.mxu0 0.0
    %4388 = vmatprep.subr.mxu0 0.0
    %4389 = vmatpush1.msra.mxu0 0.0
    %4390 = vmatprep.subr.mxu0 0.0
    %4391 = vmatpush1.msra.mxu0 0.0
    %4392 = vmatprep.subr.mxu0 0.0
    %4393 = vmatpush1.msra.mxu0 0.0
    %4394 = vmatprep.subr.mxu0 0.0
    %4395 = vmatpush1.msra.mxu0 0.0
    %4396 = vmatprep.subr.mxu0 0.0
    %4397 = vmatpush1.msra.mxu0 0.0
    %4398 = vmatprep.subr.mxu0 0.0
    %4399 = vmatpush1.msra.mxu0 0.0
    %4400 = vmatprep.subr.mxu0 0.0
    %4401 = vmatpush1.msra.mxu0 0.0
    %4402 = vmatprep.subr.mxu0 0.0
    %4403 = vmatpush1.msra.mxu0 0.0
    %4404 = vmatprep.mubr.f32.mxu0 0.0
    %v4405 = vand.u32 %v3711, 4294901760
    %4406 = vmatmul.mubr.f32.gmra.mrb[0].mxu0 %v4405
    %v4407 = vpop.f32.mrb[0].mxu0
    %v4408 = vadd.f32 %v4315, %v4407
    %v4409 = vpop.f32.mrb[0].mxu0
    %4410 = vmatprep.mubr.f32.mxu0 0.0
    %v4411 = vand.u32 %v3712, 4294901760
    %4412 = vmatmul.mubr.f32.gmra.mrb[0].mxu0 %v4411
    %v4413 = vpop.f32.mrb[0].mxu0
    %v4414 = vadd.f32 %v4321, %v4413
    %v4415 = vpop.f32.mrb[0].mxu0
    %4416 = vdwg.mxu0
    %v4417 = vadd.f32 %v4408, %v3167
    %v4418 = vadd.f32 %v4414, %v3168
    %v4419 = vsel %vm49, %v4417, 0.0
    %4420 = vadd.xlane.f32.xlu0 %v4419
    %v4421 = vpop.xlane.xlu0 %4420
    %v4422 = vsel %vm49, %v4418, 0.0
    %4423 = vadd.xlane.f32.xlu0 %v4422
    %v4424 = vpop.xlane.xlu0 %4423
    %v4425 = vmul.f32 %v4421, %v3136
    %v4426 = vmul.f32 %v4424, %v3136
    %v4427 = vsub.f32 %v4417, %v4425
    %v4428 = vsub.f32 %v4418, %v4426
    %v4429 = vmul.f32 %v4427, %v4427
    %v4430 = vmul.f32 %v4428, %v4428
    %v4431 = vsel %vm49, %v4429, 0.0
    %4432 = vadd.xlane.f32.xlu0 %v4431
    %v4433 = vpop.xlane.xlu0 %4432
    %v4434 = vsel %vm49, %v4430, 0.0
    %4435 = vadd.xlane.f32.xlu0 %v4434
    %v4436 = vpop.xlane.xlu0 %4435
    %v4437 = vmul.f32 %v4433, %v3136
    %v4438 = vmul.f32 %v4436, %v3136
    %v4439 = vadd.f32 %v4437, 1e-05
    %v4440 = vadd.f32 %v4438, 1e-05
    %v4441 = vrsqrt.pop %v4439
    %v4442 = vrsqrt.pop %v4440
    %v4443 = vmul.f32 %v4427, %v4441
    %v4444 = vmul.f32 %v4428, %v4442
    %v4445 = vlaneseq
    %v4446 = vshrl.u32 %v4445, 7
    %v4447 = vsub.s32 0, %v4446
    %v4448 = vrot.slane %v38, %v4447
    %v4449 = vmul.f32 %v4443, %v4448
    %v4450 = vmul.f32 %v4444, %v4448
    %v4451 = vlaneseq
    %v4452 = vshrl.u32 %v4451, 7
    %v4453 = vsub.s32 0, %v4452
    %v4454 = vrot.slane %v39, %v4453
    %v4455 = vadd.f32 %v4449, %v4454
    %v4456 = vadd.f32 %v4450, %v4454
    %4457 = vst.msk [vmem:[#allocation2] sm:$0xff] %vm49, %v4455
    %4458 = vst.msk [vmem:[#allocation2 + $0x8] sm:$0xff] %vm49, %v4456
    // Predicated region
    $region34: #{transformer_block.1} parent=1 // pred_check
      _
    $region35: #{transformer_block.1} parent=1 // pred_check_branch
      %4460 = sbr.rel (0) target = $region37
    $region36: #{transformer_block.1} parent=1 // pred_region
      %s4462 = ssub.s32 256, 256
      %4463 = vsyncadd [#allocation3], %s4462
      %s4464 = sshll.u32 [#allocation2], 4
      %s4465 = int_to_ptr.vmem [resolvable:$true] %s4464
      %4470 = dma.vmem_to_hbm [thread:$0]  %s4465, 256, %s8, [#allocation3], 128, 128, 8
    $region37: #{transformer_block.1} parent=1 // pred_fallthru
      _
    // Predicated region
    $region38: #{transformer_block.1} parent=1 // pred_check
      _
    $region39: #{transformer_block.1} parent=1 // pred_check_branch
      %4472 = sbr.rel (0) target = $region41
    $region40: #{transformer_block.1} parent=1 // pred_region
      %4473 = dma.done [#allocation3], 256
    $region41: #{transformer_block.1} parent=1 // pred_fallthru
      _
    %4474 = vsyncpa [#allocation3], 1

</llo_original>
